<compile_context>
chip_gen: v5e
topology: v5e:2x2
jax: 0.10.0
libtpu: 0.0.40
codegen_flags: <defaults>
</compile_context>

<pallas_src>
import functools

import numpy as np
import jax
import jax.numpy as jnp
from jax import lax
from jax.experimental import pallas as pl
from jax.experimental.pallas import tpu as pltpu


def _interp_matrix_np(in_n: int, out_n: int) -> np.ndarray:
    """(out_n, in_n) 1-D linear interpolation matrix, torch 'linear' align_corners=True."""
    m = np.zeros((out_n, in_n), np.float32)
    if out_n == 1 or in_n == 1:
        m[:, 0] = 1.0
        return m
    pos = np.arange(out_n, dtype=np.float64) * (in_n - 1) / (out_n - 1)
    i0 = np.clip(np.floor(pos).astype(np.int64), 0, in_n - 2)
    frac = (pos - i0).astype(np.float32)
    rows = np.arange(out_n)
    m[rows, i0] += 1.0 - frac
    m[rows, i0 + 1] += frac
    return m


def _up_block_kernel(a_d_ref, m_ref, x_ref, w_ref, bias_ref, o_ref,
                     *, C, Co, TD, HW, HW2):
    # a_d_ref:  (1, 3, TD, D)   per-kd depth interp rows for this depth block (pad folded in)
    # m_ref:    (9, HW, HW2)    per-(kh,kw) fused H/W upsample+shift matrices (pad folded in)
    # x_ref:    (1, C, D, HW)   input for batch b (resident across depth blocks)
    # w_ref:    (Co*C*27,)      conv weights, flat scalars in SMEM
    # bias_ref: (Co,)           bias in SMEM
    # o_ref:    (1, Co, TD, HW2)

    # ---- depth stage: one small matmul per (ci, kd) -> (TD, HW) tiles ----
    t1 = [[jnp.dot(a_d_ref[0, kd], x_ref[0, ci], preferred_element_type=jnp.float32)
           for kd in range(3)] for ci in range(C)]

    # ---- conv: per tap, weighted-combine the small tiles (VPU), then one lane-dense
    #      K=HW matmul per output channel (MXU) straight into output coordinates ----
    acc = [jnp.zeros((TD, HW2), jnp.float32) for _ in range(Co)]
    for kh in range(3):
        for kw in range(3):
            t = kh * 3 + kw
            m_t = m_ref[t]                                      # (HW, HW2)
            for co in range(Co):
                g = jnp.zeros((TD, HW), jnp.float32)
                for ci in range(C):
                    for kd in range(3):
                        wi = (co * C + ci) * 27 + kd * 9 + t    # w[co,ci,kd,kh,kw]
                        g = g + w_ref[wi] * t1[ci][kd]
                acc[co] = acc[co] + jnp.dot(g, m_t, preferred_element_type=jnp.float32)

    for co in range(Co):
        o_ref[0, co] = acc[co] + bias_ref[co]                   # lane-dense (TD, H2*W2) store


def up_block_forward(x, weight, bias, scale_factor=(2, 2, 2)):
    """x: (B, C, D, H, W), weight: (Co, C, 3, 3, 3), bias: (Co,) -> (B, Co, D*s, H*s, W*s)."""
    B, C, D, H, W = x.shape
    Co = weight.shape[0]
    D2, H2, W2 = D * scale_factor[0], H * scale_factor[1], W * scale_factor[2]
    HW, HW2 = H * W, H2 * W2

    # Depth block: bounded per-program footprint; multiple of 8 or the full axis.
    TD = 8 if (D2 % 8 == 0 and D2 > 8) else D2
    n_dblk = D2 // TD

    # ---- depth interpolation matrices with conv zero-pad + kd tap shift folded in ----
    A_d_pad = np.zeros((D2 + 2, D), np.float32)
    A_d_pad[1:-1] = _interp_matrix_np(D, D2)
    a_dblk = np.stack([
        np.stack([A_d_pad[j * TD + kd: j * TD + kd + TD] for kd in range(3)])
        for j in range(n_dblk)])                                 # (n_dblk, 3, TD, D)

    # ---- fused per-(kh,kw) H/W upsample matrices (pad + tap shift folded in) ----
    A_h_pad = np.zeros((H2 + 2, H), np.float32)
    A_h_pad[1:-1] = _interp_matrix_np(H, H2)
    A_w_pad = np.zeros((W2 + 2, W), np.float32)
    A_w_pad[1:-1] = _interp_matrix_np(W, W2)
    m_taps = np.stack([
        np.kron(A_h_pad[kh:kh + H2], A_w_pad[kw:kw + W2]).T      # (HW, HW2)
        for kh in range(3) for kw in range(3)]).astype(np.float32)  # (9, HW, HW2)

    # Input stays in NCDHW order; only the trailing (H, W) are flattened (free reshape).
    x_l = x.astype(jnp.float32).reshape(B, C, D, HW)
    w_flat = weight.astype(jnp.float32).reshape(-1)              # (Co*C*27,)
    b_flat = bias.astype(jnp.float32)                            # (Co,)

    kernel = functools.partial(_up_block_kernel, C=C, Co=Co, TD=TD, HW=HW, HW2=HW2)

    out_flat = pl.pallas_call(
        kernel,
        out_shape=jax.ShapeDtypeStruct((B, Co, D2, HW2), jnp.float32),
        grid=(B, n_dblk),
        in_specs=[
            pl.BlockSpec((1, 3, TD, D), lambda b, j: (j, 0, 0, 0)),    # depth interp block
            pl.BlockSpec((9, HW, HW2), lambda b, j: (0, 0, 0, 0)[:3]), # fused H/W taps (resident)
            pl.BlockSpec((1, C, D, HW), lambda b, j: (b, 0, 0, 0)),    # input, resident across j
            pl.BlockSpec(memory_space=pltpu.MemorySpace.SMEM),         # conv weights (scalars)
            pl.BlockSpec(memory_space=pltpu.MemorySpace.SMEM),         # bias
        ],
        out_specs=pl.BlockSpec((1, Co, TD, HW2), lambda b, j: (b, 0, j, 0)),
        compiler_params=pltpu.CompilerParams(
            dimension_semantics=("parallel", "parallel"),
            vmem_limit_bytes=64 * 1024 * 1024),
    )(jnp.asarray(a_dblk), jnp.asarray(m_taps), x_l, w_flat, b_flat)

    return out_flat.reshape(B, Co, D2, H2, W2)


if __name__ == "__main__":
    key = jax.random.PRNGKey(0)
    k1, k2, k3 = jax.random.split(key, 3)

    # Up_Block(init_feat=4): (B, C, D, H, W) = (2, 4, 8, 8, 8) -> (2, 2, 16, 16, 16)
    B, C, D, H, W = 2, 4, 8, 8, 8
    Co = C // 2

    x = jax.random.normal(k1, (B, C, D, H, W), jnp.float32)
    fan_in = C * 27
    bound = 1.0 / float(np.sqrt(fan_in))
    w = jax.random.uniform(k2, (Co, C, 3, 3, 3), jnp.float32, -bound, bound)
    b = jax.random.uniform(k3, (Co,), jnp.float32, -bound, bound)

    out = jax.block_until_ready(up_block_forward(x, w, b))
    assert out.shape == (B, Co, 2 * D, 2 * H, 2 * W), out.shape

    # pure-JAX reference (separable upsample + lax.conv)
    A_d = jnp.asarray(_interp_matrix_np(D, 2 * D))
    A_h = jnp.asarray(_interp_matrix_np(H, 2 * H))
    A_w = jnp.asarray(_interp_matrix_np(W, 2 * W))
    xu = jnp.einsum('od,bcdhw->bcohw', A_d, x)
    xu = jnp.einsum('ph,bcohw->bcopw', A_h, xu)
    xu = jnp.einsum('qw,bcopw->bcopq', A_w, xu)
    ref = lax.conv_general_dilated(
        xu, w, window_strides=(1, 1, 1), padding=[(1, 1)] * 3,
        dimension_numbers=('NCDHW', 'OIDHW', 'NCDHW'))
    ref = ref + b[None, :, None, None, None]

    err = float(jnp.max(jnp.abs(out - ref)))
    assert jnp.allclose(out, ref, atol=1e-3, rtol=1e-3), err

    print("KERNEL_OK")
</pallas_src>

<mosaic_0001>
module attributes {stable_mosaic.version = 11 : i64} {
  func.func @_up_block_kernel(%arg0: i32, %arg1: i32, %arg2: memref<1x3x8x8xf32, #tpu.memory_space<vmem>>, %arg3: memref<9x64x256xf32, #tpu.memory_space<vmem>>, %arg4: memref<1x4x8x64xf32, #tpu.memory_space<vmem>>, %arg5: memref<216xf32, #tpu.memory_space<smem>>, %arg6: memref<2xf32, #tpu.memory_space<smem>>, %arg7: memref<1x2x8x256xf32, #tpu.memory_space<vmem>>) attributes {dimension_semantics = [#tpu.dimension_semantics<parallel>, #tpu.dimension_semantics<parallel>], iteration_bounds = array<i64: 2, 2>, scalar_prefetch = 0 : i64, scratch_operands = 0 : i64, tpu.core_type = #tpu.core_type<tc>, window_params = [{transform_indices = @transform_0, window_bounds = array<i64: 1, 3, 8, 8>}, {pipeline_mode = #tpu.pipeline_mode<synchronous>, transform_indices = @transform_1, window_bounds = array<i64: 9, 64, 256>}, {transform_indices = @transform_2, window_bounds = array<i64: 1, 4, 8, 64>}, {transform_indices = @transform_3, window_bounds = array<i64: 216>}, {transform_indices = @transform_4, window_bounds = array<i64: 2>}, {transform_indices = @transform_5, window_bounds = array<i64: 1, 2, 8, 256>}]} {
    %c0 = arith.constant 0 : index
    %c0_0 = arith.constant 0 : index
    %c0_1 = arith.constant 0 : index
    %c0_2 = arith.constant 0 : index
    %0 = vector.load %arg2[%c0, %c0_0, %c0_1, %c0_2] : memref<1x3x8x8xf32, #tpu.memory_space<vmem>>, vector<1x1x8x8xf32>
    %1 = vector.shape_cast %0 : vector<1x1x8x8xf32> to vector<8x8xf32>
    %c0_3 = arith.constant 0 : index
    %c0_4 = arith.constant 0 : index
    %c0_5 = arith.constant 0 : index
    %c0_6 = arith.constant 0 : index
    %2 = vector.load %arg4[%c0_3, %c0_4, %c0_5, %c0_6] : memref<1x4x8x64xf32, #tpu.memory_space<vmem>>, vector<1x1x8x64xf32>
    %3 = vector.shape_cast %2 : vector<1x1x8x64xf32> to vector<8x64xf32>
    %cst = arith.constant dense<0.000000e+00> : vector<8x64xf32>
    %4 = tpu.matmul %1, %3, %cst {dimension_numbers = #tpu.dot_dimension_numbers<[1], [0], [0], [1], [0, 0, 1, 1], [], []>} : vector<8x8xf32>, vector<8x64xf32>, vector<8x64xf32> -> vector<8x64xf32>
    %c0_7 = arith.constant 0 : index
    %c1 = arith.constant 1 : index
    %c0_8 = arith.constant 0 : index
    %c0_9 = arith.constant 0 : index
    %5 = vector.load %arg2[%c0_7, %c1, %c0_8, %c0_9] : memref<1x3x8x8xf32, #tpu.memory_space<vmem>>, vector<1x1x8x8xf32>
    %6 = vector.shape_cast %5 : vector<1x1x8x8xf32> to vector<8x8xf32>
    %c0_10 = arith.constant 0 : index
    %c0_11 = arith.constant 0 : index
    %c0_12 = arith.constant 0 : index
    %c0_13 = arith.constant 0 : index
    %7 = vector.load %arg4[%c0_10, %c0_11, %c0_12, %c0_13] : memref<1x4x8x64xf32, #tpu.memory_space<vmem>>, vector<1x1x8x64xf32>
    %8 = vector.shape_cast %7 : vector<1x1x8x64xf32> to vector<8x64xf32>
    %cst_14 = arith.constant dense<0.000000e+00> : vector<8x64xf32>
    %9 = tpu.matmul %6, %8, %cst_14 {dimension_numbers = #tpu.dot_dimension_numbers<[1], [0], [0], [1], [0, 0, 1, 1], [], []>} : vector<8x8xf32>, vector<8x64xf32>, vector<8x64xf32> -> vector<8x64xf32>
    %c0_15 = arith.constant 0 : index
    %c2 = arith.constant 2 : index
    %c0_16 = arith.constant 0 : index
    %c0_17 = arith.constant 0 : index
    %10 = vector.load %arg2[%c0_15, %c2, %c0_16, %c0_17] : memref<1x3x8x8xf32, #tpu.memory_space<vmem>>, vector<1x1x8x8xf32>
    %11 = vector.shape_cast %10 : vector<1x1x8x8xf32> to vector<8x8xf32>
    %c0_18 = arith.constant 0 : index
    %c0_19 = arith.constant 0 : index
    %c0_20 = arith.constant 0 : index
    %c0_21 = arith.constant 0 : index
    %12 = vector.load %arg4[%c0_18, %c0_19, %c0_20, %c0_21] : memref<1x4x8x64xf32, #tpu.memory_space<vmem>>, vector<1x1x8x64xf32>
    %13 = vector.shape_cast %12 : vector<1x1x8x64xf32> to vector<8x64xf32>
    %cst_22 = arith.constant dense<0.000000e+00> : vector<8x64xf32>
    %14 = tpu.matmul %11, %13, %cst_22 {dimension_numbers = #tpu.dot_dimension_numbers<[1], [0], [0], [1], [0, 0, 1, 1], [], []>} : vector<8x8xf32>, vector<8x64xf32>, vector<8x64xf32> -> vector<8x64xf32>
    %c0_23 = arith.constant 0 : index
    %c0_24 = arith.constant 0 : index
    %c0_25 = arith.constant 0 : index
    %c0_26 = arith.constant 0 : index
    %15 = vector.load %arg2[%c0_23, %c0_24, %c0_25, %c0_26] : memref<1x3x8x8xf32, #tpu.memory_space<vmem>>, vector<1x1x8x8xf32>
    %16 = vector.shape_cast %15 : vector<1x1x8x8xf32> to vector<8x8xf32>
    %c0_27 = arith.constant 0 : index
    %c1_28 = arith.constant 1 : index
    %c0_29 = arith.constant 0 : index
    %c0_30 = arith.constant 0 : index
    %17 = vector.load %arg4[%c0_27, %c1_28, %c0_29, %c0_30] : memref<1x4x8x64xf32, #tpu.memory_space<vmem>>, vector<1x1x8x64xf32>
    %18 = vector.shape_cast %17 : vector<1x1x8x64xf32> to vector<8x64xf32>
    %cst_31 = arith.constant dense<0.000000e+00> : vector<8x64xf32>
    %19 = tpu.matmul %16, %18, %cst_31 {dimension_numbers = #tpu.dot_dimension_numbers<[1], [0], [0], [1], [0, 0, 1, 1], [], []>} : vector<8x8xf32>, vector<8x64xf32>, vector<8x64xf32> -> vector<8x64xf32>
    %c0_32 = arith.constant 0 : index
    %c1_33 = arith.constant 1 : index
    %c0_34 = arith.constant 0 : index
    %c0_35 = arith.constant 0 : index
    %20 = vector.load %arg2[%c0_32, %c1_33, %c0_34, %c0_35] : memref<1x3x8x8xf32, #tpu.memory_space<vmem>>, vector<1x1x8x8xf32>
    %21 = vector.shape_cast %20 : vector<1x1x8x8xf32> to vector<8x8xf32>
    %c0_36 = arith.constant 0 : index
    %c1_37 = arith.constant 1 : index
    %c0_38 = arith.constant 0 : index
    %c0_39 = arith.constant 0 : index
    %22 = vector.load %arg4[%c0_36, %c1_37, %c0_38, %c0_39] : memref<1x4x8x64xf32, #tpu.memory_space<vmem>>, vector<1x1x8x64xf32>
    %23 = vector.shape_cast %22 : vector<1x1x8x64xf32> to vector<8x64xf32>
    %cst_40 = arith.constant dense<0.000000e+00> : vector<8x64xf32>
    %24 = tpu.matmul %21, %23, %cst_40 {dimension_numbers = #tpu.dot_dimension_numbers<[1], [0], [0], [1], [0, 0, 1, 1], [], []>} : vector<8x8xf32>, vector<8x64xf32>, vector<8x64xf32> -> vector<8x64xf32>
    %c0_41 = arith.constant 0 : index
    %c2_42 = arith.constant 2 : index
    %c0_43 = arith.constant 0 : index
    %c0_44 = arith.constant 0 : index
    %25 = vector.load %arg2[%c0_41, %c2_42, %c0_43, %c0_44] : memref<1x3x8x8xf32, #tpu.memory_space<vmem>>, vector<1x1x8x8xf32>
    %26 = vector.shape_cast %25 : vector<1x1x8x8xf32> to vector<8x8xf32>
    %c0_45 = arith.constant 0 : index
    %c1_46 = arith.constant 1 : index
    %c0_47 = arith.constant 0 : index
    %c0_48 = arith.constant 0 : index
    %27 = vector.load %arg4[%c0_45, %c1_46, %c0_47, %c0_48] : memref<1x4x8x64xf32, #tpu.memory_space<vmem>>, vector<1x1x8x64xf32>
    %28 = vector.shape_cast %27 : vector<1x1x8x64xf32> to vector<8x64xf32>
    %cst_49 = arith.constant dense<0.000000e+00> : vector<8x64xf32>
    %29 = tpu.matmul %26, %28, %cst_49 {dimension_numbers = #tpu.dot_dimension_numbers<[1], [0], [0], [1], [0, 0, 1, 1], [], []>} : vector<8x8xf32>, vector<8x64xf32>, vector<8x64xf32> -> vector<8x64xf32>
    %c0_50 = arith.constant 0 : index
    %c0_51 = arith.constant 0 : index
    %c0_52 = arith.constant 0 : index
    %c0_53 = arith.constant 0 : index
    %30 = vector.load %arg2[%c0_50, %c0_51, %c0_52, %c0_53] : memref<1x3x8x8xf32, #tpu.memory_space<vmem>>, vector<1x1x8x8xf32>
    %31 = vector.shape_cast %30 : vector<1x1x8x8xf32> to vector<8x8xf32>
    %c0_54 = arith.constant 0 : index
    %c2_55 = arith.constant 2 : index
    %c0_56 = arith.constant 0 : index
    %c0_57 = arith.constant 0 : index
    %32 = vector.load %arg4[%c0_54, %c2_55, %c0_56, %c0_57] : memref<1x4x8x64xf32, #tpu.memory_space<vmem>>, vector<1x1x8x64xf32>
    %33 = vector.shape_cast %32 : vector<1x1x8x64xf32> to vector<8x64xf32>
    %cst_58 = arith.constant dense<0.000000e+00> : vector<8x64xf32>
    %34 = tpu.matmul %31, %33, %cst_58 {dimension_numbers = #tpu.dot_dimension_numbers<[1], [0], [0], [1], [0, 0, 1, 1], [], []>} : vector<8x8xf32>, vector<8x64xf32>, vector<8x64xf32> -> vector<8x64xf32>
    %c0_59 = arith.constant 0 : index
    %c1_60 = arith.constant 1 : index
    %c0_61 = arith.constant 0 : index
    %c0_62 = arith.constant 0 : index
    %35 = vector.load %arg2[%c0_59, %c1_60, %c0_61, %c0_62] : memref<1x3x8x8xf32, #tpu.memory_space<vmem>>, vector<1x1x8x8xf32>
    %36 = vector.shape_cast %35 : vector<1x1x8x8xf32> to vector<8x8xf32>
    %c0_63 = arith.constant 0 : index
    %c2_64 = arith.constant 2 : index
    %c0_65 = arith.constant 0 : index
    %c0_66 = arith.constant 0 : index
    %37 = vector.load %arg4[%c0_63, %c2_64, %c0_65, %c0_66] : memref<1x4x8x64xf32, #tpu.memory_space<vmem>>, vector<1x1x8x64xf32>
    %38 = vector.shape_cast %37 : vector<1x1x8x64xf32> to vector<8x64xf32>
    %cst_67 = arith.constant dense<0.000000e+00> : vector<8x64xf32>
    %39 = tpu.matmul %36, %38, %cst_67 {dimension_numbers = #tpu.dot_dimension_numbers<[1], [0], [0], [1], [0, 0, 1, 1], [], []>} : vector<8x8xf32>, vector<8x64xf32>, vector<8x64xf32> -> vector<8x64xf32>
    %c0_68 = arith.constant 0 : index
    %c2_69 = arith.constant 2 : index
    %c0_70 = arith.constant 0 : index
    %c0_71 = arith.constant 0 : index
    %40 = vector.load %arg2[%c0_68, %c2_69, %c0_70, %c0_71] : memref<1x3x8x8xf32, #tpu.memory_space<vmem>>, vector<1x1x8x8xf32>
    %41 = vector.shape_cast %40 : vector<1x1x8x8xf32> to vector<8x8xf32>
    %c0_72 = arith.constant 0 : index
    %c2_73 = arith.constant 2 : index
    %c0_74 = arith.constant 0 : index
    %c0_75 = arith.constant 0 : index
    %42 = vector.load %arg4[%c0_72, %c2_73, %c0_74, %c0_75] : memref<1x4x8x64xf32, #tpu.memory_space<vmem>>, vector<1x1x8x64xf32>
    %43 = vector.shape_cast %42 : vector<1x1x8x64xf32> to vector<8x64xf32>
    %cst_76 = arith.constant dense<0.000000e+00> : vector<8x64xf32>
    %44 = tpu.matmul %41, %43, %cst_76 {dimension_numbers = #tpu.dot_dimension_numbers<[1], [0], [0], [1], [0, 0, 1, 1], [], []>} : vector<8x8xf32>, vector<8x64xf32>, vector<8x64xf32> -> vector<8x64xf32>
    %c0_77 = arith.constant 0 : index
    %c0_78 = arith.constant 0 : index
    %c0_79 = arith.constant 0 : index
    %c0_80 = arith.constant 0 : index
    %45 = vector.load %arg2[%c0_77, %c0_78, %c0_79, %c0_80] : memref<1x3x8x8xf32, #tpu.memory_space<vmem>>, vector<1x1x8x8xf32>
    %46 = vector.shape_cast %45 : vector<1x1x8x8xf32> to vector<8x8xf32>
    %c0_81 = arith.constant 0 : index
    %c3 = arith.constant 3 : index
    %c0_82 = arith.constant 0 : index
    %c0_83 = arith.constant 0 : index
    %47 = vector.load %arg4[%c0_81, %c3, %c0_82, %c0_83] : memref<1x4x8x64xf32, #tpu.memory_space<vmem>>, vector<1x1x8x64xf32>
    %48 = vector.shape_cast %47 : vector<1x1x8x64xf32> to vector<8x64xf32>
    %cst_84 = arith.constant dense<0.000000e+00> : vector<8x64xf32>
    %49 = tpu.matmul %46, %48, %cst_84 {dimension_numbers = #tpu.dot_dimension_numbers<[1], [0], [0], [1], [0, 0, 1, 1], [], []>} : vector<8x8xf32>, vector<8x64xf32>, vector<8x64xf32> -> vector<8x64xf32>
    %c0_85 = arith.constant 0 : index
    %c1_86 = arith.constant 1 : index
    %c0_87 = arith.constant 0 : index
    %c0_88 = arith.constant 0 : index
    %50 = vector.load %arg2[%c0_85, %c1_86, %c0_87, %c0_88] : memref<1x3x8x8xf32, #tpu.memory_space<vmem>>, vector<1x1x8x8xf32>
    %51 = vector.shape_cast %50 : vector<1x1x8x8xf32> to vector<8x8xf32>
    %c0_89 = arith.constant 0 : index
    %c3_90 = arith.constant 3 : index
    %c0_91 = arith.constant 0 : index
    %c0_92 = arith.constant 0 : index
    %52 = vector.load %arg4[%c0_89, %c3_90, %c0_91, %c0_92] : memref<1x4x8x64xf32, #tpu.memory_space<vmem>>, vector<1x1x8x64xf32>
    %53 = vector.shape_cast %52 : vector<1x1x8x64xf32> to vector<8x64xf32>
    %cst_93 = arith.constant dense<0.000000e+00> : vector<8x64xf32>
    %54 = tpu.matmul %51, %53, %cst_93 {dimension_numbers = #tpu.dot_dimension_numbers<[1], [0], [0], [1], [0, 0, 1, 1], [], []>} : vector<8x8xf32>, vector<8x64xf32>, vector<8x64xf32> -> vector<8x64xf32>
    %c0_94 = arith.constant 0 : index
    %c2_95 = arith.constant 2 : index
    %c0_96 = arith.constant 0 : index
    %c0_97 = arith.constant 0 : index
    %55 = vector.load %arg2[%c0_94, %c2_95, %c0_96, %c0_97] : memref<1x3x8x8xf32, #tpu.memory_space<vmem>>, vector<1x1x8x8xf32>
    %56 = vector.shape_cast %55 : vector<1x1x8x8xf32> to vector<8x8xf32>
    %c0_98 = arith.constant 0 : index
    %c3_99 = arith.constant 3 : index
    %c0_100 = arith.constant 0 : index
    %c0_101 = arith.constant 0 : index
    %57 = vector.load %arg4[%c0_98, %c3_99, %c0_100, %c0_101] : memref<1x4x8x64xf32, #tpu.memory_space<vmem>>, vector<1x1x8x64xf32>
    %58 = vector.shape_cast %57 : vector<1x1x8x64xf32> to vector<8x64xf32>
    %cst_102 = arith.constant dense<0.000000e+00> : vector<8x64xf32>
    %59 = tpu.matmul %56, %58, %cst_102 {dimension_numbers = #tpu.dot_dimension_numbers<[1], [0], [0], [1], [0, 0, 1, 1], [], []>} : vector<8x8xf32>, vector<8x64xf32>, vector<8x64xf32> -> vector<8x64xf32>
    %cst_103 = arith.constant 0.000000e+00 : f32
    %60 = vector.broadcast %cst_103 : f32 to vector<8x256xf32>
    %cst_104 = arith.constant 0.000000e+00 : f32
    %61 = vector.broadcast %cst_104 : f32 to vector<8x256xf32>
    %c0_105 = arith.constant 0 : index
    %c0_106 = arith.constant 0 : index
    %c0_107 = arith.constant 0 : index
    %62 = vector.load %arg3[%c0_105, %c0_106, %c0_107] : memref<9x64x256xf32, #tpu.memory_space<vmem>>, vector<1x64x256xf32>
    %63 = vector.shape_cast %62 : vector<1x64x256xf32> to vector<64x256xf32>
    %cst_108 = arith.constant 0.000000e+00 : f32
    %64 = vector.broadcast %cst_108 : f32 to vector<8x64xf32>
    %c0_109 = arith.constant 0 : index
    %65 = memref.load %arg5[%c0_109] : memref<216xf32, #tpu.memory_space<smem>>
    %66 = vector.broadcast %65 : f32 to vector<8x64xf32>
    %67 = arith.mulf %66, %4 : vector<8x64xf32>
    %68 = arith.addf %64, %67 : vector<8x64xf32>
    %c9 = arith.constant 9 : index
    %69 = memref.load %arg5[%c9] : memref<216xf32, #tpu.memory_space<smem>>
    %70 = vector.broadcast %69 : f32 to vector<8x64xf32>
    %71 = arith.mulf %70, %9 : vector<8x64xf32>
    %72 = arith.addf %68, %71 : vector<8x64xf32>
    %c18 = arith.constant 18 : index
    %73 = memref.load %arg5[%c18] : memref<216xf32, #tpu.memory_space<smem>>
    %74 = vector.broadcast %73 : f32 to vector<8x64xf32>
    %75 = arith.mulf %74, %14 : vector<8x64xf32>
    %76 = arith.addf %72, %75 : vector<8x64xf32>
    %c27 = arith.constant 27 : index
    %77 = memref.load %arg5[%c27] : memref<216xf32, #tpu.memory_space<smem>>
    %78 = vector.broadcast %77 : f32 to vector<8x64xf32>
    %79 = arith.mulf %78, %19 : vector<8x64xf32>
    %80 = arith.addf %76, %79 : vector<8x64xf32>
    %c36 = arith.constant 36 : index
    %81 = memref.load %arg5[%c36] : memref<216xf32, #tpu.memory_space<smem>>
    %82 = vector.broadcast %81 : f32 to vector<8x64xf32>
    %83 = arith.mulf %82, %24 : vector<8x64xf32>
    %84 = arith.addf %80, %83 : vector<8x64xf32>
    %c45 = arith.constant 45 : index
    %85 = memref.load %arg5[%c45] : memref<216xf32, #tpu.memory_space<smem>>
    %86 = vector.broadcast %85 : f32 to vector<8x64xf32>
    %87 = arith.mulf %86, %29 : vector<8x64xf32>
    %88 = arith.addf %84, %87 : vector<8x64xf32>
    %c54 = arith.constant 54 : index
    %89 = memref.load %arg5[%c54] : memref<216xf32, #tpu.memory_space<smem>>
    %90 = vector.broadcast %89 : f32 to vector<8x64xf32>
    %91 = arith.mulf %90, %34 : vector<8x64xf32>
    %92 = arith.addf %88, %91 : vector<8x64xf32>
    %c63 = arith.constant 63 : index
    %93 = memref.load %arg5[%c63] : memref<216xf32, #tpu.memory_space<smem>>
    %94 = vector.broadcast %93 : f32 to vector<8x64xf32>
    %95 = arith.mulf %94, %39 : vector<8x64xf32>
    %96 = arith.addf %92, %95 : vector<8x64xf32>
    %c72 = arith.constant 72 : index
    %97 = memref.load %arg5[%c72] : memref<216xf32, #tpu.memory_space<smem>>
    %98 = vector.broadcast %97 : f32 to vector<8x64xf32>
    %99 = arith.mulf %98, %44 : vector<8x64xf32>
    %100 = arith.addf %96, %99 : vector<8x64xf32>
    %c81 = arith.constant 81 : index
    %101 = memref.load %arg5[%c81] : memref<216xf32, #tpu.memory_space<smem>>
    %102 = vector.broadcast %101 : f32 to vector<8x64xf32>
    %103 = arith.mulf %102, %49 : vector<8x64xf32>
    %104 = arith.addf %100, %103 : vector<8x64xf32>
    %c90 = arith.constant 90 : index
    %105 = memref.load %arg5[%c90] : memref<216xf32, #tpu.memory_space<smem>>
    %106 = vector.broadcast %105 : f32 to vector<8x64xf32>
    %107 = arith.mulf %106, %54 : vector<8x64xf32>
    %108 = arith.addf %104, %107 : vector<8x64xf32>
    %c99 = arith.constant 99 : index
    %109 = memref.load %arg5[%c99] : memref<216xf32, #tpu.memory_space<smem>>
    %110 = vector.broadcast %109 : f32 to vector<8x64xf32>
    %111 = arith.mulf %110, %59 : vector<8x64xf32>
    %112 = arith.addf %108, %111 : vector<8x64xf32>
    %cst_110 = arith.constant dense<0.000000e+00> : vector<8x256xf32>
    %113 = tpu.matmul %112, %63, %cst_110 {dimension_numbers = #tpu.dot_dimension_numbers<[1], [0], [0], [1], [0, 0, 1, 1], [], []>} : vector<8x64xf32>, vector<64x256xf32>, vector<8x256xf32> -> vector<8x256xf32>
    %114 = arith.addf %60, %113 : vector<8x256xf32>
    %cst_111 = arith.constant 0.000000e+00 : f32
    %115 = vector.broadcast %cst_111 : f32 to vector<8x64xf32>
    %c108 = arith.constant 108 : index
    %116 = memref.load %arg5[%c108] : memref<216xf32, #tpu.memory_space<smem>>
    %117 = vector.broadcast %116 : f32 to vector<8x64xf32>
    %118 = arith.mulf %117, %4 : vector<8x64xf32>
    %119 = arith.addf %115, %118 : vector<8x64xf32>
    %c117 = arith.constant 117 : index
    %120 = memref.load %arg5[%c117] : memref<216xf32, #tpu.memory_space<smem>>
    %121 = vector.broadcast %120 : f32 to vector<8x64xf32>
    %122 = arith.mulf %121, %9 : vector<8x64xf32>
    %123 = arith.addf %119, %122 : vector<8x64xf32>
    %c126 = arith.constant 126 : index
    %124 = memref.load %arg5[%c126] : memref<216xf32, #tpu.memory_space<smem>>
    %125 = vector.broadcast %124 : f32 to vector<8x64xf32>
    %126 = arith.mulf %125, %14 : vector<8x64xf32>
    %127 = arith.addf %123, %126 : vector<8x64xf32>
    %c135 = arith.constant 135 : index
    %128 = memref.load %arg5[%c135] : memref<216xf32, #tpu.memory_space<smem>>
    %129 = vector.broadcast %128 : f32 to vector<8x64xf32>
    %130 = arith.mulf %129, %19 : vector<8x64xf32>
    %131 = arith.addf %127, %130 : vector<8x64xf32>
    %c144 = arith.constant 144 : index
    %132 = memref.load %arg5[%c144] : memref<216xf32, #tpu.memory_space<smem>>
    %133 = vector.broadcast %132 : f32 to vector<8x64xf32>
    %134 = arith.mulf %133, %24 : vector<8x64xf32>
    %135 = arith.addf %131, %134 : vector<8x64xf32>
    %c153 = arith.constant 153 : index
    %136 = memref.load %arg5[%c153] : memref<216xf32, #tpu.memory_space<smem>>
    %137 = vector.broadcast %136 : f32 to vector<8x64xf32>
    %138 = arith.mulf %137, %29 : vector<8x64xf32>
    %139 = arith.addf %135, %138 : vector<8x64xf32>
    %c162 = arith.constant 162 : index
    %140 = memref.load %arg5[%c162] : memref<216xf32, #tpu.memory_space<smem>>
    %141 = vector.broadcast %140 : f32 to vector<8x64xf32>
    %142 = arith.mulf %141, %34 : vector<8x64xf32>
    %143 = arith.addf %139, %142 : vector<8x64xf32>
    %c171 = arith.constant 171 : index
    %144 = memref.load %arg5[%c171] : memref<216xf32, #tpu.memory_space<smem>>
    %145 = vector.broadcast %144 : f32 to vector<8x64xf32>
    %146 = arith.mulf %145, %39 : vector<8x64xf32>
    %147 = arith.addf %143, %146 : vector<8x64xf32>
    %c180 = arith.constant 180 : index
    %148 = memref.load %arg5[%c180] : memref<216xf32, #tpu.memory_space<smem>>
    %149 = vector.broadcast %148 : f32 to vector<8x64xf32>
    %150 = arith.mulf %149, %44 : vector<8x64xf32>
    %151 = arith.addf %147, %150 : vector<8x64xf32>
    %c189 = arith.constant 189 : index
    %152 = memref.load %arg5[%c189] : memref<216xf32, #tpu.memory_space<smem>>
    %153 = vector.broadcast %152 : f32 to vector<8x64xf32>
    %154 = arith.mulf %153, %49 : vector<8x64xf32>
    %155 = arith.addf %151, %154 : vector<8x64xf32>
    %c198 = arith.constant 198 : index
    %156 = memref.load %arg5[%c198] : memref<216xf32, #tpu.memory_space<smem>>
    %157 = vector.broadcast %156 : f32 to vector<8x64xf32>
    %158 = arith.mulf %157, %54 : vector<8x64xf32>
    %159 = arith.addf %155, %158 : vector<8x64xf32>
    %c207 = arith.constant 207 : index
    %160 = memref.load %arg5[%c207] : memref<216xf32, #tpu.memory_space<smem>>
    %161 = vector.broadcast %160 : f32 to vector<8x64xf32>
    %162 = arith.mulf %161, %59 : vector<8x64xf32>
    %163 = arith.addf %159, %162 : vector<8x64xf32>
    %cst_112 = arith.constant dense<0.000000e+00> : vector<8x256xf32>
    %164 = tpu.matmul %163, %63, %cst_112 {dimension_numbers = #tpu.dot_dimension_numbers<[1], [0], [0], [1], [0, 0, 1, 1], [], []>} : vector<8x64xf32>, vector<64x256xf32>, vector<8x256xf32> -> vector<8x256xf32>
    %165 = arith.addf %61, %164 : vector<8x256xf32>
    %c1_113 = arith.constant 1 : index
    %c0_114 = arith.constant 0 : index
    %c0_115 = arith.constant 0 : index
    %166 = vector.load %arg3[%c1_113, %c0_114, %c0_115] : memref<9x64x256xf32, #tpu.memory_space<vmem>>, vector<1x64x256xf32>
    %167 = vector.shape_cast %166 : vector<1x64x256xf32> to vector<64x256xf32>
    %cst_116 = arith.constant 0.000000e+00 : f32
    %168 = vector.broadcast %cst_116 : f32 to vector<8x64xf32>
    %c1_117 = arith.constant 1 : index
    %169 = memref.load %arg5[%c1_117] : memref<216xf32, #tpu.memory_space<smem>>
    %170 = vector.broadcast %169 : f32 to vector<8x64xf32>
    %171 = arith.mulf %170, %4 : vector<8x64xf32>
    %172 = arith.addf %168, %171 : vector<8x64xf32>
    %c10 = arith.constant 10 : index
    %173 = memref.load %arg5[%c10] : memref<216xf32, #tpu.memory_space<smem>>
    %174 = vector.broadcast %173 : f32 to vector<8x64xf32>
    %175 = arith.mulf %174, %9 : vector<8x64xf32>
    %176 = arith.addf %172, %175 : vector<8x64xf32>
    %c19 = arith.constant 19 : index
    %177 = memref.load %arg5[%c19] : memref<216xf32, #tpu.memory_space<smem>>
    %178 = vector.broadcast %177 : f32 to vector<8x64xf32>
    %179 = arith.mulf %178, %14 : vector<8x64xf32>
    %180 = arith.addf %176, %179 : vector<8x64xf32>
    %c28 = arith.constant 28 : index
    %181 = memref.load %arg5[%c28] : memref<216xf32, #tpu.memory_space<smem>>
    %182 = vector.broadcast %181 : f32 to vector<8x64xf32>
    %183 = arith.mulf %182, %19 : vector<8x64xf32>
    %184 = arith.addf %180, %183 : vector<8x64xf32>
    %c37 = arith.constant 37 : index
    %185 = memref.load %arg5[%c37] : memref<216xf32, #tpu.memory_space<smem>>
    %186 = vector.broadcast %185 : f32 to vector<8x64xf32>
    %187 = arith.mulf %186, %24 : vector<8x64xf32>
    %188 = arith.addf %184, %187 : vector<8x64xf32>
    %c46 = arith.constant 46 : index
    %189 = memref.load %arg5[%c46] : memref<216xf32, #tpu.memory_space<smem>>
    %190 = vector.broadcast %189 : f32 to vector<8x64xf32>
    %191 = arith.mulf %190, %29 : vector<8x64xf32>
    %192 = arith.addf %188, %191 : vector<8x64xf32>
    %c55 = arith.constant 55 : index
    %193 = memref.load %arg5[%c55] : memref<216xf32, #tpu.memory_space<smem>>
    %194 = vector.broadcast %193 : f32 to vector<8x64xf32>
    %195 = arith.mulf %194, %34 : vector<8x64xf32>
    %196 = arith.addf %192, %195 : vector<8x64xf32>
    %c64 = arith.constant 64 : index
    %197 = memref.load %arg5[%c64] : memref<216xf32, #tpu.memory_space<smem>>
    %198 = vector.broadcast %197 : f32 to vector<8x64xf32>
    %199 = arith.mulf %198, %39 : vector<8x64xf32>
    %200 = arith.addf %196, %199 : vector<8x64xf32>
    %c73 = arith.constant 73 : index
    %201 = memref.load %arg5[%c73] : memref<216xf32, #tpu.memory_space<smem>>
    %202 = vector.broadcast %201 : f32 to vector<8x64xf32>
    %203 = arith.mulf %202, %44 : vector<8x64xf32>
    %204 = arith.addf %200, %203 : vector<8x64xf32>
    %c82 = arith.constant 82 : index
    %205 = memref.load %arg5[%c82] : memref<216xf32, #tpu.memory_space<smem>>
    %206 = vector.broadcast %205 : f32 to vector<8x64xf32>
    %207 = arith.mulf %206, %49 : vector<8x64xf32>
    %208 = arith.addf %204, %207 : vector<8x64xf32>
    %c91 = arith.constant 91 : index
    %209 = memref.load %arg5[%c91] : memref<216xf32, #tpu.memory_space<smem>>
    %210 = vector.broadcast %209 : f32 to vector<8x64xf32>
    %211 = arith.mulf %210, %54 : vector<8x64xf32>
    %212 = arith.addf %208, %211 : vector<8x64xf32>
    %c100 = arith.constant 100 : index
    %213 = memref.load %arg5[%c100] : memref<216xf32, #tpu.memory_space<smem>>
    %214 = vector.broadcast %213 : f32 to vector<8x64xf32>
    %215 = arith.mulf %214, %59 : vector<8x64xf32>
    %216 = arith.addf %212, %215 : vector<8x64xf32>
    %cst_118 = arith.constant dense<0.000000e+00> : vector<8x256xf32>
    %217 = tpu.matmul %216, %167, %cst_118 {dimension_numbers = #tpu.dot_dimension_numbers<[1], [0], [0], [1], [0, 0, 1, 1], [], []>} : vector<8x64xf32>, vector<64x256xf32>, vector<8x256xf32> -> vector<8x256xf32>
    %218 = arith.addf %114, %217 : vector<8x256xf32>
    %cst_119 = arith.constant 0.000000e+00 : f32
    %219 = vector.broadcast %cst_119 : f32 to vector<8x64xf32>
    %c109 = arith.constant 109 : index
    %220 = memref.load %arg5[%c109] : memref<216xf32, #tpu.memory_space<smem>>
    %221 = vector.broadcast %220 : f32 to vector<8x64xf32>
    %222 = arith.mulf %221, %4 : vector<8x64xf32>
    %223 = arith.addf %219, %222 : vector<8x64xf32>
    %c118 = arith.constant 118 : index
    %224 = memref.load %arg5[%c118] : memref<216xf32, #tpu.memory_space<smem>>
    %225 = vector.broadcast %224 : f32 to vector<8x64xf32>
    %226 = arith.mulf %225, %9 : vector<8x64xf32>
    %227 = arith.addf %223, %226 : vector<8x64xf32>
    %c127 = arith.constant 127 : index
    %228 = memref.load %arg5[%c127] : memref<216xf32, #tpu.memory_space<smem>>
    %229 = vector.broadcast %228 : f32 to vector<8x64xf32>
    %230 = arith.mulf %229, %14 : vector<8x64xf32>
    %231 = arith.addf %227, %230 : vector<8x64xf32>
    %c136 = arith.constant 136 : index
    %232 = memref.load %arg5[%c136] : memref<216xf32, #tpu.memory_space<smem>>
    %233 = vector.broadcast %232 : f32 to vector<8x64xf32>
    %234 = arith.mulf %233, %19 : vector<8x64xf32>
    %235 = arith.addf %231, %234 : vector<8x64xf32>
    %c145 = arith.constant 145 : index
    %236 = memref.load %arg5[%c145] : memref<216xf32, #tpu.memory_space<smem>>
    %237 = vector.broadcast %236 : f32 to vector<8x64xf32>
    %238 = arith.mulf %237, %24 : vector<8x64xf32>
    %239 = arith.addf %235, %238 : vector<8x64xf32>
    %c154 = arith.constant 154 : index
    %240 = memref.load %arg5[%c154] : memref<216xf32, #tpu.memory_space<smem>>
    %241 = vector.broadcast %240 : f32 to vector<8x64xf32>
    %242 = arith.mulf %241, %29 : vector<8x64xf32>
    %243 = arith.addf %239, %242 : vector<8x64xf32>
    %c163 = arith.constant 163 : index
    %244 = memref.load %arg5[%c163] : memref<216xf32, #tpu.memory_space<smem>>
    %245 = vector.broadcast %244 : f32 to vector<8x64xf32>
    %246 = arith.mulf %245, %34 : vector<8x64xf32>
    %247 = arith.addf %243, %246 : vector<8x64xf32>
    %c172 = arith.constant 172 : index
    %248 = memref.load %arg5[%c172] : memref<216xf32, #tpu.memory_space<smem>>
    %249 = vector.broadcast %248 : f32 to vector<8x64xf32>
    %250 = arith.mulf %249, %39 : vector<8x64xf32>
    %251 = arith.addf %247, %250 : vector<8x64xf32>
    %c181 = arith.constant 181 : index
    %252 = memref.load %arg5[%c181] : memref<216xf32, #tpu.memory_space<smem>>
    %253 = vector.broadcast %252 : f32 to vector<8x64xf32>
    %254 = arith.mulf %253, %44 : vector<8x64xf32>
    %255 = arith.addf %251, %254 : vector<8x64xf32>
    %c190 = arith.constant 190 : index
    %256 = memref.load %arg5[%c190] : memref<216xf32, #tpu.memory_space<smem>>
    %257 = vector.broadcast %256 : f32 to vector<8x64xf32>
    %258 = arith.mulf %257, %49 : vector<8x64xf32>
    %259 = arith.addf %255, %258 : vector<8x64xf32>
    %c199 = arith.constant 199 : index
    %260 = memref.load %arg5[%c199] : memref<216xf32, #tpu.memory_space<smem>>
    %261 = vector.broadcast %260 : f32 to vector<8x64xf32>
    %262 = arith.mulf %261, %54 : vector<8x64xf32>
    %263 = arith.addf %259, %262 : vector<8x64xf32>
    %c208 = arith.constant 208 : index
    %264 = memref.load %arg5[%c208] : memref<216xf32, #tpu.memory_space<smem>>
    %265 = vector.broadcast %264 : f32 to vector<8x64xf32>
    %266 = arith.mulf %265, %59 : vector<8x64xf32>
    %267 = arith.addf %263, %266 : vector<8x64xf32>
    %cst_120 = arith.constant dense<0.000000e+00> : vector<8x256xf32>
    %268 = tpu.matmul %267, %167, %cst_120 {dimension_numbers = #tpu.dot_dimension_numbers<[1], [0], [0], [1], [0, 0, 1, 1], [], []>} : vector<8x64xf32>, vector<64x256xf32>, vector<8x256xf32> -> vector<8x256xf32>
    %269 = arith.addf %165, %268 : vector<8x256xf32>
    %c2_121 = arith.constant 2 : index
    %c0_122 = arith.constant 0 : index
    %c0_123 = arith.constant 0 : index
    %270 = vector.load %arg3[%c2_121, %c0_122, %c0_123] : memref<9x64x256xf32, #tpu.memory_space<vmem>>, vector<1x64x256xf32>
    %271 = vector.shape_cast %270 : vector<1x64x256xf32> to vector<64x256xf32>
    %cst_124 = arith.constant 0.000000e+00 : f32
    %272 = vector.broadcast %cst_124 : f32 to vector<8x64xf32>
    %c2_125 = arith.constant 2 : index
    %273 = memref.load %arg5[%c2_125] : memref<216xf32, #tpu.memory_space<smem>>
    %274 = vector.broadcast %273 : f32 to vector<8x64xf32>
    %275 = arith.mulf %274, %4 : vector<8x64xf32>
    %276 = arith.addf %272, %275 : vector<8x64xf32>
    %c11 = arith.constant 11 : index
    %277 = memref.load %arg5[%c11] : memref<216xf32, #tpu.memory_space<smem>>
    %278 = vector.broadcast %277 : f32 to vector<8x64xf32>
    %279 = arith.mulf %278, %9 : vector<8x64xf32>
    %280 = arith.addf %276, %279 : vector<8x64xf32>
    %c20 = arith.constant 20 : index
    %281 = memref.load %arg5[%c20] : memref<216xf32, #tpu.memory_space<smem>>
    %282 = vector.broadcast %281 : f32 to vector<8x64xf32>
    %283 = arith.mulf %282, %14 : vector<8x64xf32>
    %284 = arith.addf %280, %283 : vector<8x64xf32>
    %c29 = arith.constant 29 : index
    %285 = memref.load %arg5[%c29] : memref<216xf32, #tpu.memory_space<smem>>
    %286 = vector.broadcast %285 : f32 to vector<8x64xf32>
    %287 = arith.mulf %286, %19 : vector<8x64xf32>
    %288 = arith.addf %284, %287 : vector<8x64xf32>
    %c38 = arith.constant 38 : index
    %289 = memref.load %arg5[%c38] : memref<216xf32, #tpu.memory_space<smem>>
    %290 = vector.broadcast %289 : f32 to vector<8x64xf32>
    %291 = arith.mulf %290, %24 : vector<8x64xf32>
    %292 = arith.addf %288, %291 : vector<8x64xf32>
    %c47 = arith.constant 47 : index
    %293 = memref.load %arg5[%c47] : memref<216xf32, #tpu.memory_space<smem>>
    %294 = vector.broadcast %293 : f32 to vector<8x64xf32>
    %295 = arith.mulf %294, %29 : vector<8x64xf32>
    %296 = arith.addf %292, %295 : vector<8x64xf32>
    %c56 = arith.constant 56 : index
    %297 = memref.load %arg5[%c56] : memref<216xf32, #tpu.memory_space<smem>>
    %298 = vector.broadcast %297 : f32 to vector<8x64xf32>
    %299 = arith.mulf %298, %34 : vector<8x64xf32>
    %300 = arith.addf %296, %299 : vector<8x64xf32>
    %c65 = arith.constant 65 : index
    %301 = memref.load %arg5[%c65] : memref<216xf32, #tpu.memory_space<smem>>
    %302 = vector.broadcast %301 : f32 to vector<8x64xf32>
    %303 = arith.mulf %302, %39 : vector<8x64xf32>
    %304 = arith.addf %300, %303 : vector<8x64xf32>
    %c74 = arith.constant 74 : index
    %305 = memref.load %arg5[%c74] : memref<216xf32, #tpu.memory_space<smem>>
    %306 = vector.broadcast %305 : f32 to vector<8x64xf32>
    %307 = arith.mulf %306, %44 : vector<8x64xf32>
    %308 = arith.addf %304, %307 : vector<8x64xf32>
    %c83 = arith.constant 83 : index
    %309 = memref.load %arg5[%c83] : memref<216xf32, #tpu.memory_space<smem>>
    %310 = vector.broadcast %309 : f32 to vector<8x64xf32>
    %311 = arith.mulf %310, %49 : vector<8x64xf32>
    %312 = arith.addf %308, %311 : vector<8x64xf32>
    %c92 = arith.constant 92 : index
    %313 = memref.load %arg5[%c92] : memref<216xf32, #tpu.memory_space<smem>>
    %314 = vector.broadcast %313 : f32 to vector<8x64xf32>
    %315 = arith.mulf %314, %54 : vector<8x64xf32>
    %316 = arith.addf %312, %315 : vector<8x64xf32>
    %c101 = arith.constant 101 : index
    %317 = memref.load %arg5[%c101] : memref<216xf32, #tpu.memory_space<smem>>
    %318 = vector.broadcast %317 : f32 to vector<8x64xf32>
    %319 = arith.mulf %318, %59 : vector<8x64xf32>
    %320 = arith.addf %316, %319 : vector<8x64xf32>
    %cst_126 = arith.constant dense<0.000000e+00> : vector<8x256xf32>
    %321 = tpu.matmul %320, %271, %cst_126 {dimension_numbers = #tpu.dot_dimension_numbers<[1], [0], [0], [1], [0, 0, 1, 1], [], []>} : vector<8x64xf32>, vector<64x256xf32>, vector<8x256xf32> -> vector<8x256xf32>
    %322 = arith.addf %218, %321 : vector<8x256xf32>
    %cst_127 = arith.constant 0.000000e+00 : f32
    %323 = vector.broadcast %cst_127 : f32 to vector<8x64xf32>
    %c110 = arith.constant 110 : index
    %324 = memref.load %arg5[%c110] : memref<216xf32, #tpu.memory_space<smem>>
    %325 = vector.broadcast %324 : f32 to vector<8x64xf32>
    %326 = arith.mulf %325, %4 : vector<8x64xf32>
    %327 = arith.addf %323, %326 : vector<8x64xf32>
    %c119 = arith.constant 119 : index
    %328 = memref.load %arg5[%c119] : memref<216xf32, #tpu.memory_space<smem>>
    %329 = vector.broadcast %328 : f32 to vector<8x64xf32>
    %330 = arith.mulf %329, %9 : vector<8x64xf32>
    %331 = arith.addf %327, %330 : vector<8x64xf32>
    %c128 = arith.constant 128 : index
    %332 = memref.load %arg5[%c128] : memref<216xf32, #tpu.memory_space<smem>>
    %333 = vector.broadcast %332 : f32 to vector<8x64xf32>
    %334 = arith.mulf %333, %14 : vector<8x64xf32>
    %335 = arith.addf %331, %334 : vector<8x64xf32>
    %c137 = arith.constant 137 : index
    %336 = memref.load %arg5[%c137] : memref<216xf32, #tpu.memory_space<smem>>
    %337 = vector.broadcast %336 : f32 to vector<8x64xf32>
    %338 = arith.mulf %337, %19 : vector<8x64xf32>
    %339 = arith.addf %335, %338 : vector<8x64xf32>
    %c146 = arith.constant 146 : index
    %340 = memref.load %arg5[%c146] : memref<216xf32, #tpu.memory_space<smem>>
    %341 = vector.broadcast %340 : f32 to vector<8x64xf32>
    %342 = arith.mulf %341, %24 : vector<8x64xf32>
    %343 = arith.addf %339, %342 : vector<8x64xf32>
    %c155 = arith.constant 155 : index
    %344 = memref.load %arg5[%c155] : memref<216xf32, #tpu.memory_space<smem>>
    %345 = vector.broadcast %344 : f32 to vector<8x64xf32>
    %346 = arith.mulf %345, %29 : vector<8x64xf32>
    %347 = arith.addf %343, %346 : vector<8x64xf32>
    %c164 = arith.constant 164 : index
    %348 = memref.load %arg5[%c164] : memref<216xf32, #tpu.memory_space<smem>>
    %349 = vector.broadcast %348 : f32 to vector<8x64xf32>
    %350 = arith.mulf %349, %34 : vector<8x64xf32>
    %351 = arith.addf %347, %350 : vector<8x64xf32>
    %c173 = arith.constant 173 : index
    %352 = memref.load %arg5[%c173] : memref<216xf32, #tpu.memory_space<smem>>
    %353 = vector.broadcast %352 : f32 to vector<8x64xf32>
    %354 = arith.mulf %353, %39 : vector<8x64xf32>
    %355 = arith.addf %351, %354 : vector<8x64xf32>
    %c182 = arith.constant 182 : index
    %356 = memref.load %arg5[%c182] : memref<216xf32, #tpu.memory_space<smem>>
    %357 = vector.broadcast %356 : f32 to vector<8x64xf32>
    %358 = arith.mulf %357, %44 : vector<8x64xf32>
    %359 = arith.addf %355, %358 : vector<8x64xf32>
    %c191 = arith.constant 191 : index
    %360 = memref.load %arg5[%c191] : memref<216xf32, #tpu.memory_space<smem>>
    %361 = vector.broadcast %360 : f32 to vector<8x64xf32>
    %362 = arith.mulf %361, %49 : vector<8x64xf32>
    %363 = arith.addf %359, %362 : vector<8x64xf32>
    %c200 = arith.constant 200 : index
    %364 = memref.load %arg5[%c200] : memref<216xf32, #tpu.memory_space<smem>>
    %365 = vector.broadcast %364 : f32 to vector<8x64xf32>
    %366 = arith.mulf %365, %54 : vector<8x64xf32>
    %367 = arith.addf %363, %366 : vector<8x64xf32>
    %c209 = arith.constant 209 : index
    %368 = memref.load %arg5[%c209] : memref<216xf32, #tpu.memory_space<smem>>
    %369 = vector.broadcast %368 : f32 to vector<8x64xf32>
    %370 = arith.mulf %369, %59 : vector<8x64xf32>
    %371 = arith.addf %367, %370 : vector<8x64xf32>
    %cst_128 = arith.constant dense<0.000000e+00> : vector<8x256xf32>
    %372 = tpu.matmul %371, %271, %cst_128 {dimension_numbers = #tpu.dot_dimension_numbers<[1], [0], [0], [1], [0, 0, 1, 1], [], []>} : vector<8x64xf32>, vector<64x256xf32>, vector<8x256xf32> -> vector<8x256xf32>
    %373 = arith.addf %269, %372 : vector<8x256xf32>
    %c3_129 = arith.constant 3 : index
    %c0_130 = arith.constant 0 : index
    %c0_131 = arith.constant 0 : index
    %374 = vector.load %arg3[%c3_129, %c0_130, %c0_131] : memref<9x64x256xf32, #tpu.memory_space<vmem>>, vector<1x64x256xf32>
    %375 = vector.shape_cast %374 : vector<1x64x256xf32> to vector<64x256xf32>
    %cst_132 = arith.constant 0.000000e+00 : f32
    %376 = vector.broadcast %cst_132 : f32 to vector<8x64xf32>
    %c3_133 = arith.constant 3 : index
    %377 = memref.load %arg5[%c3_133] : memref<216xf32, #tpu.memory_space<smem>>
    %378 = vector.broadcast %377 : f32 to vector<8x64xf32>
    %379 = arith.mulf %378, %4 : vector<8x64xf32>
    %380 = arith.addf %376, %379 : vector<8x64xf32>
    %c12 = arith.constant 12 : index
    %381 = memref.load %arg5[%c12] : memref<216xf32, #tpu.memory_space<smem>>
    %382 = vector.broadcast %381 : f32 to vector<8x64xf32>
    %383 = arith.mulf %382, %9 : vector<8x64xf32>
    %384 = arith.addf %380, %383 : vector<8x64xf32>
    %c21 = arith.constant 21 : index
    %385 = memref.load %arg5[%c21] : memref<216xf32, #tpu.memory_space<smem>>
    %386 = vector.broadcast %385 : f32 to vector<8x64xf32>
    %387 = arith.mulf %386, %14 : vector<8x64xf32>
    %388 = arith.addf %384, %387 : vector<8x64xf32>
    %c30 = arith.constant 30 : index
    %389 = memref.load %arg5[%c30] : memref<216xf32, #tpu.memory_space<smem>>
    %390 = vector.broadcast %389 : f32 to vector<8x64xf32>
    %391 = arith.mulf %390, %19 : vector<8x64xf32>
    %392 = arith.addf %388, %391 : vector<8x64xf32>
    %c39 = arith.constant 39 : index
    %393 = memref.load %arg5[%c39] : memref<216xf32, #tpu.memory_space<smem>>
    %394 = vector.broadcast %393 : f32 to vector<8x64xf32>
    %395 = arith.mulf %394, %24 : vector<8x64xf32>
    %396 = arith.addf %392, %395 : vector<8x64xf32>
    %c48 = arith.constant 48 : index
    %397 = memref.load %arg5[%c48] : memref<216xf32, #tpu.memory_space<smem>>
    %398 = vector.broadcast %397 : f32 to vector<8x64xf32>
    %399 = arith.mulf %398, %29 : vector<8x64xf32>
    %400 = arith.addf %396, %399 : vector<8x64xf32>
    %c57 = arith.constant 57 : index
    %401 = memref.load %arg5[%c57] : memref<216xf32, #tpu.memory_space<smem>>
    %402 = vector.broadcast %401 : f32 to vector<8x64xf32>
    %403 = arith.mulf %402, %34 : vector<8x64xf32>
    %404 = arith.addf %400, %403 : vector<8x64xf32>
    %c66 = arith.constant 66 : index
    %405 = memref.load %arg5[%c66] : memref<216xf32, #tpu.memory_space<smem>>
    %406 = vector.broadcast %405 : f32 to vector<8x64xf32>
    %407 = arith.mulf %406, %39 : vector<8x64xf32>
    %408 = arith.addf %404, %407 : vector<8x64xf32>
    %c75 = arith.constant 75 : index
    %409 = memref.load %arg5[%c75] : memref<216xf32, #tpu.memory_space<smem>>
    %410 = vector.broadcast %409 : f32 to vector<8x64xf32>
    %411 = arith.mulf %410, %44 : vector<8x64xf32>
    %412 = arith.addf %408, %411 : vector<8x64xf32>
    %c84 = arith.constant 84 : index
    %413 = memref.load %arg5[%c84] : memref<216xf32, #tpu.memory_space<smem>>
    %414 = vector.broadcast %413 : f32 to vector<8x64xf32>
    %415 = arith.mulf %414, %49 : vector<8x64xf32>
    %416 = arith.addf %412, %415 : vector<8x64xf32>
    %c93 = arith.constant 93 : index
    %417 = memref.load %arg5[%c93] : memref<216xf32, #tpu.memory_space<smem>>
    %418 = vector.broadcast %417 : f32 to vector<8x64xf32>
    %419 = arith.mulf %418, %54 : vector<8x64xf32>
    %420 = arith.addf %416, %419 : vector<8x64xf32>
    %c102 = arith.constant 102 : index
    %421 = memref.load %arg5[%c102] : memref<216xf32, #tpu.memory_space<smem>>
    %422 = vector.broadcast %421 : f32 to vector<8x64xf32>
    %423 = arith.mulf %422, %59 : vector<8x64xf32>
    %424 = arith.addf %420, %423 : vector<8x64xf32>
    %cst_134 = arith.constant dense<0.000000e+00> : vector<8x256xf32>
    %425 = tpu.matmul %424, %375, %cst_134 {dimension_numbers = #tpu.dot_dimension_numbers<[1], [0], [0], [1], [0, 0, 1, 1], [], []>} : vector<8x64xf32>, vector<64x256xf32>, vector<8x256xf32> -> vector<8x256xf32>
    %426 = arith.addf %322, %425 : vector<8x256xf32>
    %cst_135 = arith.constant 0.000000e+00 : f32
    %427 = vector.broadcast %cst_135 : f32 to vector<8x64xf32>
    %c111 = arith.constant 111 : index
    %428 = memref.load %arg5[%c111] : memref<216xf32, #tpu.memory_space<smem>>
    %429 = vector.broadcast %428 : f32 to vector<8x64xf32>
    %430 = arith.mulf %429, %4 : vector<8x64xf32>
    %431 = arith.addf %427, %430 : vector<8x64xf32>
    %c120 = arith.constant 120 : index
    %432 = memref.load %arg5[%c120] : memref<216xf32, #tpu.memory_space<smem>>
    %433 = vector.broadcast %432 : f32 to vector<8x64xf32>
    %434 = arith.mulf %433, %9 : vector<8x64xf32>
    %435 = arith.addf %431, %434 : vector<8x64xf32>
    %c129 = arith.constant 129 : index
    %436 = memref.load %arg5[%c129] : memref<216xf32, #tpu.memory_space<smem>>
    %437 = vector.broadcast %436 : f32 to vector<8x64xf32>
    %438 = arith.mulf %437, %14 : vector<8x64xf32>
    %439 = arith.addf %435, %438 : vector<8x64xf32>
    %c138 = arith.constant 138 : index
    %440 = memref.load %arg5[%c138] : memref<216xf32, #tpu.memory_space<smem>>
    %441 = vector.broadcast %440 : f32 to vector<8x64xf32>
    %442 = arith.mulf %441, %19 : vector<8x64xf32>
    %443 = arith.addf %439, %442 : vector<8x64xf32>
    %c147 = arith.constant 147 : index
    %444 = memref.load %arg5[%c147] : memref<216xf32, #tpu.memory_space<smem>>
    %445 = vector.broadcast %444 : f32 to vector<8x64xf32>
    %446 = arith.mulf %445, %24 : vector<8x64xf32>
    %447 = arith.addf %443, %446 : vector<8x64xf32>
    %c156 = arith.constant 156 : index
    %448 = memref.load %arg5[%c156] : memref<216xf32, #tpu.memory_space<smem>>
    %449 = vector.broadcast %448 : f32 to vector<8x64xf32>
    %450 = arith.mulf %449, %29 : vector<8x64xf32>
    %451 = arith.addf %447, %450 : vector<8x64xf32>
    %c165 = arith.constant 165 : index
    %452 = memref.load %arg5[%c165] : memref<216xf32, #tpu.memory_space<smem>>
    %453 = vector.broadcast %452 : f32 to vector<8x64xf32>
    %454 = arith.mulf %453, %34 : vector<8x64xf32>
    %455 = arith.addf %451, %454 : vector<8x64xf32>
    %c174 = arith.constant 174 : index
    %456 = memref.load %arg5[%c174] : memref<216xf32, #tpu.memory_space<smem>>
    %457 = vector.broadcast %456 : f32 to vector<8x64xf32>
    %458 = arith.mulf %457, %39 : vector<8x64xf32>
    %459 = arith.addf %455, %458 : vector<8x64xf32>
    %c183 = arith.constant 183 : index
    %460 = memref.load %arg5[%c183] : memref<216xf32, #tpu.memory_space<smem>>
    %461 = vector.broadcast %460 : f32 to vector<8x64xf32>
    %462 = arith.mulf %461, %44 : vector<8x64xf32>
    %463 = arith.addf %459, %462 : vector<8x64xf32>
    %c192 = arith.constant 192 : index
    %464 = memref.load %arg5[%c192] : memref<216xf32, #tpu.memory_space<smem>>
    %465 = vector.broadcast %464 : f32 to vector<8x64xf32>
    %466 = arith.mulf %465, %49 : vector<8x64xf32>
    %467 = arith.addf %463, %466 : vector<8x64xf32>
    %c201 = arith.constant 201 : index
    %468 = memref.load %arg5[%c201] : memref<216xf32, #tpu.memory_space<smem>>
    %469 = vector.broadcast %468 : f32 to vector<8x64xf32>
    %470 = arith.mulf %469, %54 : vector<8x64xf32>
    %471 = arith.addf %467, %470 : vector<8x64xf32>
    %c210 = arith.constant 210 : index
    %472 = memref.load %arg5[%c210] : memref<216xf32, #tpu.memory_space<smem>>
    %473 = vector.broadcast %472 : f32 to vector<8x64xf32>
    %474 = arith.mulf %473, %59 : vector<8x64xf32>
    %475 = arith.addf %471, %474 : vector<8x64xf32>
    %cst_136 = arith.constant dense<0.000000e+00> : vector<8x256xf32>
    %476 = tpu.matmul %475, %375, %cst_136 {dimension_numbers = #tpu.dot_dimension_numbers<[1], [0], [0], [1], [0, 0, 1, 1], [], []>} : vector<8x64xf32>, vector<64x256xf32>, vector<8x256xf32> -> vector<8x256xf32>
    %477 = arith.addf %373, %476 : vector<8x256xf32>
    %c4 = arith.constant 4 : index
    %c0_137 = arith.constant 0 : index
    %c0_138 = arith.constant 0 : index
    %478 = vector.load %arg3[%c4, %c0_137, %c0_138] : memref<9x64x256xf32, #tpu.memory_space<vmem>>, vector<1x64x256xf32>
    %479 = vector.shape_cast %478 : vector<1x64x256xf32> to vector<64x256xf32>
    %cst_139 = arith.constant 0.000000e+00 : f32
    %480 = vector.broadcast %cst_139 : f32 to vector<8x64xf32>
    %c4_140 = arith.constant 4 : index
    %481 = memref.load %arg5[%c4_140] : memref<216xf32, #tpu.memory_space<smem>>
    %482 = vector.broadcast %481 : f32 to vector<8x64xf32>
    %483 = arith.mulf %482, %4 : vector<8x64xf32>
    %484 = arith.addf %480, %483 : vector<8x64xf32>
    %c13 = arith.constant 13 : index
    %485 = memref.load %arg5[%c13] : memref<216xf32, #tpu.memory_space<smem>>
    %486 = vector.broadcast %485 : f32 to vector<8x64xf32>
    %487 = arith.mulf %486, %9 : vector<8x64xf32>
    %488 = arith.addf %484, %487 : vector<8x64xf32>
    %c22 = arith.constant 22 : index
    %489 = memref.load %arg5[%c22] : memref<216xf32, #tpu.memory_space<smem>>
    %490 = vector.broadcast %489 : f32 to vector<8x64xf32>
    %491 = arith.mulf %490, %14 : vector<8x64xf32>
    %492 = arith.addf %488, %491 : vector<8x64xf32>
    %c31 = arith.constant 31 : index
    %493 = memref.load %arg5[%c31] : memref<216xf32, #tpu.memory_space<smem>>
    %494 = vector.broadcast %493 : f32 to vector<8x64xf32>
    %495 = arith.mulf %494, %19 : vector<8x64xf32>
    %496 = arith.addf %492, %495 : vector<8x64xf32>
    %c40 = arith.constant 40 : index
    %497 = memref.load %arg5[%c40] : memref<216xf32, #tpu.memory_space<smem>>
    %498 = vector.broadcast %497 : f32 to vector<8x64xf32>
    %499 = arith.mulf %498, %24 : vector<8x64xf32>
    %500 = arith.addf %496, %499 : vector<8x64xf32>
    %c49 = arith.constant 49 : index
    %501 = memref.load %arg5[%c49] : memref<216xf32, #tpu.memory_space<smem>>
    %502 = vector.broadcast %501 : f32 to vector<8x64xf32>
    %503 = arith.mulf %502, %29 : vector<8x64xf32>
    %504 = arith.addf %500, %503 : vector<8x64xf32>
    %c58 = arith.constant 58 : index
    %505 = memref.load %arg5[%c58] : memref<216xf32, #tpu.memory_space<smem>>
    %506 = vector.broadcast %505 : f32 to vector<8x64xf32>
    %507 = arith.mulf %506, %34 : vector<8x64xf32>
    %508 = arith.addf %504, %507 : vector<8x64xf32>
    %c67 = arith.constant 67 : index
    %509 = memref.load %arg5[%c67] : memref<216xf32, #tpu.memory_space<smem>>
    %510 = vector.broadcast %509 : f32 to vector<8x64xf32>
    %511 = arith.mulf %510, %39 : vector<8x64xf32>
    %512 = arith.addf %508, %511 : vector<8x64xf32>
    %c76 = arith.constant 76 : index
    %513 = memref.load %arg5[%c76] : memref<216xf32, #tpu.memory_space<smem>>
    %514 = vector.broadcast %513 : f32 to vector<8x64xf32>
    %515 = arith.mulf %514, %44 : vector<8x64xf32>
    %516 = arith.addf %512, %515 : vector<8x64xf32>
    %c85 = arith.constant 85 : index
    %517 = memref.load %arg5[%c85] : memref<216xf32, #tpu.memory_space<smem>>
    %518 = vector.broadcast %517 : f32 to vector<8x64xf32>
    %519 = arith.mulf %518, %49 : vector<8x64xf32>
    %520 = arith.addf %516, %519 : vector<8x64xf32>
    %c94 = arith.constant 94 : index
    %521 = memref.load %arg5[%c94] : memref<216xf32, #tpu.memory_space<smem>>
    %522 = vector.broadcast %521 : f32 to vector<8x64xf32>
    %523 = arith.mulf %522, %54 : vector<8x64xf32>
    %524 = arith.addf %520, %523 : vector<8x64xf32>
    %c103 = arith.constant 103 : index
    %525 = memref.load %arg5[%c103] : memref<216xf32, #tpu.memory_space<smem>>
    %526 = vector.broadcast %525 : f32 to vector<8x64xf32>
    %527 = arith.mulf %526, %59 : vector<8x64xf32>
    %528 = arith.addf %524, %527 : vector<8x64xf32>
    %cst_141 = arith.constant dense<0.000000e+00> : vector<8x256xf32>
    %529 = tpu.matmul %528, %479, %cst_141 {dimension_numbers = #tpu.dot_dimension_numbers<[1], [0], [0], [1], [0, 0, 1, 1], [], []>} : vector<8x64xf32>, vector<64x256xf32>, vector<8x256xf32> -> vector<8x256xf32>
    %530 = arith.addf %426, %529 : vector<8x256xf32>
    %cst_142 = arith.constant 0.000000e+00 : f32
    %531 = vector.broadcast %cst_142 : f32 to vector<8x64xf32>
    %c112 = arith.constant 112 : index
    %532 = memref.load %arg5[%c112] : memref<216xf32, #tpu.memory_space<smem>>
    %533 = vector.broadcast %532 : f32 to vector<8x64xf32>
    %534 = arith.mulf %533, %4 : vector<8x64xf32>
    %535 = arith.addf %531, %534 : vector<8x64xf32>
    %c121 = arith.constant 121 : index
    %536 = memref.load %arg5[%c121] : memref<216xf32, #tpu.memory_space<smem>>
    %537 = vector.broadcast %536 : f32 to vector<8x64xf32>
    %538 = arith.mulf %537, %9 : vector<8x64xf32>
    %539 = arith.addf %535, %538 : vector<8x64xf32>
    %c130 = arith.constant 130 : index
    %540 = memref.load %arg5[%c130] : memref<216xf32, #tpu.memory_space<smem>>
    %541 = vector.broadcast %540 : f32 to vector<8x64xf32>
    %542 = arith.mulf %541, %14 : vector<8x64xf32>
    %543 = arith.addf %539, %542 : vector<8x64xf32>
    %c139 = arith.constant 139 : index
    %544 = memref.load %arg5[%c139] : memref<216xf32, #tpu.memory_space<smem>>
    %545 = vector.broadcast %544 : f32 to vector<8x64xf32>
    %546 = arith.mulf %545, %19 : vector<8x64xf32>
    %547 = arith.addf %543, %546 : vector<8x64xf32>
    %c148 = arith.constant 148 : index
    %548 = memref.load %arg5[%c148] : memref<216xf32, #tpu.memory_space<smem>>
    %549 = vector.broadcast %548 : f32 to vector<8x64xf32>
    %550 = arith.mulf %549, %24 : vector<8x64xf32>
    %551 = arith.addf %547, %550 : vector<8x64xf32>
    %c157 = arith.constant 157 : index
    %552 = memref.load %arg5[%c157] : memref<216xf32, #tpu.memory_space<smem>>
    %553 = vector.broadcast %552 : f32 to vector<8x64xf32>
    %554 = arith.mulf %553, %29 : vector<8x64xf32>
    %555 = arith.addf %551, %554 : vector<8x64xf32>
    %c166 = arith.constant 166 : index
    %556 = memref.load %arg5[%c166] : memref<216xf32, #tpu.memory_space<smem>>
    %557 = vector.broadcast %556 : f32 to vector<8x64xf32>
    %558 = arith.mulf %557, %34 : vector<8x64xf32>
    %559 = arith.addf %555, %558 : vector<8x64xf32>
    %c175 = arith.constant 175 : index
    %560 = memref.load %arg5[%c175] : memref<216xf32, #tpu.memory_space<smem>>
    %561 = vector.broadcast %560 : f32 to vector<8x64xf32>
    %562 = arith.mulf %561, %39 : vector<8x64xf32>
    %563 = arith.addf %559, %562 : vector<8x64xf32>
    %c184 = arith.constant 184 : index
    %564 = memref.load %arg5[%c184] : memref<216xf32, #tpu.memory_space<smem>>
    %565 = vector.broadcast %564 : f32 to vector<8x64xf32>
    %566 = arith.mulf %565, %44 : vector<8x64xf32>
    %567 = arith.addf %563, %566 : vector<8x64xf32>
    %c193 = arith.constant 193 : index
    %568 = memref.load %arg5[%c193] : memref<216xf32, #tpu.memory_space<smem>>
    %569 = vector.broadcast %568 : f32 to vector<8x64xf32>
    %570 = arith.mulf %569, %49 : vector<8x64xf32>
    %571 = arith.addf %567, %570 : vector<8x64xf32>
    %c202 = arith.constant 202 : index
    %572 = memref.load %arg5[%c202] : memref<216xf32, #tpu.memory_space<smem>>
    %573 = vector.broadcast %572 : f32 to vector<8x64xf32>
    %574 = arith.mulf %573, %54 : vector<8x64xf32>
    %575 = arith.addf %571, %574 : vector<8x64xf32>
    %c211 = arith.constant 211 : index
    %576 = memref.load %arg5[%c211] : memref<216xf32, #tpu.memory_space<smem>>
    %577 = vector.broadcast %576 : f32 to vector<8x64xf32>
    %578 = arith.mulf %577, %59 : vector<8x64xf32>
    %579 = arith.addf %575, %578 : vector<8x64xf32>
    %cst_143 = arith.constant dense<0.000000e+00> : vector<8x256xf32>
    %580 = tpu.matmul %579, %479, %cst_143 {dimension_numbers = #tpu.dot_dimension_numbers<[1], [0], [0], [1], [0, 0, 1, 1], [], []>} : vector<8x64xf32>, vector<64x256xf32>, vector<8x256xf32> -> vector<8x256xf32>
    %581 = arith.addf %477, %580 : vector<8x256xf32>
    %c5 = arith.constant 5 : index
    %c0_144 = arith.constant 0 : index
    %c0_145 = arith.constant 0 : index
    %582 = vector.load %arg3[%c5, %c0_144, %c0_145] : memref<9x64x256xf32, #tpu.memory_space<vmem>>, vector<1x64x256xf32>
    %583 = vector.shape_cast %582 : vector<1x64x256xf32> to vector<64x256xf32>
    %cst_146 = arith.constant 0.000000e+00 : f32
    %584 = vector.broadcast %cst_146 : f32 to vector<8x64xf32>
    %c5_147 = arith.constant 5 : index
    %585 = memref.load %arg5[%c5_147] : memref<216xf32, #tpu.memory_space<smem>>
    %586 = vector.broadcast %585 : f32 to vector<8x64xf32>
    %587 = arith.mulf %586, %4 : vector<8x64xf32>
    %588 = arith.addf %584, %587 : vector<8x64xf32>
    %c14 = arith.constant 14 : index
    %589 = memref.load %arg5[%c14] : memref<216xf32, #tpu.memory_space<smem>>
    %590 = vector.broadcast %589 : f32 to vector<8x64xf32>
    %591 = arith.mulf %590, %9 : vector<8x64xf32>
    %592 = arith.addf %588, %591 : vector<8x64xf32>
    %c23 = arith.constant 23 : index
    %593 = memref.load %arg5[%c23] : memref<216xf32, #tpu.memory_space<smem>>
    %594 = vector.broadcast %593 : f32 to vector<8x64xf32>
    %595 = arith.mulf %594, %14 : vector<8x64xf32>
    %596 = arith.addf %592, %595 : vector<8x64xf32>
    %c32 = arith.constant 32 : index
    %597 = memref.load %arg5[%c32] : memref<216xf32, #tpu.memory_space<smem>>
    %598 = vector.broadcast %597 : f32 to vector<8x64xf32>
    %599 = arith.mulf %598, %19 : vector<8x64xf32>
    %600 = arith.addf %596, %599 : vector<8x64xf32>
    %c41 = arith.constant 41 : index
    %601 = memref.load %arg5[%c41] : memref<216xf32, #tpu.memory_space<smem>>
    %602 = vector.broadcast %601 : f32 to vector<8x64xf32>
    %603 = arith.mulf %602, %24 : vector<8x64xf32>
    %604 = arith.addf %600, %603 : vector<8x64xf32>
    %c50 = arith.constant 50 : index
    %605 = memref.load %arg5[%c50] : memref<216xf32, #tpu.memory_space<smem>>
    %606 = vector.broadcast %605 : f32 to vector<8x64xf32>
    %607 = arith.mulf %606, %29 : vector<8x64xf32>
    %608 = arith.addf %604, %607 : vector<8x64xf32>
    %c59 = arith.constant 59 : index
    %609 = memref.load %arg5[%c59] : memref<216xf32, #tpu.memory_space<smem>>
    %610 = vector.broadcast %609 : f32 to vector<8x64xf32>
    %611 = arith.mulf %610, %34 : vector<8x64xf32>
    %612 = arith.addf %608, %611 : vector<8x64xf32>
    %c68 = arith.constant 68 : index
    %613 = memref.load %arg5[%c68] : memref<216xf32, #tpu.memory_space<smem>>
    %614 = vector.broadcast %613 : f32 to vector<8x64xf32>
    %615 = arith.mulf %614, %39 : vector<8x64xf32>
    %616 = arith.addf %612, %615 : vector<8x64xf32>
    %c77 = arith.constant 77 : index
    %617 = memref.load %arg5[%c77] : memref<216xf32, #tpu.memory_space<smem>>
    %618 = vector.broadcast %617 : f32 to vector<8x64xf32>
    %619 = arith.mulf %618, %44 : vector<8x64xf32>
    %620 = arith.addf %616, %619 : vector<8x64xf32>
    %c86 = arith.constant 86 : index
    %621 = memref.load %arg5[%c86] : memref<216xf32, #tpu.memory_space<smem>>
    %622 = vector.broadcast %621 : f32 to vector<8x64xf32>
    %623 = arith.mulf %622, %49 : vector<8x64xf32>
    %624 = arith.addf %620, %623 : vector<8x64xf32>
    %c95 = arith.constant 95 : index
    %625 = memref.load %arg5[%c95] : memref<216xf32, #tpu.memory_space<smem>>
    %626 = vector.broadcast %625 : f32 to vector<8x64xf32>
    %627 = arith.mulf %626, %54 : vector<8x64xf32>
    %628 = arith.addf %624, %627 : vector<8x64xf32>
    %c104 = arith.constant 104 : index
    %629 = memref.load %arg5[%c104] : memref<216xf32, #tpu.memory_space<smem>>
    %630 = vector.broadcast %629 : f32 to vector<8x64xf32>
    %631 = arith.mulf %630, %59 : vector<8x64xf32>
    %632 = arith.addf %628, %631 : vector<8x64xf32>
    %cst_148 = arith.constant dense<0.000000e+00> : vector<8x256xf32>
    %633 = tpu.matmul %632, %583, %cst_148 {dimension_numbers = #tpu.dot_dimension_numbers<[1], [0], [0], [1], [0, 0, 1, 1], [], []>} : vector<8x64xf32>, vector<64x256xf32>, vector<8x256xf32> -> vector<8x256xf32>
    %634 = arith.addf %530, %633 : vector<8x256xf32>
    %cst_149 = arith.constant 0.000000e+00 : f32
    %635 = vector.broadcast %cst_149 : f32 to vector<8x64xf32>
    %c113 = arith.constant 113 : index
    %636 = memref.load %arg5[%c113] : memref<216xf32, #tpu.memory_space<smem>>
    %637 = vector.broadcast %636 : f32 to vector<8x64xf32>
    %638 = arith.mulf %637, %4 : vector<8x64xf32>
    %639 = arith.addf %635, %638 : vector<8x64xf32>
    %c122 = arith.constant 122 : index
    %640 = memref.load %arg5[%c122] : memref<216xf32, #tpu.memory_space<smem>>
    %641 = vector.broadcast %640 : f32 to vector<8x64xf32>
    %642 = arith.mulf %641, %9 : vector<8x64xf32>
    %643 = arith.addf %639, %642 : vector<8x64xf32>
    %c131 = arith.constant 131 : index
    %644 = memref.load %arg5[%c131] : memref<216xf32, #tpu.memory_space<smem>>
    %645 = vector.broadcast %644 : f32 to vector<8x64xf32>
    %646 = arith.mulf %645, %14 : vector<8x64xf32>
    %647 = arith.addf %643, %646 : vector<8x64xf32>
    %c140 = arith.constant 140 : index
    %648 = memref.load %arg5[%c140] : memref<216xf32, #tpu.memory_space<smem>>
    %649 = vector.broadcast %648 : f32 to vector<8x64xf32>
    %650 = arith.mulf %649, %19 : vector<8x64xf32>
    %651 = arith.addf %647, %650 : vector<8x64xf32>
    %c149 = arith.constant 149 : index
    %652 = memref.load %arg5[%c149] : memref<216xf32, #tpu.memory_space<smem>>
    %653 = vector.broadcast %652 : f32 to vector<8x64xf32>
    %654 = arith.mulf %653, %24 : vector<8x64xf32>
    %655 = arith.addf %651, %654 : vector<8x64xf32>
    %c158 = arith.constant 158 : index
    %656 = memref.load %arg5[%c158] : memref<216xf32, #tpu.memory_space<smem>>
    %657 = vector.broadcast %656 : f32 to vector<8x64xf32>
    %658 = arith.mulf %657, %29 : vector<8x64xf32>
    %659 = arith.addf %655, %658 : vector<8x64xf32>
    %c167 = arith.constant 167 : index
    %660 = memref.load %arg5[%c167] : memref<216xf32, #tpu.memory_space<smem>>
    %661 = vector.broadcast %660 : f32 to vector<8x64xf32>
    %662 = arith.mulf %661, %34 : vector<8x64xf32>
    %663 = arith.addf %659, %662 : vector<8x64xf32>
    %c176 = arith.constant 176 : index
    %664 = memref.load %arg5[%c176] : memref<216xf32, #tpu.memory_space<smem>>
    %665 = vector.broadcast %664 : f32 to vector<8x64xf32>
    %666 = arith.mulf %665, %39 : vector<8x64xf32>
    %667 = arith.addf %663, %666 : vector<8x64xf32>
    %c185 = arith.constant 185 : index
    %668 = memref.load %arg5[%c185] : memref<216xf32, #tpu.memory_space<smem>>
    %669 = vector.broadcast %668 : f32 to vector<8x64xf32>
    %670 = arith.mulf %669, %44 : vector<8x64xf32>
    %671 = arith.addf %667, %670 : vector<8x64xf32>
    %c194 = arith.constant 194 : index
    %672 = memref.load %arg5[%c194] : memref<216xf32, #tpu.memory_space<smem>>
    %673 = vector.broadcast %672 : f32 to vector<8x64xf32>
    %674 = arith.mulf %673, %49 : vector<8x64xf32>
    %675 = arith.addf %671, %674 : vector<8x64xf32>
    %c203 = arith.constant 203 : index
    %676 = memref.load %arg5[%c203] : memref<216xf32, #tpu.memory_space<smem>>
    %677 = vector.broadcast %676 : f32 to vector<8x64xf32>
    %678 = arith.mulf %677, %54 : vector<8x64xf32>
    %679 = arith.addf %675, %678 : vector<8x64xf32>
    %c212 = arith.constant 212 : index
    %680 = memref.load %arg5[%c212] : memref<216xf32, #tpu.memory_space<smem>>
    %681 = vector.broadcast %680 : f32 to vector<8x64xf32>
    %682 = arith.mulf %681, %59 : vector<8x64xf32>
    %683 = arith.addf %679, %682 : vector<8x64xf32>
    %cst_150 = arith.constant dense<0.000000e+00> : vector<8x256xf32>
    %684 = tpu.matmul %683, %583, %cst_150 {dimension_numbers = #tpu.dot_dimension_numbers<[1], [0], [0], [1], [0, 0, 1, 1], [], []>} : vector<8x64xf32>, vector<64x256xf32>, vector<8x256xf32> -> vector<8x256xf32>
    %685 = arith.addf %581, %684 : vector<8x256xf32>
    %c6 = arith.constant 6 : index
    %c0_151 = arith.constant 0 : index
    %c0_152 = arith.constant 0 : index
    %686 = vector.load %arg3[%c6, %c0_151, %c0_152] : memref<9x64x256xf32, #tpu.memory_space<vmem>>, vector<1x64x256xf32>
    %687 = vector.shape_cast %686 : vector<1x64x256xf32> to vector<64x256xf32>
    %cst_153 = arith.constant 0.000000e+00 : f32
    %688 = vector.broadcast %cst_153 : f32 to vector<8x64xf32>
    %c6_154 = arith.constant 6 : index
    %689 = memref.load %arg5[%c6_154] : memref<216xf32, #tpu.memory_space<smem>>
    %690 = vector.broadcast %689 : f32 to vector<8x64xf32>
    %691 = arith.mulf %690, %4 : vector<8x64xf32>
    %692 = arith.addf %688, %691 : vector<8x64xf32>
    %c15 = arith.constant 15 : index
    %693 = memref.load %arg5[%c15] : memref<216xf32, #tpu.memory_space<smem>>
    %694 = vector.broadcast %693 : f32 to vector<8x64xf32>
    %695 = arith.mulf %694, %9 : vector<8x64xf32>
    %696 = arith.addf %692, %695 : vector<8x64xf32>
    %c24 = arith.constant 24 : index
    %697 = memref.load %arg5[%c24] : memref<216xf32, #tpu.memory_space<smem>>
    %698 = vector.broadcast %697 : f32 to vector<8x64xf32>
    %699 = arith.mulf %698, %14 : vector<8x64xf32>
    %700 = arith.addf %696, %699 : vector<8x64xf32>
    %c33 = arith.constant 33 : index
    %701 = memref.load %arg5[%c33] : memref<216xf32, #tpu.memory_space<smem>>
    %702 = vector.broadcast %701 : f32 to vector<8x64xf32>
    %703 = arith.mulf %702, %19 : vector<8x64xf32>
    %704 = arith.addf %700, %703 : vector<8x64xf32>
    %c42 = arith.constant 42 : index
    %705 = memref.load %arg5[%c42] : memref<216xf32, #tpu.memory_space<smem>>
    %706 = vector.broadcast %705 : f32 to vector<8x64xf32>
    %707 = arith.mulf %706, %24 : vector<8x64xf32>
    %708 = arith.addf %704, %707 : vector<8x64xf32>
    %c51 = arith.constant 51 : index
    %709 = memref.load %arg5[%c51] : memref<216xf32, #tpu.memory_space<smem>>
    %710 = vector.broadcast %709 : f32 to vector<8x64xf32>
    %711 = arith.mulf %710, %29 : vector<8x64xf32>
    %712 = arith.addf %708, %711 : vector<8x64xf32>
    %c60 = arith.constant 60 : index
    %713 = memref.load %arg5[%c60] : memref<216xf32, #tpu.memory_space<smem>>
    %714 = vector.broadcast %713 : f32 to vector<8x64xf32>
    %715 = arith.mulf %714, %34 : vector<8x64xf32>
    %716 = arith.addf %712, %715 : vector<8x64xf32>
    %c69 = arith.constant 69 : index
    %717 = memref.load %arg5[%c69] : memref<216xf32, #tpu.memory_space<smem>>
    %718 = vector.broadcast %717 : f32 to vector<8x64xf32>
    %719 = arith.mulf %718, %39 : vector<8x64xf32>
    %720 = arith.addf %716, %719 : vector<8x64xf32>
    %c78 = arith.constant 78 : index
    %721 = memref.load %arg5[%c78] : memref<216xf32, #tpu.memory_space<smem>>
    %722 = vector.broadcast %721 : f32 to vector<8x64xf32>
    %723 = arith.mulf %722, %44 : vector<8x64xf32>
    %724 = arith.addf %720, %723 : vector<8x64xf32>
    %c87 = arith.constant 87 : index
    %725 = memref.load %arg5[%c87] : memref<216xf32, #tpu.memory_space<smem>>
    %726 = vector.broadcast %725 : f32 to vector<8x64xf32>
    %727 = arith.mulf %726, %49 : vector<8x64xf32>
    %728 = arith.addf %724, %727 : vector<8x64xf32>
    %c96 = arith.constant 96 : index
    %729 = memref.load %arg5[%c96] : memref<216xf32, #tpu.memory_space<smem>>
    %730 = vector.broadcast %729 : f32 to vector<8x64xf32>
    %731 = arith.mulf %730, %54 : vector<8x64xf32>
    %732 = arith.addf %728, %731 : vector<8x64xf32>
    %c105 = arith.constant 105 : index
    %733 = memref.load %arg5[%c105] : memref<216xf32, #tpu.memory_space<smem>>
    %734 = vector.broadcast %733 : f32 to vector<8x64xf32>
    %735 = arith.mulf %734, %59 : vector<8x64xf32>
    %736 = arith.addf %732, %735 : vector<8x64xf32>
    %cst_155 = arith.constant dense<0.000000e+00> : vector<8x256xf32>
    %737 = tpu.matmul %736, %687, %cst_155 {dimension_numbers = #tpu.dot_dimension_numbers<[1], [0], [0], [1], [0, 0, 1, 1], [], []>} : vector<8x64xf32>, vector<64x256xf32>, vector<8x256xf32> -> vector<8x256xf32>
    %738 = arith.addf %634, %737 : vector<8x256xf32>
    %cst_156 = arith.constant 0.000000e+00 : f32
    %739 = vector.broadcast %cst_156 : f32 to vector<8x64xf32>
    %c114 = arith.constant 114 : index
    %740 = memref.load %arg5[%c114] : memref<216xf32, #tpu.memory_space<smem>>
    %741 = vector.broadcast %740 : f32 to vector<8x64xf32>
    %742 = arith.mulf %741, %4 : vector<8x64xf32>
    %743 = arith.addf %739, %742 : vector<8x64xf32>
    %c123 = arith.constant 123 : index
    %744 = memref.load %arg5[%c123] : memref<216xf32, #tpu.memory_space<smem>>
    %745 = vector.broadcast %744 : f32 to vector<8x64xf32>
    %746 = arith.mulf %745, %9 : vector<8x64xf32>
    %747 = arith.addf %743, %746 : vector<8x64xf32>
    %c132 = arith.constant 132 : index
    %748 = memref.load %arg5[%c132] : memref<216xf32, #tpu.memory_space<smem>>
    %749 = vector.broadcast %748 : f32 to vector<8x64xf32>
    %750 = arith.mulf %749, %14 : vector<8x64xf32>
    %751 = arith.addf %747, %750 : vector<8x64xf32>
    %c141 = arith.constant 141 : index
    %752 = memref.load %arg5[%c141] : memref<216xf32, #tpu.memory_space<smem>>
    %753 = vector.broadcast %752 : f32 to vector<8x64xf32>
    %754 = arith.mulf %753, %19 : vector<8x64xf32>
    %755 = arith.addf %751, %754 : vector<8x64xf32>
    %c150 = arith.constant 150 : index
    %756 = memref.load %arg5[%c150] : memref<216xf32, #tpu.memory_space<smem>>
    %757 = vector.broadcast %756 : f32 to vector<8x64xf32>
    %758 = arith.mulf %757, %24 : vector<8x64xf32>
    %759 = arith.addf %755, %758 : vector<8x64xf32>
    %c159 = arith.constant 159 : index
    %760 = memref.load %arg5[%c159] : memref<216xf32, #tpu.memory_space<smem>>
    %761 = vector.broadcast %760 : f32 to vector<8x64xf32>
    %762 = arith.mulf %761, %29 : vector<8x64xf32>
    %763 = arith.addf %759, %762 : vector<8x64xf32>
    %c168 = arith.constant 168 : index
    %764 = memref.load %arg5[%c168] : memref<216xf32, #tpu.memory_space<smem>>
    %765 = vector.broadcast %764 : f32 to vector<8x64xf32>
    %766 = arith.mulf %765, %34 : vector<8x64xf32>
    %767 = arith.addf %763, %766 : vector<8x64xf32>
    %c177 = arith.constant 177 : index
    %768 = memref.load %arg5[%c177] : memref<216xf32, #tpu.memory_space<smem>>
    %769 = vector.broadcast %768 : f32 to vector<8x64xf32>
    %770 = arith.mulf %769, %39 : vector<8x64xf32>
    %771 = arith.addf %767, %770 : vector<8x64xf32>
    %c186 = arith.constant 186 : index
    %772 = memref.load %arg5[%c186] : memref<216xf32, #tpu.memory_space<smem>>
    %773 = vector.broadcast %772 : f32 to vector<8x64xf32>
    %774 = arith.mulf %773, %44 : vector<8x64xf32>
    %775 = arith.addf %771, %774 : vector<8x64xf32>
    %c195 = arith.constant 195 : index
    %776 = memref.load %arg5[%c195] : memref<216xf32, #tpu.memory_space<smem>>
    %777 = vector.broadcast %776 : f32 to vector<8x64xf32>
    %778 = arith.mulf %777, %49 : vector<8x64xf32>
    %779 = arith.addf %775, %778 : vector<8x64xf32>
    %c204 = arith.constant 204 : index
    %780 = memref.load %arg5[%c204] : memref<216xf32, #tpu.memory_space<smem>>
    %781 = vector.broadcast %780 : f32 to vector<8x64xf32>
    %782 = arith.mulf %781, %54 : vector<8x64xf32>
    %783 = arith.addf %779, %782 : vector<8x64xf32>
    %c213 = arith.constant 213 : index
    %784 = memref.load %arg5[%c213] : memref<216xf32, #tpu.memory_space<smem>>
    %785 = vector.broadcast %784 : f32 to vector<8x64xf32>
    %786 = arith.mulf %785, %59 : vector<8x64xf32>
    %787 = arith.addf %783, %786 : vector<8x64xf32>
    %cst_157 = arith.constant dense<0.000000e+00> : vector<8x256xf32>
    %788 = tpu.matmul %787, %687, %cst_157 {dimension_numbers = #tpu.dot_dimension_numbers<[1], [0], [0], [1], [0, 0, 1, 1], [], []>} : vector<8x64xf32>, vector<64x256xf32>, vector<8x256xf32> -> vector<8x256xf32>
    %789 = arith.addf %685, %788 : vector<8x256xf32>
    %c7 = arith.constant 7 : index
    %c0_158 = arith.constant 0 : index
    %c0_159 = arith.constant 0 : index
    %790 = vector.load %arg3[%c7, %c0_158, %c0_159] : memref<9x64x256xf32, #tpu.memory_space<vmem>>, vector<1x64x256xf32>
    %791 = vector.shape_cast %790 : vector<1x64x256xf32> to vector<64x256xf32>
    %cst_160 = arith.constant 0.000000e+00 : f32
    %792 = vector.broadcast %cst_160 : f32 to vector<8x64xf32>
    %c7_161 = arith.constant 7 : index
    %793 = memref.load %arg5[%c7_161] : memref<216xf32, #tpu.memory_space<smem>>
    %794 = vector.broadcast %793 : f32 to vector<8x64xf32>
    %795 = arith.mulf %794, %4 : vector<8x64xf32>
    %796 = arith.addf %792, %795 : vector<8x64xf32>
    %c16 = arith.constant 16 : index
    %797 = memref.load %arg5[%c16] : memref<216xf32, #tpu.memory_space<smem>>
    %798 = vector.broadcast %797 : f32 to vector<8x64xf32>
    %799 = arith.mulf %798, %9 : vector<8x64xf32>
    %800 = arith.addf %796, %799 : vector<8x64xf32>
    %c25 = arith.constant 25 : index
    %801 = memref.load %arg5[%c25] : memref<216xf32, #tpu.memory_space<smem>>
    %802 = vector.broadcast %801 : f32 to vector<8x64xf32>
    %803 = arith.mulf %802, %14 : vector<8x64xf32>
    %804 = arith.addf %800, %803 : vector<8x64xf32>
    %c34 = arith.constant 34 : index
    %805 = memref.load %arg5[%c34] : memref<216xf32, #tpu.memory_space<smem>>
    %806 = vector.broadcast %805 : f32 to vector<8x64xf32>
    %807 = arith.mulf %806, %19 : vector<8x64xf32>
    %808 = arith.addf %804, %807 : vector<8x64xf32>
    %c43 = arith.constant 43 : index
    %809 = memref.load %arg5[%c43] : memref<216xf32, #tpu.memory_space<smem>>
    %810 = vector.broadcast %809 : f32 to vector<8x64xf32>
    %811 = arith.mulf %810, %24 : vector<8x64xf32>
    %812 = arith.addf %808, %811 : vector<8x64xf32>
    %c52 = arith.constant 52 : index
    %813 = memref.load %arg5[%c52] : memref<216xf32, #tpu.memory_space<smem>>
    %814 = vector.broadcast %813 : f32 to vector<8x64xf32>
    %815 = arith.mulf %814, %29 : vector<8x64xf32>
    %816 = arith.addf %812, %815 : vector<8x64xf32>
    %c61 = arith.constant 61 : index
    %817 = memref.load %arg5[%c61] : memref<216xf32, #tpu.memory_space<smem>>
    %818 = vector.broadcast %817 : f32 to vector<8x64xf32>
    %819 = arith.mulf %818, %34 : vector<8x64xf32>
    %820 = arith.addf %816, %819 : vector<8x64xf32>
    %c70 = arith.constant 70 : index
    %821 = memref.load %arg5[%c70] : memref<216xf32, #tpu.memory_space<smem>>
    %822 = vector.broadcast %821 : f32 to vector<8x64xf32>
    %823 = arith.mulf %822, %39 : vector<8x64xf32>
    %824 = arith.addf %820, %823 : vector<8x64xf32>
    %c79 = arith.constant 79 : index
    %825 = memref.load %arg5[%c79] : memref<216xf32, #tpu.memory_space<smem>>
    %826 = vector.broadcast %825 : f32 to vector<8x64xf32>
    %827 = arith.mulf %826, %44 : vector<8x64xf32>
    %828 = arith.addf %824, %827 : vector<8x64xf32>
    %c88 = arith.constant 88 : index
    %829 = memref.load %arg5[%c88] : memref<216xf32, #tpu.memory_space<smem>>
    %830 = vector.broadcast %829 : f32 to vector<8x64xf32>
    %831 = arith.mulf %830, %49 : vector<8x64xf32>
    %832 = arith.addf %828, %831 : vector<8x64xf32>
    %c97 = arith.constant 97 : index
    %833 = memref.load %arg5[%c97] : memref<216xf32, #tpu.memory_space<smem>>
    %834 = vector.broadcast %833 : f32 to vector<8x64xf32>
    %835 = arith.mulf %834, %54 : vector<8x64xf32>
    %836 = arith.addf %832, %835 : vector<8x64xf32>
    %c106 = arith.constant 106 : index
    %837 = memref.load %arg5[%c106] : memref<216xf32, #tpu.memory_space<smem>>
    %838 = vector.broadcast %837 : f32 to vector<8x64xf32>
    %839 = arith.mulf %838, %59 : vector<8x64xf32>
    %840 = arith.addf %836, %839 : vector<8x64xf32>
    %cst_162 = arith.constant dense<0.000000e+00> : vector<8x256xf32>
    %841 = tpu.matmul %840, %791, %cst_162 {dimension_numbers = #tpu.dot_dimension_numbers<[1], [0], [0], [1], [0, 0, 1, 1], [], []>} : vector<8x64xf32>, vector<64x256xf32>, vector<8x256xf32> -> vector<8x256xf32>
    %842 = arith.addf %738, %841 : vector<8x256xf32>
    %cst_163 = arith.constant 0.000000e+00 : f32
    %843 = vector.broadcast %cst_163 : f32 to vector<8x64xf32>
    %c115 = arith.constant 115 : index
    %844 = memref.load %arg5[%c115] : memref<216xf32, #tpu.memory_space<smem>>
    %845 = vector.broadcast %844 : f32 to vector<8x64xf32>
    %846 = arith.mulf %845, %4 : vector<8x64xf32>
    %847 = arith.addf %843, %846 : vector<8x64xf32>
    %c124 = arith.constant 124 : index
    %848 = memref.load %arg5[%c124] : memref<216xf32, #tpu.memory_space<smem>>
    %849 = vector.broadcast %848 : f32 to vector<8x64xf32>
    %850 = arith.mulf %849, %9 : vector<8x64xf32>
    %851 = arith.addf %847, %850 : vector<8x64xf32>
    %c133 = arith.constant 133 : index
    %852 = memref.load %arg5[%c133] : memref<216xf32, #tpu.memory_space<smem>>
    %853 = vector.broadcast %852 : f32 to vector<8x64xf32>
    %854 = arith.mulf %853, %14 : vector<8x64xf32>
    %855 = arith.addf %851, %854 : vector<8x64xf32>
    %c142 = arith.constant 142 : index
    %856 = memref.load %arg5[%c142] : memref<216xf32, #tpu.memory_space<smem>>
    %857 = vector.broadcast %856 : f32 to vector<8x64xf32>
    %858 = arith.mulf %857, %19 : vector<8x64xf32>
    %859 = arith.addf %855, %858 : vector<8x64xf32>
    %c151 = arith.constant 151 : index
    %860 = memref.load %arg5[%c151] : memref<216xf32, #tpu.memory_space<smem>>
    %861 = vector.broadcast %860 : f32 to vector<8x64xf32>
    %862 = arith.mulf %861, %24 : vector<8x64xf32>
    %863 = arith.addf %859, %862 : vector<8x64xf32>
    %c160 = arith.constant 160 : index
    %864 = memref.load %arg5[%c160] : memref<216xf32, #tpu.memory_space<smem>>
    %865 = vector.broadcast %864 : f32 to vector<8x64xf32>
    %866 = arith.mulf %865, %29 : vector<8x64xf32>
    %867 = arith.addf %863, %866 : vector<8x64xf32>
    %c169 = arith.constant 169 : index
    %868 = memref.load %arg5[%c169] : memref<216xf32, #tpu.memory_space<smem>>
    %869 = vector.broadcast %868 : f32 to vector<8x64xf32>
    %870 = arith.mulf %869, %34 : vector<8x64xf32>
    %871 = arith.addf %867, %870 : vector<8x64xf32>
    %c178 = arith.constant 178 : index
    %872 = memref.load %arg5[%c178] : memref<216xf32, #tpu.memory_space<smem>>
    %873 = vector.broadcast %872 : f32 to vector<8x64xf32>
    %874 = arith.mulf %873, %39 : vector<8x64xf32>
    %875 = arith.addf %871, %874 : vector<8x64xf32>
    %c187 = arith.constant 187 : index
    %876 = memref.load %arg5[%c187] : memref<216xf32, #tpu.memory_space<smem>>
    %877 = vector.broadcast %876 : f32 to vector<8x64xf32>
    %878 = arith.mulf %877, %44 : vector<8x64xf32>
    %879 = arith.addf %875, %878 : vector<8x64xf32>
    %c196 = arith.constant 196 : index
    %880 = memref.load %arg5[%c196] : memref<216xf32, #tpu.memory_space<smem>>
    %881 = vector.broadcast %880 : f32 to vector<8x64xf32>
    %882 = arith.mulf %881, %49 : vector<8x64xf32>
    %883 = arith.addf %879, %882 : vector<8x64xf32>
    %c205 = arith.constant 205 : index
    %884 = memref.load %arg5[%c205] : memref<216xf32, #tpu.memory_space<smem>>
    %885 = vector.broadcast %884 : f32 to vector<8x64xf32>
    %886 = arith.mulf %885, %54 : vector<8x64xf32>
    %887 = arith.addf %883, %886 : vector<8x64xf32>
    %c214 = arith.constant 214 : index
    %888 = memref.load %arg5[%c214] : memref<216xf32, #tpu.memory_space<smem>>
    %889 = vector.broadcast %888 : f32 to vector<8x64xf32>
    %890 = arith.mulf %889, %59 : vector<8x64xf32>
    %891 = arith.addf %887, %890 : vector<8x64xf32>
    %cst_164 = arith.constant dense<0.000000e+00> : vector<8x256xf32>
    %892 = tpu.matmul %891, %791, %cst_164 {dimension_numbers = #tpu.dot_dimension_numbers<[1], [0], [0], [1], [0, 0, 1, 1], [], []>} : vector<8x64xf32>, vector<64x256xf32>, vector<8x256xf32> -> vector<8x256xf32>
    %893 = arith.addf %789, %892 : vector<8x256xf32>
    %c8 = arith.constant 8 : index
    %c0_165 = arith.constant 0 : index
    %c0_166 = arith.constant 0 : index
    %894 = vector.load %arg3[%c8, %c0_165, %c0_166] : memref<9x64x256xf32, #tpu.memory_space<vmem>>, vector<1x64x256xf32>
    %895 = vector.shape_cast %894 : vector<1x64x256xf32> to vector<64x256xf32>
    %cst_167 = arith.constant 0.000000e+00 : f32
    %896 = vector.broadcast %cst_167 : f32 to vector<8x64xf32>
    %c8_168 = arith.constant 8 : index
    %897 = memref.load %arg5[%c8_168] : memref<216xf32, #tpu.memory_space<smem>>
    %898 = vector.broadcast %897 : f32 to vector<8x64xf32>
    %899 = arith.mulf %898, %4 : vector<8x64xf32>
    %900 = arith.addf %896, %899 : vector<8x64xf32>
    %c17 = arith.constant 17 : index
    %901 = memref.load %arg5[%c17] : memref<216xf32, #tpu.memory_space<smem>>
    %902 = vector.broadcast %901 : f32 to vector<8x64xf32>
    %903 = arith.mulf %902, %9 : vector<8x64xf32>
    %904 = arith.addf %900, %903 : vector<8x64xf32>
    %c26 = arith.constant 26 : index
    %905 = memref.load %arg5[%c26] : memref<216xf32, #tpu.memory_space<smem>>
    %906 = vector.broadcast %905 : f32 to vector<8x64xf32>
    %907 = arith.mulf %906, %14 : vector<8x64xf32>
    %908 = arith.addf %904, %907 : vector<8x64xf32>
    %c35 = arith.constant 35 : index
    %909 = memref.load %arg5[%c35] : memref<216xf32, #tpu.memory_space<smem>>
    %910 = vector.broadcast %909 : f32 to vector<8x64xf32>
    %911 = arith.mulf %910, %19 : vector<8x64xf32>
    %912 = arith.addf %908, %911 : vector<8x64xf32>
    %c44 = arith.constant 44 : index
    %913 = memref.load %arg5[%c44] : memref<216xf32, #tpu.memory_space<smem>>
    %914 = vector.broadcast %913 : f32 to vector<8x64xf32>
    %915 = arith.mulf %914, %24 : vector<8x64xf32>
    %916 = arith.addf %912, %915 : vector<8x64xf32>
    %c53 = arith.constant 53 : index
    %917 = memref.load %arg5[%c53] : memref<216xf32, #tpu.memory_space<smem>>
    %918 = vector.broadcast %917 : f32 to vector<8x64xf32>
    %919 = arith.mulf %918, %29 : vector<8x64xf32>
    %920 = arith.addf %916, %919 : vector<8x64xf32>
    %c62 = arith.constant 62 : index
    %921 = memref.load %arg5[%c62] : memref<216xf32, #tpu.memory_space<smem>>
    %922 = vector.broadcast %921 : f32 to vector<8x64xf32>
    %923 = arith.mulf %922, %34 : vector<8x64xf32>
    %924 = arith.addf %920, %923 : vector<8x64xf32>
    %c71 = arith.constant 71 : index
    %925 = memref.load %arg5[%c71] : memref<216xf32, #tpu.memory_space<smem>>
    %926 = vector.broadcast %925 : f32 to vector<8x64xf32>
    %927 = arith.mulf %926, %39 : vector<8x64xf32>
    %928 = arith.addf %924, %927 : vector<8x64xf32>
    %c80 = arith.constant 80 : index
    %929 = memref.load %arg5[%c80] : memref<216xf32, #tpu.memory_space<smem>>
    %930 = vector.broadcast %929 : f32 to vector<8x64xf32>
    %931 = arith.mulf %930, %44 : vector<8x64xf32>
    %932 = arith.addf %928, %931 : vector<8x64xf32>
    %c89 = arith.constant 89 : index
    %933 = memref.load %arg5[%c89] : memref<216xf32, #tpu.memory_space<smem>>
    %934 = vector.broadcast %933 : f32 to vector<8x64xf32>
    %935 = arith.mulf %934, %49 : vector<8x64xf32>
    %936 = arith.addf %932, %935 : vector<8x64xf32>
    %c98 = arith.constant 98 : index
    %937 = memref.load %arg5[%c98] : memref<216xf32, #tpu.memory_space<smem>>
    %938 = vector.broadcast %937 : f32 to vector<8x64xf32>
    %939 = arith.mulf %938, %54 : vector<8x64xf32>
    %940 = arith.addf %936, %939 : vector<8x64xf32>
    %c107 = arith.constant 107 : index
    %941 = memref.load %arg5[%c107] : memref<216xf32, #tpu.memory_space<smem>>
    %942 = vector.broadcast %941 : f32 to vector<8x64xf32>
    %943 = arith.mulf %942, %59 : vector<8x64xf32>
    %944 = arith.addf %940, %943 : vector<8x64xf32>
    %cst_169 = arith.constant dense<0.000000e+00> : vector<8x256xf32>
    %945 = tpu.matmul %944, %895, %cst_169 {dimension_numbers = #tpu.dot_dimension_numbers<[1], [0], [0], [1], [0, 0, 1, 1], [], []>} : vector<8x64xf32>, vector<64x256xf32>, vector<8x256xf32> -> vector<8x256xf32>
    %946 = arith.addf %842, %945 : vector<8x256xf32>
    %cst_170 = arith.constant 0.000000e+00 : f32
    %947 = vector.broadcast %cst_170 : f32 to vector<8x64xf32>
    %c116 = arith.constant 116 : index
    %948 = memref.load %arg5[%c116] : memref<216xf32, #tpu.memory_space<smem>>
    %949 = vector.broadcast %948 : f32 to vector<8x64xf32>
    %950 = arith.mulf %949, %4 : vector<8x64xf32>
    %951 = arith.addf %947, %950 : vector<8x64xf32>
    %c125 = arith.constant 125 : index
    %952 = memref.load %arg5[%c125] : memref<216xf32, #tpu.memory_space<smem>>
    %953 = vector.broadcast %952 : f32 to vector<8x64xf32>
    %954 = arith.mulf %953, %9 : vector<8x64xf32>
    %955 = arith.addf %951, %954 : vector<8x64xf32>
    %c134 = arith.constant 134 : index
    %956 = memref.load %arg5[%c134] : memref<216xf32, #tpu.memory_space<smem>>
    %957 = vector.broadcast %956 : f32 to vector<8x64xf32>
    %958 = arith.mulf %957, %14 : vector<8x64xf32>
    %959 = arith.addf %955, %958 : vector<8x64xf32>
    %c143 = arith.constant 143 : index
    %960 = memref.load %arg5[%c143] : memref<216xf32, #tpu.memory_space<smem>>
    %961 = vector.broadcast %960 : f32 to vector<8x64xf32>
    %962 = arith.mulf %961, %19 : vector<8x64xf32>
    %963 = arith.addf %959, %962 : vector<8x64xf32>
    %c152 = arith.constant 152 : index
    %964 = memref.load %arg5[%c152] : memref<216xf32, #tpu.memory_space<smem>>
    %965 = vector.broadcast %964 : f32 to vector<8x64xf32>
    %966 = arith.mulf %965, %24 : vector<8x64xf32>
    %967 = arith.addf %963, %966 : vector<8x64xf32>
    %c161 = arith.constant 161 : index
    %968 = memref.load %arg5[%c161] : memref<216xf32, #tpu.memory_space<smem>>
    %969 = vector.broadcast %968 : f32 to vector<8x64xf32>
    %970 = arith.mulf %969, %29 : vector<8x64xf32>
    %971 = arith.addf %967, %970 : vector<8x64xf32>
    %c170 = arith.constant 170 : index
    %972 = memref.load %arg5[%c170] : memref<216xf32, #tpu.memory_space<smem>>
    %973 = vector.broadcast %972 : f32 to vector<8x64xf32>
    %974 = arith.mulf %973, %34 : vector<8x64xf32>
    %975 = arith.addf %971, %974 : vector<8x64xf32>
    %c179 = arith.constant 179 : index
    %976 = memref.load %arg5[%c179] : memref<216xf32, #tpu.memory_space<smem>>
    %977 = vector.broadcast %976 : f32 to vector<8x64xf32>
    %978 = arith.mulf %977, %39 : vector<8x64xf32>
    %979 = arith.addf %975, %978 : vector<8x64xf32>
    %c188 = arith.constant 188 : index
    %980 = memref.load %arg5[%c188] : memref<216xf32, #tpu.memory_space<smem>>
    %981 = vector.broadcast %980 : f32 to vector<8x64xf32>
    %982 = arith.mulf %981, %44 : vector<8x64xf32>
    %983 = arith.addf %979, %982 : vector<8x64xf32>
    %c197 = arith.constant 197 : index
    %984 = memref.load %arg5[%c197] : memref<216xf32, #tpu.memory_space<smem>>
    %985 = vector.broadcast %984 : f32 to vector<8x64xf32>
    %986 = arith.mulf %985, %49 : vector<8x64xf32>
    %987 = arith.addf %983, %986 : vector<8x64xf32>
    %c206 = arith.constant 206 : index
    %988 = memref.load %arg5[%c206] : memref<216xf32, #tpu.memory_space<smem>>
    %989 = vector.broadcast %988 : f32 to vector<8x64xf32>
    %990 = arith.mulf %989, %54 : vector<8x64xf32>
    %991 = arith.addf %987, %990 : vector<8x64xf32>
    %c215 = arith.constant 215 : index
    %992 = memref.load %arg5[%c215] : memref<216xf32, #tpu.memory_space<smem>>
    %993 = vector.broadcast %992 : f32 to vector<8x64xf32>
    %994 = arith.mulf %993, %59 : vector<8x64xf32>
    %995 = arith.addf %991, %994 : vector<8x64xf32>
    %cst_171 = arith.constant dense<0.000000e+00> : vector<8x256xf32>
    %996 = tpu.matmul %995, %895, %cst_171 {dimension_numbers = #tpu.dot_dimension_numbers<[1], [0], [0], [1], [0, 0, 1, 1], [], []>} : vector<8x64xf32>, vector<64x256xf32>, vector<8x256xf32> -> vector<8x256xf32>
    %997 = arith.addf %893, %996 : vector<8x256xf32>
    %c0_172 = arith.constant 0 : index
    %998 = memref.load %arg6[%c0_172] : memref<2xf32, #tpu.memory_space<smem>>
    %999 = vector.broadcast %998 : f32 to vector<8x256xf32>
    %1000 = arith.addf %946, %999 : vector<8x256xf32>
    %c0_173 = arith.constant 0 : index
    %c0_174 = arith.constant 0 : index
    %c0_175 = arith.constant 0 : index
    %c0_176 = arith.constant 0 : index
    %1001 = vector.load %arg7[%c0_173, %c0_174, %c0_175, %c0_176] : memref<1x2x8x256xf32, #tpu.memory_space<vmem>>, vector<1x1x8x256xf32>
    %1002 = vector.shape_cast %1001 : vector<1x1x8x256xf32> to vector<8x256xf32>
    %1003 = vector.shape_cast %1000 : vector<8x256xf32> to vector<1x1x8x256xf32>
    tpu.vector_store %arg7[%c0_173, %c0_174, %c0_175, %c0_176], %1003 {strides = array<i32>} : memref<1x2x8x256xf32, #tpu.memory_space<vmem>>, vector<1x1x8x256xf32>,
    %c1_177 = arith.constant 1 : index
    %1004 = memref.load %arg6[%c1_177] : memref<2xf32, #tpu.memory_space<smem>>
    %1005 = vector.broadcast %1004 : f32 to vector<8x256xf32>
    %1006 = arith.addf %997, %1005 : vector<8x256xf32>
    %c0_178 = arith.constant 0 : index
    %c1_179 = arith.constant 1 : index
    %c0_180 = arith.constant 0 : index
    %c0_181 = arith.constant 0 : index
    %1007 = vector.load %arg7[%c0_178, %c1_179, %c0_180, %c0_181] : memref<1x2x8x256xf32, #tpu.memory_space<vmem>>, vector<1x1x8x256xf32>
    %1008 = vector.shape_cast %1007 : vector<1x1x8x256xf32> to vector<8x256xf32>
    %1009 = vector.shape_cast %1006 : vector<8x256xf32> to vector<1x1x8x256xf32>
    tpu.vector_store %arg7[%c0_178, %c1_179, %c0_180, %c0_181], %1009 {strides = array<i32>} : memref<1x2x8x256xf32, #tpu.memory_space<vmem>>, vector<1x1x8x256xf32>,
    return
  }
  func.func @transform_0(%arg0: i32, %arg1: i32) -> (i32, i32, i32, i32) {
    %c0_i32 = arith.constant 0 : i32
    %c0_i32_0 = arith.constant 0 : i32
    %c0_i32_1 = arith.constant 0 : i32
    %c0_i32_2 = arith.constant 0 : i32
    return %arg1, %c0_i32, %c0_i32_0, %c0_i32_1 : i32, i32, i32, i32
  }
  func.func @transform_1(%arg0: i32, %arg1: i32) -> (i32, i32, i32) {
    %c0_i32 = arith.constant 0 : i32
    %c0_i32_0 = arith.constant 0 : i32
    %c0_i32_1 = arith.constant 0 : i32
    %c0_i32_2 = arith.constant 0 : i32
    return %c0_i32, %c0_i32_0, %c0_i32_1 : i32, i32, i32
  }
  func.func @transform_2(%arg0: i32, %arg1: i32) -> (i32, i32, i32, i32) {
    %c0_i32 = arith.constant 0 : i32
    %c0_i32_0 = arith.constant 0 : i32
    %c0_i32_1 = arith.constant 0 : i32
    %c0_i32_2 = arith.constant 0 : i32
    return %arg0, %c0_i32, %c0_i32_0, %c0_i32_1 : i32, i32, i32, i32
  }
  func.func @transform_3(%arg0: i32, %arg1: i32) -> i32 {
    %c0_i32 = arith.constant 0 : i32
    %c0_i32_0 = arith.constant 0 : i32
    return %c0_i32 : i32
  }
  func.func @transform_4(%arg0: i32, %arg1: i32) -> i32 {
    %c0_i32 = arith.constant 0 : i32
    %c0_i32_0 = arith.constant 0 : i32
    return %c0_i32 : i32
  }
  func.func @transform_5(%arg0: i32, %arg1: i32) -> (i32, i32, i32, i32) {
    %c0_i32 = arith.constant 0 : i32
    %c0_i32_0 = arith.constant 0 : i32
    %c0_i32_1 = arith.constant 0 : i32
    return %arg0, %c0_i32, %arg1, %c0_i32_0 : i32, i32, i32, i32
  }
}

</mosaic_0001>

<llo_original>
// kernel: tpu_custom_call.1
$region0: #{tpu_custom_call.1}
  #allocation0 [shape = 'u32[]', space=smem, size = 0x4, offset = 0x4, fixed_abs, tag = 'smem constant byte address 0x4 - core index']
  #allocation1 [shape = 'u32[72,128]{1,0:T(1,128)}', space=vmem, size = 0x9000, scoped, tag = 'internal scratch']
  %s0 = inlined_call_operand.hbm [shape: f32[2,3,8,8], index: 0, kind: input, shape index: {}]
  %s1 = inlined_call_operand.hbm [shape: f32[9,64,256], index: 1, kind: input, shape index: {}]
  %s2 = inlined_call_operand.hbm [shape: f32[2,4,8,64], index: 2, kind: input, shape index: {}]
  %s3 = inlined_call_operand.vmem [shape: f32[216], index: 3, kind: input, shape index: {}]
  %s4 = inlined_call_operand.vmem [shape: f32[2], index: 4, kind: input, shape index: {}]
  %s5 = inlined_call_operand.hbm [shape: f32[2,2,16,256], index: 5, kind: output, shape index: {}]
  %s6 = sld [smem:[#allocation0]]
  $region73: #{tpu_custom_call.1} parent=0
    _
  %s8 = ssub.s32 1, %s6
  %s9 = scalar_select 0, %s8, %s6
  $region1: #{tpu_custom_call.1} parent=0
    #allocation2 [shape = 'u8[24576]{0}', space=vmem, size = 0x6000, scoped, tag = 'input window, operand 0']
    #allocation3 [shape = 's32[2]{0}', space=sflag, size = 0x8, scoped, tag = 'scoped memory for tpu_custom_call.1']
    #allocation4 [shape = 's32[2]{0}', space=sflag, size = 0x8, scoped, tag = 'scoped memory for tpu_custom_call.1']
    #allocation5 [shape = 's32[2]{0}', space=sflag, size = 0x8, scoped, tag = 'scoped memory for tpu_custom_call.1']
    #allocation6 [shape = 'u8[589824]{0}', space=vmem, size = 0x90000, scoped, tag = 'input window, operand 1, single buffered']
    #allocation7 [shape = 's32[1]{0}', space=sflag, size = 0x4, scoped, tag = 'scoped memory for tpu_custom_call.1']
    #allocation8 [shape = 'u8[32768]{0}', space=vmem, size = 0x8000, scoped, tag = 'input window, operand 2']
    #allocation9 [shape = 'u8[1024]{0}', space=smem, size = 0x400, scoped, tag = 'input window, operand 3, single buffered']
    #allocation10 [shape = 'u8[512]{0}', space=smem, size = 0x200, scoped, tag = 'input window, operand 4, single buffered']
    #allocation11 [shape = 's32[1]{0}', space=sflag, size = 0x4, scoped, tag = 'scoped memory for tpu_custom_call.1']
    #allocation12 [shape = 'u8[32768]{0}', space=vmem, size = 0x8000, scoped, tag = 'output window, operand 0']
    %10 = vsyncpa [#allocation3], 0
    %s11 = scalar_lea.sflag [#allocation3], 1
    %12 = vsyncpa %s11, 0
    %13 = vsyncpa [#allocation7], 0
    %14 = vsyncpa [#allocation5], 0
    %15 = vsyncpa [#allocation11], 0
    %16 = vsyncpa [#allocation4], 0
    %s17 = scalar_lea.sflag [#allocation4], 1
    %18 = vsyncpa %s17, 0
    loop: start=0, step=1, limit=6
    $region2: #{tpu_custom_call.1} parent=1 // loop_pre_header
      _
    $region3: #{tpu_custom_call.1} parent=1 // loop_header
      %s20 = sphi 0, %s24
      %p21 = scmp.ge.s32.totalorder %s20, 6
      %s27 = sphi 0, %s39
      %s28 = sphi 0, %s35
      %s29 = sphi 0, %s27
      %s30 = sphi 0, %s28
      %s31 = sphi 0, %s29
      %s32 = sphi 0, %s30
      %s42 = sphi 0, %s44
      %s45 = sphi 0, %s42
      %s46 = sphi 0, %s45
      %s62 = sphi 0, %s46
      %s66 = sphi 0, %s66
      %s68 = sphi 0, %s66
      %s69 = sphi 0, %s68
      %s83 = sphi 0, %s69
      %s89 = sphi 0, %s91
      %s92 = sphi 0, %s89
      %s93 = sphi 0, %s92
      %s109 = sphi 0, %s93
      %s113 = sphi 0, %s113
      %s115 = sphi 0, %s113
      %s116 = sphi 0, %s115
      %s130 = sphi 0, %s116
      %s134 = sphi 0, %s134
      %s136 = sphi 0, %s134
      %s137 = sphi 0, %s136
      %s151 = sphi 0, %s137
      %s159 = sphi 0, %s161
      %s162 = sphi 0, %s159
      %s163 = sphi 0, %s162
      %s179 = sphi 0, %s163
    $region4: #{tpu_custom_call.1} parent=1 // loop_header_branch
      %23 = sbr.rel (%p21) target = $region8
    $region5: #{tpu_custom_call.1} parent=1 // loop_body
      %s25 = ssub.s32 %s20, 1
      %s26 = ssub.s32 %s20, 2
      %s33 = sadd.s32 1, %s28
      %p34 = scmp.ge.s32.totalorder %s33, 2
      %s35 = scalar_select %p34, 0, %s33
      %s36 = sadd.s32 1, %s27
      %s37 = scalar_select %p34, %s36, %s27
      %p38 = scmp.ge.s32.totalorder %s37, 2
      %s39 = scalar_select %p38, 0, %s37
      %s40 = ssub.s32 %s28, %s35
      %p41 = scmp.eq.s32.totalorder %s40, 0
      %s43 = sadd.s32 %s42, 1
      %s44 = scalar_select %p41, %s42, %s43
      %p47 = pneg %p41
      %p48 = scmp.eq.s32.totalorder %s20, 3
      %p49 = por %p47, %p48
      %p50 = scmp.ne.s32.totalorder %s42, %s45
      %p51 = scmp.eq.s32.totalorder %s20, 0
      %p52 = por %p50, %p51
      %p53 = scmp.ne.s32.totalorder %s42, %s45
      %p54 = scmp.eq.s32.totalorder %s25, 3
      %p55 = por %p53, %p54
      %p56 = scmp.ne.s32.totalorder %s45, %s46
      %p57 = scmp.eq.s32.totalorder %s25, 0
      %p58 = por %p56, %p57
      %p59 = scmp.ne.s32.totalorder %s45, %s46
      %p60 = scmp.eq.s32.totalorder %s26, 3
      %p61 = por %p59, %p60
      %p63 = scmp.ne.s32.totalorder %s46, %s62
      %p64 = scmp.eq.s32.totalorder %s26, 0
      %p65 = por %p63, %p64
      %s67 = sadd.s32 %s66, 1
      %p70 = scmp.eq.s32.totalorder %s20, 3
      %p71 = scmp.ne.s32.totalorder %s66, %s68
      %p72 = scmp.eq.s32.totalorder %s20, 0
      %p73 = por %p71, %p72
      %p74 = scmp.ne.s32.totalorder %s66, %s68
      %p75 = scmp.eq.s32.totalorder %s25, 3
      %p76 = por %p74, %p75
      %p77 = scmp.ne.s32.totalorder %s68, %s69
      %p78 = scmp.eq.s32.totalorder %s25, 0
      %p79 = por %p77, %p78
      %p80 = scmp.ne.s32.totalorder %s68, %s69
      %p81 = scmp.eq.s32.totalorder %s26, 3
      %p82 = por %p80, %p81
      %p84 = scmp.ne.s32.totalorder %s69, %s83
      %p85 = scmp.eq.s32.totalorder %s26, 0
      %p86 = por %p84, %p85
      %s87 = ssub.s32 %s27, %s39
      %p88 = scmp.eq.s32.totalorder %s87, 0
      %s90 = sadd.s32 %s89, 1
      %s91 = scalar_select %p88, %s89, %s90
      %p94 = pneg %p88
      %p95 = scmp.eq.s32.totalorder %s20, 3
      %p96 = por %p94, %p95
      %p97 = scmp.ne.s32.totalorder %s89, %s92
      %p98 = scmp.eq.s32.totalorder %s20, 0
      %p99 = por %p97, %p98
      %p100 = scmp.ne.s32.totalorder %s89, %s92
      %p101 = scmp.eq.s32.totalorder %s25, 3
      %p102 = por %p100, %p101
      %p103 = scmp.ne.s32.totalorder %s92, %s93
      %p104 = scmp.eq.s32.totalorder %s25, 0
      %p105 = por %p103, %p104
      %p106 = scmp.ne.s32.totalorder %s92, %s93
      %p107 = scmp.eq.s32.totalorder %s26, 3
      %p108 = por %p106, %p107
      %p110 = scmp.ne.s32.totalorder %s93, %s109
      %p111 = scmp.eq.s32.totalorder %s26, 0
      %p112 = por %p110, %p111
      %s114 = sadd.s32 %s113, 1
      %p117 = scmp.eq.s32.totalorder %s20, 3
      %p118 = scmp.ne.s32.totalorder %s113, %s115
      %p119 = scmp.eq.s32.totalorder %s20, 0
      %p120 = por %p118, %p119
      %p121 = scmp.ne.s32.totalorder %s113, %s115
      %p122 = scmp.eq.s32.totalorder %s25, 3
      %p123 = por %p121, %p122
      %p124 = scmp.ne.s32.totalorder %s115, %s116
      %p125 = scmp.eq.s32.totalorder %s25, 0
      %p126 = por %p124, %p125
      %p127 = scmp.ne.s32.totalorder %s115, %s116
      %p128 = scmp.eq.s32.totalorder %s26, 3
      %p129 = por %p127, %p128
      %p131 = scmp.ne.s32.totalorder %s116, %s130
      %p132 = scmp.eq.s32.totalorder %s26, 0
      %p133 = por %p131, %p132
      %s135 = sadd.s32 %s134, 1
      %p138 = scmp.eq.s32.totalorder %s20, 3
      %p139 = scmp.ne.s32.totalorder %s134, %s136
      %p140 = scmp.eq.s32.totalorder %s20, 0
      %p141 = por %p139, %p140
      %p142 = scmp.ne.s32.totalorder %s134, %s136
      %p143 = scmp.eq.s32.totalorder %s25, 3
      %p144 = por %p142, %p143
      %p145 = scmp.ne.s32.totalorder %s136, %s137
      %p146 = scmp.eq.s32.totalorder %s25, 0
      %p147 = por %p145, %p146
      %p148 = scmp.ne.s32.totalorder %s136, %s137
      %p149 = scmp.eq.s32.totalorder %s26, 3
      %p150 = por %p148, %p149
      %p152 = scmp.ne.s32.totalorder %s137, %s151
      %p153 = scmp.eq.s32.totalorder %s26, 0
      %p154 = por %p152, %p153
      %s155 = ssub.s32 %s27, %s39
      %s156 = ssub.s32 %s28, %s35
      %s157 = sor.u32 %s155, %s156
      %p158 = scmp.eq.s32.totalorder %s157, 0
      %s160 = sadd.s32 %s159, 1
      %s161 = scalar_select %p158, %s159, %s160
      %p164 = pneg %p158
      %p165 = scmp.eq.s32.totalorder %s20, 3
      %p166 = por %p164, %p165
      %p167 = scmp.ne.s32.totalorder %s159, %s162
      %p168 = scmp.eq.s32.totalorder %s20, 0
      %p169 = por %p167, %p168
      %p170 = scmp.ne.s32.totalorder %s159, %s162
      %p171 = scmp.eq.s32.totalorder %s25, 3
      %p172 = por %p170, %p171
      %p173 = scmp.ne.s32.totalorder %s162, %s163
      %p174 = scmp.eq.s32.totalorder %s25, 0
      %p175 = por %p173, %p174
      %p176 = scmp.ne.s32.totalorder %s162, %s163
      %p177 = scmp.eq.s32.totalorder %s26, 3
      %p178 = por %p176, %p177
      %p180 = scmp.ne.s32.totalorder %s163, %s179
      %p181 = scmp.eq.s32.totalorder %s26, 0
      %p182 = por %p180, %p181
      %p183 = scmp.le.s32.totalorder 1, %s20
      %p184 = scmp.lt.s32.totalorder %s20, 5
      %p185 = pnand %p183, %p184
      %p186 = pneg %p185
      // Predicated region
      $region9: #{tpu_custom_call.1} parent=5 // pred_check
        _
      $region10: #{tpu_custom_call.1} parent=5 // pred_check_branch
        %188 = sbr.rel (%p185) target = $region12
      $region11: #{tpu_custom_call.1} parent=5 // pred_region
        %s189 = ssub.s32 %s20, 1
        // Predicated region
        $region13: #{tpu_custom_call.1} parent=11 // pred_check
          %p190 = pneg %p79
        $region14: #{tpu_custom_call.1} parent=11 // pred_check_branch
          %192 = sbr.rel (%p190) target = $region16
        $region15: #{tpu_custom_call.1} parent=11 // pred_region
          %194 = vsyncadd [#allocation7], 0
          %s195 = sshll.u32 %s1, 4
          %s196 = int_to_ptr.hbm [resolvable:$true] %s195
          %s197 = sshll.u32 [#allocation6], 4
          %s198 = int_to_ptr.vmem [resolvable:$true] %s197
          %203 = dma.hbm_to_vmem [thread:$0]  %s196, 18432, %s198, [#allocation7], 256, 256, 16
        $region16: #{tpu_custom_call.1} parent=11 // pred_fallthru
          _
        // Predicated region
        $region17: #{tpu_custom_call.1} parent=11 // pred_check
          %p204 = pneg %p126
        $region18: #{tpu_custom_call.1} parent=11 // pred_check_branch
          %206 = sbr.rel (%p204) target = $region20
        $region19: #{tpu_custom_call.1} parent=11 // pred_region
          %208 = vsyncadd [#allocation5], 0
          %s210 = sshll.u32 %s3, 4
          %s211 = int_to_ptr.vmem [resolvable:$true] %s210
          %213 = dma.vmem_to_smem %s211, 32, [#allocation9], [#allocation5]
        $region20: #{tpu_custom_call.1} parent=11 // pred_fallthru
          _
        // Predicated region
        $region21: #{tpu_custom_call.1} parent=11 // pred_check
          %p214 = pneg %p147
        $region22: #{tpu_custom_call.1} parent=11 // pred_check_branch
          %216 = sbr.rel (%p214) target = $region24
        $region23: #{tpu_custom_call.1} parent=11 // pred_region
          %218 = vsyncadd [#allocation11], 0
          %s220 = sshll.u32 %s4, 4
          %s221 = int_to_ptr.vmem [resolvable:$true] %s220
          %223 = dma.vmem_to_smem %s221, 16, [#allocation10], [#allocation11]
        $region24: #{tpu_custom_call.1} parent=11 // pred_fallthru
          _
      $region12: #{tpu_custom_call.1} parent=5 // pred_fallthru
        _
      %p224 = scmp.lt.s32.totalorder %s20, 4
      // Predicated region
      $region25: #{tpu_custom_call.1} parent=5 // pred_check
        %p225 = pneg %p224
      $region26: #{tpu_custom_call.1} parent=5 // pred_check_branch
        %227 = sbr.rel (%p225) target = $region28
      $region27: #{tpu_custom_call.1} parent=5 // pred_region
        // Predicated region
        $region29: #{tpu_custom_call.1} parent=27 // pred_check
          %p228 = pneg %p52
        $region30: #{tpu_custom_call.1} parent=27 // pred_check_branch
          %230 = sbr.rel (%p228) target = $region32
        $region31: #{tpu_custom_call.1} parent=27 // pred_region
          %s231 = sand.u32 %s20, 1
          %s232 = scalar_lea.sflag [#allocation3], %s231
          %s233 = sand.u32 %s42, 1
          %s234 = smul.addr %s233, 24
          %s235 = scalar_lea.vmem [#allocation2], %s234
          %237 = vsyncadd %s232, 0
          %s238 = smul.addr %s28, 3
          %s239 = smul.addr %s238, 8
          %s240 = scalar_lea.hbm %s0, %s239
          %s241 = sshll.u32 %s240, 4
          %s242 = int_to_ptr.hbm [resolvable:$true] %s241
          %s243 = sshll.u32 %s235, 4
          %s244 = int_to_ptr.vmem [resolvable:$true] %s243
          %249 = dma.hbm_to_vmem [thread:$0]  %s242, 384, %s244, %s232, 128, 128, 8
        $region32: #{tpu_custom_call.1} parent=27 // pred_fallthru
          _
        // Predicated region
        $region33: #{tpu_custom_call.1} parent=27 // pred_check
          %p250 = pneg %p99
        $region34: #{tpu_custom_call.1} parent=27 // pred_check_branch
          %252 = sbr.rel (%p250) target = $region36
        $region35: #{tpu_custom_call.1} parent=27 // pred_region
          %s253 = sand.u32 %s20, 1
          %s254 = scalar_lea.sflag [#allocation3], %s253
          %s255 = sand.u32 %s89, 1
          %s256 = smul.addr %s255, 32
          %s257 = scalar_lea.vmem [#allocation8], %s256
          %259 = vsyncadd %s254, 0
          %s260 = smul.addr %s27, 4
          %s261 = smul.addr %s260, 8
          %s262 = scalar_lea.hbm %s2, %s261
          %s263 = sshll.u32 %s262, 4
          %s264 = int_to_ptr.hbm [resolvable:$true] %s263
          %s265 = sshll.u32 %s257, 4
          %s266 = int_to_ptr.vmem [resolvable:$true] %s265
          %271 = dma.hbm_to_vmem [thread:$0]  %s264, 512, %s266, %s254, 128, 128, 8
        $region36: #{tpu_custom_call.1} parent=27 // pred_fallthru
          _
      $region28: #{tpu_custom_call.1} parent=5 // pred_fallthru
        _
      %p272 = scmp.le.s32.totalorder 1, %s20
      %p273 = scmp.lt.s32.totalorder %s20, 5
      %p274 = pnand %p272, %p273
      %p275 = pneg %p274
      // Predicated region
      $region37: #{tpu_custom_call.1} parent=5 // pred_check
        _
      $region38: #{tpu_custom_call.1} parent=5 // pred_check_branch
        %277 = sbr.rel (%p274) target = $region40
      $region39: #{tpu_custom_call.1} parent=5 // pred_region
        %s278 = ssub.s32 %s20, 1
        %s279 = sand.u32 %s25, 1
        %s280 = scalar_lea.sflag [#allocation3], %s279
        %s281 = sand.u32 %s45, 1
        %s282 = smul.addr %s281, 24
        %s283 = scalar_lea.vmem [#allocation2], %s282
        // Predicated region
        $region41: #{tpu_custom_call.1} parent=39 // pred_check
          %p284 = pneg %p58
        $region42: #{tpu_custom_call.1} parent=39 // pred_check_branch
          %286 = sbr.rel (%p284) target = $region44
        $region43: #{tpu_custom_call.1} parent=39 // pred_region
          %288 = dma.done %s280, 384
        $region44: #{tpu_custom_call.1} parent=39 // pred_fallthru
          _
        // Predicated region
        $region45: #{tpu_custom_call.1} parent=39 // pred_check
          %p289 = pneg %p79
        $region46: #{tpu_custom_call.1} parent=39 // pred_check_branch
          %291 = sbr.rel (%p289) target = $region48
        $region47: #{tpu_custom_call.1} parent=39 // pred_region
          %293 = dma.done [#allocation7], 18432
        $region48: #{tpu_custom_call.1} parent=39 // pred_fallthru
          _
        %s294 = sand.u32 %s25, 1
        %s295 = scalar_lea.sflag [#allocation3], %s294
        %s296 = sand.u32 %s92, 1
        %s297 = smul.addr %s296, 32
        %s298 = scalar_lea.vmem [#allocation8], %s297
        // Predicated region
        $region49: #{tpu_custom_call.1} parent=39 // pred_check
          %p299 = pneg %p105
        $region50: #{tpu_custom_call.1} parent=39 // pred_check_branch
          %301 = sbr.rel (%p299) target = $region52
        $region51: #{tpu_custom_call.1} parent=39 // pred_region
          %303 = dma.done %s295, 512
        $region52: #{tpu_custom_call.1} parent=39 // pred_fallthru
          _
        // Predicated region
        $region53: #{tpu_custom_call.1} parent=39 // pred_check
          %p304 = pneg %p126
        $region54: #{tpu_custom_call.1} parent=39 // pred_check_branch
          %306 = sbr.rel (%p304) target = $region56
        $region55: #{tpu_custom_call.1} parent=39 // pred_region
          %308 = dma.done [#allocation5], 32
        $region56: #{tpu_custom_call.1} parent=39 // pred_fallthru
          _
        // Predicated region
        $region57: #{tpu_custom_call.1} parent=39 // pred_check
          %p309 = pneg %p147
        $region58: #{tpu_custom_call.1} parent=39 // pred_check_branch
          %311 = sbr.rel (%p309) target = $region60
        $region59: #{tpu_custom_call.1} parent=39 // pred_region
          %313 = dma.done [#allocation11], 16
        $region60: #{tpu_custom_call.1} parent=39 // pred_fallthru
          _
        %314 = sfence
        %s315 = sand.u32 %s25, 1
        %s316 = scalar_lea.sflag [#allocation3], %s315
        %s317 = sand.u32 %s45, 1
        %s318 = smul.addr %s317, 24
        %s319 = scalar_lea.vmem [#allocation2], %s318
        %p320 = pneg %p58
        %p321 = pneg %p55
        %p322 = pneg %p79
        %p323 = pneg %p76
        %s324 = sand.u32 %s25, 1
        %s325 = scalar_lea.sflag [#allocation3], %s324
        %s326 = sand.u32 %s92, 1
        %s327 = smul.addr %s326, 32
        %s328 = scalar_lea.vmem [#allocation8], %s327
        %p329 = pneg %p105
        %p330 = pneg %p102
        %p331 = pneg %p126
        %p332 = pneg %p123
        %p333 = pneg %p147
        %p334 = pneg %p144
        %p335 = pneg %p175
        %p336 = pneg %p172
        %s337 = sand.u32 %s162, 1
        %s338 = scalar_lea.sflag [#allocation4], %s337
        %s339 = sand.u32 %s162, 1
        %s340 = smul.addr %s339, 32
        %s341 = scalar_lea.vmem [#allocation12], %s340
        %v342 = vld [vmem:[%s283] sm:$0xff]
        %v343 = vld [vmem:[%s298] sm:$0xff]
        %vm344 = vcmask 64512
        %v346 = vsel %vm344, %v342, 0
        %348 = vmatpush.msra.mxu0 0.0
        %349 = vmatpush.msra.mxu0 0.0
        %350 = vmatpush.msra.mxu0 0.0
        %351 = vmatpush.msra.mxu0 0.0
        %352 = vmatpush.msra.mxu0 0.0
        %353 = vmatpush.msra.mxu0 0.0
        %354 = vmatpush.msra.mxu0 0.0
        %355 = vmatpush.msra.mxu0 0.0
        %356 = vmatpush.msra.mxu0 0.0
        %357 = vmatpush.msra.mxu0 0.0
        %358 = vmatpush.msra.mxu0 0.0
        %359 = vmatpush.msra.mxu0 0.0
        %360 = vmatpush.msra.mxu0 0.0
        %361 = vmatpush.msra.mxu0 0.0
        %362 = vmatpush.msra.mxu0 0.0
        %363 = vmatpush.msra.mxu0 %v343
        %364 = vmatmul.f32.gmra.mxu0 %v346
        %v365 = vpop.f32.mrf.mxu0
        %v366 = vadd.f32 0.0, %v365
        %367 = vdwg.mxu0
        %s368 = scalar_lea.vmem %s283, 8 [#allocation2]
        %v369 = vld [vmem:[%s368] sm:$0xff]
        %v371 = vsel %vm344, %v369, 0
        %373 = vmatpush.msra.mxu0 0.0
        %374 = vmatpush.msra.mxu0 0.0
        %375 = vmatpush.msra.mxu0 0.0
        %376 = vmatpush.msra.mxu0 0.0
        %377 = vmatpush.msra.mxu0 0.0
        %378 = vmatpush.msra.mxu0 0.0
        %379 = vmatpush.msra.mxu0 0.0
        %380 = vmatpush.msra.mxu0 0.0
        %381 = vmatpush.msra.mxu0 0.0
        %382 = vmatpush.msra.mxu0 0.0
        %383 = vmatpush.msra.mxu0 0.0
        %384 = vmatpush.msra.mxu0 0.0
        %385 = vmatpush.msra.mxu0 0.0
        %386 = vmatpush.msra.mxu0 0.0
        %387 = vmatpush.msra.mxu0 0.0
        %388 = vmatpush.msra.mxu0 %v343
        %389 = vmatmul.f32.gmra.mxu0 %v371
        %v390 = vpop.f32.mrf.mxu0
        %v391 = vadd.f32 0.0, %v390
        %392 = vdwg.mxu0
        %s393 = scalar_lea.vmem %s283, 16 [#allocation2]
        %v394 = vld [vmem:[%s393] sm:$0xff]
        %v396 = vsel %vm344, %v394, 0
        %398 = vmatpush.msra.mxu0 0.0
        %399 = vmatpush.msra.mxu0 0.0
        %400 = vmatpush.msra.mxu0 0.0
        %401 = vmatpush.msra.mxu0 0.0
        %402 = vmatpush.msra.mxu0 0.0
        %403 = vmatpush.msra.mxu0 0.0
        %404 = vmatpush.msra.mxu0 0.0
        %405 = vmatpush.msra.mxu0 0.0
        %406 = vmatpush.msra.mxu0 0.0
        %407 = vmatpush.msra.mxu0 0.0
        %408 = vmatpush.msra.mxu0 0.0
        %409 = vmatpush.msra.mxu0 0.0
        %410 = vmatpush.msra.mxu0 0.0
        %411 = vmatpush.msra.mxu0 0.0
        %412 = vmatpush.msra.mxu0 0.0
        %413 = vmatpush.msra.mxu0 %v343
        %414 = vmatmul.f32.gmra.mxu0 %v396
        %v415 = vpop.f32.mrf.mxu0
        %v416 = vadd.f32 0.0, %v415
        %417 = vdwg.mxu0
        %s418 = scalar_lea.vmem %s298, 8 [#allocation8]
        %v419 = vld [vmem:[%s418] sm:$0xff]
        %420 = vmatpush.msra.mxu0 0.0
        %421 = vmatpush.msra.mxu0 0.0
        %422 = vmatpush.msra.mxu0 0.0
        %423 = vmatpush.msra.mxu0 0.0
        %424 = vmatpush.msra.mxu0 0.0
        %425 = vmatpush.msra.mxu0 0.0
        %426 = vmatpush.msra.mxu0 0.0
        %427 = vmatpush.msra.mxu0 0.0
        %428 = vmatpush.msra.mxu0 0.0
        %429 = vmatpush.msra.mxu0 0.0
        %430 = vmatpush.msra.mxu0 0.0
        %431 = vmatpush.msra.mxu0 0.0
        %432 = vmatpush.msra.mxu0 0.0
        %433 = vmatpush.msra.mxu0 0.0
        %434 = vmatpush.msra.mxu0 0.0
        %435 = vmatpush.msra.mxu0 %v419
        %436 = vmatmul.f32.gmra.mxu0 %v346
        %v437 = vpop.f32.mrf.mxu0
        %v438 = vadd.f32 0.0, %v437
        %439 = vdwg.mxu0
        %440 = vmatpush.msra.mxu0 0.0
        %441 = vmatpush.msra.mxu0 0.0
        %442 = vmatpush.msra.mxu0 0.0
        %443 = vmatpush.msra.mxu0 0.0
        %444 = vmatpush.msra.mxu0 0.0
        %445 = vmatpush.msra.mxu0 0.0
        %446 = vmatpush.msra.mxu0 0.0
        %447 = vmatpush.msra.mxu0 0.0
        %448 = vmatpush.msra.mxu0 0.0
        %449 = vmatpush.msra.mxu0 0.0
        %450 = vmatpush.msra.mxu0 0.0
        %451 = vmatpush.msra.mxu0 0.0
        %452 = vmatpush.msra.mxu0 0.0
        %453 = vmatpush.msra.mxu0 0.0
        %454 = vmatpush.msra.mxu0 0.0
        %455 = vmatpush.msra.mxu0 %v419
        %456 = vmatmul.f32.gmra.mxu0 %v371
        %v457 = vpop.f32.mrf.mxu0
        %v458 = vadd.f32 0.0, %v457
        %459 = vdwg.mxu0
        %460 = vmatpush.msra.mxu0 0.0
        %461 = vmatpush.msra.mxu0 0.0
        %462 = vmatpush.msra.mxu0 0.0
        %463 = vmatpush.msra.mxu0 0.0
        %464 = vmatpush.msra.mxu0 0.0
        %465 = vmatpush.msra.mxu0 0.0
        %466 = vmatpush.msra.mxu0 0.0
        %467 = vmatpush.msra.mxu0 0.0
        %468 = vmatpush.msra.mxu0 0.0
        %469 = vmatpush.msra.mxu0 0.0
        %470 = vmatpush.msra.mxu0 0.0
        %471 = vmatpush.msra.mxu0 0.0
        %472 = vmatpush.msra.mxu0 0.0
        %473 = vmatpush.msra.mxu0 0.0
        %474 = vmatpush.msra.mxu0 0.0
        %475 = vmatpush.msra.mxu0 %v419
        %476 = vmatmul.f32.gmra.mxu0 %v396
        %v477 = vpop.f32.mrf.mxu0
        %v478 = vadd.f32 0.0, %v477
        %479 = vdwg.mxu0
        %s480 = scalar_lea.vmem %s298, 16 [#allocation8]
        %v481 = vld [vmem:[%s480] sm:$0xff]
        %482 = vmatpush.msra.mxu0 0.0
        %483 = vmatpush.msra.mxu0 0.0
        %484 = vmatpush.msra.mxu0 0.0
        %485 = vmatpush.msra.mxu0 0.0
        %486 = vmatpush.msra.mxu0 0.0
        %487 = vmatpush.msra.mxu0 0.0
        %488 = vmatpush.msra.mxu0 0.0
        %489 = vmatpush.msra.mxu0 0.0
        %490 = vmatpush.msra.mxu0 0.0
        %491 = vmatpush.msra.mxu0 0.0
        %492 = vmatpush.msra.mxu0 0.0
        %493 = vmatpush.msra.mxu0 0.0
        %494 = vmatpush.msra.mxu0 0.0
        %495 = vmatpush.msra.mxu0 0.0
        %496 = vmatpush.msra.mxu0 0.0
        %497 = vmatpush.msra.mxu0 %v481
        %498 = vmatmul.f32.gmra.mxu0 %v346
        %v499 = vpop.f32.mrf.mxu0
        %v500 = vadd.f32 0.0, %v499
        %501 = vdwg.mxu0
        %502 = vmatpush.msra.mxu0 0.0
        %503 = vmatpush.msra.mxu0 0.0
        %504 = vmatpush.msra.mxu0 0.0
        %505 = vmatpush.msra.mxu0 0.0
        %506 = vmatpush.msra.mxu0 0.0
        %507 = vmatpush.msra.mxu0 0.0
        %508 = vmatpush.msra.mxu0 0.0
        %509 = vmatpush.msra.mxu0 0.0
        %510 = vmatpush.msra.mxu0 0.0
        %511 = vmatpush.msra.mxu0 0.0
        %512 = vmatpush.msra.mxu0 0.0
        %513 = vmatpush.msra.mxu0 0.0
        %514 = vmatpush.msra.mxu0 0.0
        %515 = vmatpush.msra.mxu0 0.0
        %516 = vmatpush.msra.mxu0 0.0
        %517 = vmatpush.msra.mxu0 %v481
        %518 = vmatmul.f32.gmra.mxu0 %v371
        %v519 = vpop.f32.mrf.mxu0
        %v520 = vadd.f32 0.0, %v519
        %521 = vdwg.mxu0
        %522 = vmatpush.msra.mxu0 0.0
        %523 = vmatpush.msra.mxu0 0.0
        %524 = vmatpush.msra.mxu0 0.0
        %525 = vmatpush.msra.mxu0 0.0
        %526 = vmatpush.msra.mxu0 0.0
        %527 = vmatpush.msra.mxu0 0.0
        %528 = vmatpush.msra.mxu0 0.0
        %529 = vmatpush.msra.mxu0 0.0
        %530 = vmatpush.msra.mxu0 0.0
        %531 = vmatpush.msra.mxu0 0.0
        %532 = vmatpush.msra.mxu0 0.0
        %533 = vmatpush.msra.mxu0 0.0
        %534 = vmatpush.msra.mxu0 0.0
        %535 = vmatpush.msra.mxu0 0.0
        %536 = vmatpush.msra.mxu0 0.0
        %537 = vmatpush.msra.mxu0 %v481
        %538 = vmatmul.f32.gmra.mxu0 %v396
        %v539 = vpop.f32.mrf.mxu0
        %v540 = vadd.f32 0.0, %v539
        %541 = vdwg.mxu0
        %s542 = scalar_lea.vmem %s298, 24 [#allocation8]
        %v543 = vld [vmem:[%s542] sm:$0xff]
        %544 = vmatpush.msra.mxu0 0.0
        %545 = vmatpush.msra.mxu0 0.0
        %546 = vmatpush.msra.mxu0 0.0
        %547 = vmatpush.msra.mxu0 0.0
        %548 = vmatpush.msra.mxu0 0.0
        %549 = vmatpush.msra.mxu0 0.0
        %550 = vmatpush.msra.mxu0 0.0
        %551 = vmatpush.msra.mxu0 0.0
        %552 = vmatpush.msra.mxu0 0.0
        %553 = vmatpush.msra.mxu0 0.0
        %554 = vmatpush.msra.mxu0 0.0
        %555 = vmatpush.msra.mxu0 0.0
        %556 = vmatpush.msra.mxu0 0.0
        %557 = vmatpush.msra.mxu0 0.0
        %558 = vmatpush.msra.mxu0 0.0
        %559 = vmatpush.msra.mxu0 %v543
        %560 = vmatmul.f32.gmra.mxu0 %v346
        %v561 = vpop.f32.mrf.mxu0
        %v562 = vadd.f32 0.0, %v561
        %563 = vdwg.mxu0
        %564 = vmatpush.msra.mxu0 0.0
        %565 = vmatpush.msra.mxu0 0.0
        %566 = vmatpush.msra.mxu0 0.0
        %567 = vmatpush.msra.mxu0 0.0
        %568 = vmatpush.msra.mxu0 0.0
        %569 = vmatpush.msra.mxu0 0.0
        %570 = vmatpush.msra.mxu0 0.0
        %571 = vmatpush.msra.mxu0 0.0
        %572 = vmatpush.msra.mxu0 0.0
        %573 = vmatpush.msra.mxu0 0.0
        %574 = vmatpush.msra.mxu0 0.0
        %575 = vmatpush.msra.mxu0 0.0
        %576 = vmatpush.msra.mxu0 0.0
        %577 = vmatpush.msra.mxu0 0.0
        %578 = vmatpush.msra.mxu0 0.0
        %579 = vmatpush.msra.mxu0 %v543
        %580 = vmatmul.f32.gmra.mxu0 %v371
        %v581 = vpop.f32.mrf.mxu0
        %v582 = vadd.f32 0.0, %v581
        %583 = vdwg.mxu0
        %584 = vmatpush.msra.mxu0 0.0
        %585 = vmatpush.msra.mxu0 0.0
        %586 = vmatpush.msra.mxu0 0.0
        %587 = vmatpush.msra.mxu0 0.0
        %588 = vmatpush.msra.mxu0 0.0
        %589 = vmatpush.msra.mxu0 0.0
        %590 = vmatpush.msra.mxu0 0.0
        %591 = vmatpush.msra.mxu0 0.0
        %592 = vmatpush.msra.mxu0 0.0
        %593 = vmatpush.msra.mxu0 0.0
        %594 = vmatpush.msra.mxu0 0.0
        %595 = vmatpush.msra.mxu0 0.0
        %596 = vmatpush.msra.mxu0 0.0
        %597 = vmatpush.msra.mxu0 0.0
        %598 = vmatpush.msra.mxu0 0.0
        %599 = vmatpush.msra.mxu0 %v543
        %600 = vmatmul.f32.gmra.mxu0 %v396
        %v601 = vpop.f32.mrf.mxu0
        %v602 = vadd.f32 0.0, %v601
        %603 = vdwg.mxu0
        %v604 = vld [vmem:[#allocation6] sm:$0xff]
        %v605 = vld [vmem:[#allocation6 + $0x8] sm:$0xff]
        %v606 = vld [vmem:[#allocation6 + $0x10] sm:$0xff]
        %v607 = vld [vmem:[#allocation6 + $0x18] sm:$0xff]
        %v608 = vld [vmem:[#allocation6 + $0x20] sm:$0xff]
        %v609 = vld [vmem:[#allocation6 + $0x28] sm:$0xff]
        %v610 = vld [vmem:[#allocation6 + $0x30] sm:$0xff]
        %v611 = vld [vmem:[#allocation6 + $0x38] sm:$0xff]
        %v612 = vld [vmem:[#allocation6 + $0x40] sm:$0xff]
        %v613 = vld [vmem:[#allocation6 + $0x48] sm:$0xff]
        %v614 = vld [vmem:[#allocation6 + $0x50] sm:$0xff]
        %v615 = vld [vmem:[#allocation6 + $0x58] sm:$0xff]
        %v616 = vld [vmem:[#allocation6 + $0x60] sm:$0xff]
        %v617 = vld [vmem:[#allocation6 + $0x68] sm:$0xff]
        %v618 = vld [vmem:[#allocation6 + $0x70] sm:$0xff]
        %v619 = vld [vmem:[#allocation6 + $0x78] sm:$0xff]
        %s620 = sld [smem:[#allocation9]]
        %v621 = vstv %s620
        %v622 = vmul.f32 %v621, %v366
        %v623 = vadd.f32 %v622, 0.0
        %s624 = sld [smem:[#allocation9 + $0x9]]
        %v625 = vstv %s624
        %v626 = vmul.f32 %v625, %v391
        %v627 = vadd.f32 %v623, %v626
        %s628 = sld [smem:[#allocation9 + $0x12]]
        %v629 = vstv %s628
        %v630 = vmul.f32 %v629, %v416
        %v631 = vadd.f32 %v627, %v630
        %s632 = sld [smem:[#allocation9 + $0x1b]]
        %v633 = vstv %s632
        %v634 = vmul.f32 %v633, %v438
        %v635 = vadd.f32 %v631, %v634
        %s636 = sld [smem:[#allocation9 + $0x24]]
        %v637 = vstv %s636
        %v638 = vmul.f32 %v637, %v458
        %v639 = vadd.f32 %v635, %v638
        %s640 = sld [smem:[#allocation9 + $0x2d]]
        %v641 = vstv %s640
        %v642 = vmul.f32 %v641, %v478
        %v643 = vadd.f32 %v639, %v642
        %s644 = sld [smem:[#allocation9 + $0x36]]
        %v645 = vstv %s644
        %v646 = vmul.f32 %v645, %v500
        %v647 = vadd.f32 %v643, %v646
        %s648 = sld [smem:[#allocation9 + $0x3f]]
        %v649 = vstv %s648
        %v650 = vmul.f32 %v649, %v520
        %v651 = vadd.f32 %v647, %v650
        %s652 = sld [smem:[#allocation9 + $0x48]]
        %v653 = vstv %s652
        %v654 = vmul.f32 %v653, %v540
        %v655 = vadd.f32 %v651, %v654
        %s656 = sld [smem:[#allocation9 + $0x51]]
        %v657 = vstv %s656
        %v658 = vmul.f32 %v657, %v562
        %v659 = vadd.f32 %v655, %v658
        %s660 = sld [smem:[#allocation9 + $0x5a]]
        %v661 = vstv %s660
        %v662 = vmul.f32 %v661, %v582
        %v663 = vadd.f32 %v659, %v662
        %s664 = sld [smem:[#allocation9 + $0x63]]
        %v665 = vstv %s664
        %v666 = vmul.f32 %v665, %v602
        %v667 = vadd.f32 %v663, %v666
        %s668 = sld [smem:[#allocation9 + $0x6c]]
        %v669 = vstv %s668
        %v670 = vmul.f32 %v669, %v366
        %v671 = vadd.f32 %v670, 0.0
        %s672 = sld [smem:[#allocation9 + $0x75]]
        %v673 = vstv %s672
        %v674 = vmul.f32 %v673, %v391
        %v675 = vadd.f32 %v671, %v674
        %s676 = sld [smem:[#allocation9 + $0x7e]]
        %v677 = vstv %s676
        %v678 = vmul.f32 %v677, %v416
        %v679 = vadd.f32 %v675, %v678
        %s680 = sld [smem:[#allocation9 + $0x87]]
        %v681 = vstv %s680
        %v682 = vmul.f32 %v681, %v438
        %v683 = vadd.f32 %v679, %v682
        %s684 = sld [smem:[#allocation9 + $0x90]]
        %v685 = vstv %s684
        %v686 = vmul.f32 %v685, %v458
        %v687 = vadd.f32 %v683, %v686
        %s688 = sld [smem:[#allocation9 + $0x99]]
        %v689 = vstv %s688
        %v690 = vmul.f32 %v689, %v478
        %v691 = vadd.f32 %v687, %v690
        %s692 = sld [smem:[#allocation9 + $0xa2]]
        %v693 = vstv %s692
        %v694 = vmul.f32 %v693, %v500
        %v695 = vadd.f32 %v691, %v694
        %s696 = sld [smem:[#allocation9 + $0xab]]
        %v697 = vstv %s696
        %v698 = vmul.f32 %v697, %v520
        %v699 = vadd.f32 %v695, %v698
        %s700 = sld [smem:[#allocation9 + $0xb4]]
        %v701 = vstv %s700
        %v702 = vmul.f32 %v701, %v540
        %v703 = vadd.f32 %v699, %v702
        %s704 = sld [smem:[#allocation9 + $0xbd]]
        %v705 = vstv %s704
        %v706 = vmul.f32 %v705, %v562
        %v707 = vadd.f32 %v703, %v706
        %s708 = sld [smem:[#allocation9 + $0xc6]]
        %v709 = vstv %s708
        %v710 = vmul.f32 %v709, %v582
        %v711 = vadd.f32 %v707, %v710
        %s712 = sld [smem:[#allocation9 + $0xcf]]
        %v713 = vstv %s712
        %v714 = vmul.f32 %v713, %v602
        %v715 = vadd.f32 %v711, %v714
        %s716 = scalar_lea.vmem [#allocation6], 128
        %v717 = vld [vmem:[%s716] sm:$0xff]
        %v718 = vld [vmem:[%s716 + $0x8] sm:$0xff]
        %v719 = vld [vmem:[%s716 + $0x10] sm:$0xff]
        %v720 = vld [vmem:[%s716 + $0x18] sm:$0xff]
        %v721 = vld [vmem:[%s716 + $0x20] sm:$0xff]
        %v722 = vld [vmem:[%s716 + $0x28] sm:$0xff]
        %v723 = vld [vmem:[%s716 + $0x30] sm:$0xff]
        %v724 = vld [vmem:[%s716 + $0x38] sm:$0xff]
        %v725 = vld [vmem:[%s716 + $0x40] sm:$0xff]
        %v726 = vld [vmem:[%s716 + $0x48] sm:$0xff]
        %v727 = vld [vmem:[%s716 + $0x50] sm:$0xff]
        %v728 = vld [vmem:[%s716 + $0x58] sm:$0xff]
        %v729 = vld [vmem:[%s716 + $0x60] sm:$0xff]
        %v730 = vld [vmem:[%s716 + $0x68] sm:$0xff]
        %v731 = vld [vmem:[%s716 + $0x70] sm:$0xff]
        %v732 = vld [vmem:[%s716 + $0x78] sm:$0xff]
        %s733 = sld [smem:[#allocation9 + $0x1]]
        %v734 = vstv %s733
        %v735 = vmul.f32 %v734, %v366
        %v736 = vadd.f32 %v735, 0.0
        %s737 = sld [smem:[#allocation9 + $0xa]]
        %v738 = vstv %s737
        %v739 = vmul.f32 %v738, %v391
        %v740 = vadd.f32 %v736, %v739
        %s741 = sld [smem:[#allocation9 + $0x13]]
        %v742 = vstv %s741
        %v743 = vmul.f32 %v742, %v416
        %v744 = vadd.f32 %v740, %v743
        %s745 = sld [smem:[#allocation9 + $0x1c]]
        %v746 = vstv %s745
        %v747 = vmul.f32 %v746, %v438
        %v748 = vadd.f32 %v744, %v747
        %s749 = sld [smem:[#allocation9 + $0x25]]
        %v750 = vstv %s749
        %v751 = vmul.f32 %v750, %v458
        %v752 = vadd.f32 %v748, %v751
        %s753 = sld [smem:[#allocation9 + $0x2e]]
        %v754 = vstv %s753
        %v755 = vmul.f32 %v754, %v478
        %v756 = vadd.f32 %v752, %v755
        %s757 = sld [smem:[#allocation9 + $0x37]]
        %v758 = vstv %s757
        %v759 = vmul.f32 %v758, %v500
        %v760 = vadd.f32 %v756, %v759
        %s761 = sld [smem:[#allocation9 + $0x40]]
        %v762 = vstv %s761
        %v763 = vmul.f32 %v762, %v520
        %v764 = vadd.f32 %v760, %v763
        %s765 = sld [smem:[#allocation9 + $0x49]]
        %v766 = vstv %s765
        %v767 = vmul.f32 %v766, %v540
        %v768 = vadd.f32 %v764, %v767
        %s769 = sld [smem:[#allocation9 + $0x52]]
        %v770 = vstv %s769
        %v771 = vmul.f32 %v770, %v562
        %v772 = vadd.f32 %v768, %v771
        %s773 = sld [smem:[#allocation9 + $0x5b]]
        %v774 = vstv %s773
        %v775 = vmul.f32 %v774, %v582
        %v776 = vadd.f32 %v772, %v775
        %s777 = sld [smem:[#allocation9 + $0x64]]
        %v778 = vstv %s777
        %v779 = vmul.f32 %v778, %v602
        %v780 = vadd.f32 %v776, %v779
        %vm781 = vcmask 523264
        %v783 = vsel %vm781, %v780, 0
        %785 = vmatpush.msra.mxu0 0.0
        %786 = vmatpush.msra.mxu0 0.0
        %787 = vmatpush.msra.mxu0 0.0
        %788 = vmatpush.msra.mxu0 0.0
        %789 = vmatpush.msra.mxu0 0.0
        %790 = vmatpush.msra.mxu0 0.0
        %791 = vmatpush.msra.mxu0 0.0
        %792 = vmatpush.msra.mxu0 0.0
        %793 = vmatpush.msra.mxu0 %v731
        %794 = vmatpush.msra.mxu0 %v729
        %795 = vmatpush.msra.mxu0 %v727
        %796 = vmatpush.msra.mxu0 %v725
        %797 = vmatpush.msra.mxu0 %v723
        %798 = vmatpush.msra.mxu0 %v721
        %799 = vmatpush.msra.mxu0 %v719
        %800 = vmatpush.msra.mxu0 %v717
        %801 = vmatmul.f32.gmra.mxu0 %v783
        %v802 = vpop.f32.mrf.mxu0
        %v803 = vadd.f32 0.0, %v802
        %804 = vdwg.mxu0
        %805 = vmatpush.msra.mxu0 0.0
        %806 = vmatpush.msra.mxu0 0.0
        %807 = vmatpush.msra.mxu0 0.0
        %808 = vmatpush.msra.mxu0 0.0
        %809 = vmatpush.msra.mxu0 0.0
        %810 = vmatpush.msra.mxu0 0.0
        %811 = vmatpush.msra.mxu0 0.0
        %812 = vmatpush.msra.mxu0 0.0
        %813 = vmatpush.msra.mxu0 %v732
        %814 = vmatpush.msra.mxu0 %v730
        %815 = vmatpush.msra.mxu0 %v728
        %816 = vmatpush.msra.mxu0 %v726
        %817 = vmatpush.msra.mxu0 %v724
        %818 = vmatpush.msra.mxu0 %v722
        %819 = vmatpush.msra.mxu0 %v720
        %820 = vmatpush.msra.mxu0 %v718
        %821 = vmatmul.f32.gmra.mxu0 %v783
        %v822 = vpop.f32.mrf.mxu0
        %v823 = vadd.f32 0.0, %v822
        %824 = vdwg.mxu0
        %v826 = vsel %vm781, %v667, 0
        %828 = vmatpush.msra.mxu0 0.0
        %829 = vmatpush.msra.mxu0 0.0
        %830 = vmatpush.msra.mxu0 0.0
        %831 = vmatpush.msra.mxu0 0.0
        %832 = vmatpush.msra.mxu0 0.0
        %833 = vmatpush.msra.mxu0 0.0
        %834 = vmatpush.msra.mxu0 0.0
        %835 = vmatpush.msra.mxu0 0.0
        %836 = vmatpush.msra.mxu0 %v618
        %837 = vmatpush.msra.mxu0 %v616
        %838 = vmatpush.msra.mxu0 %v614
        %839 = vmatpush.msra.mxu0 %v612
        %840 = vmatpush.msra.mxu0 %v610
        %841 = vmatpush.msra.mxu0 %v608
        %842 = vmatpush.msra.mxu0 %v606
        %843 = vmatpush.msra.mxu0 %v604
        %844 = vmatmul.f32.gmra.mxu0 %v826
        %v845 = vpop.f32.mrf.mxu0
        %v846 = vadd.f32 %v803, %v845
        %847 = vdwg.mxu0
        %848 = vmatpush.msra.mxu0 0.0
        %849 = vmatpush.msra.mxu0 0.0
        %850 = vmatpush.msra.mxu0 0.0
        %851 = vmatpush.msra.mxu0 0.0
        %852 = vmatpush.msra.mxu0 0.0
        %853 = vmatpush.msra.mxu0 0.0
        %854 = vmatpush.msra.mxu0 0.0
        %855 = vmatpush.msra.mxu0 0.0
        %856 = vmatpush.msra.mxu0 %v619
        %857 = vmatpush.msra.mxu0 %v617
        %858 = vmatpush.msra.mxu0 %v615
        %859 = vmatpush.msra.mxu0 %v613
        %860 = vmatpush.msra.mxu0 %v611
        %861 = vmatpush.msra.mxu0 %v609
        %862 = vmatpush.msra.mxu0 %v607
        %863 = vmatpush.msra.mxu0 %v605
        %864 = vmatmul.f32.gmra.mxu0 %v826
        %v865 = vpop.f32.mrf.mxu0
        %v866 = vadd.f32 %v823, %v865
        %867 = vdwg.mxu0
        %s868 = sld [smem:[#allocation9 + $0x6d]]
        %v869 = vstv %s868
        %v870 = vmul.f32 %v869, %v366
        %v871 = vadd.f32 %v870, 0.0
        %s872 = sld [smem:[#allocation9 + $0x76]]
        %v873 = vstv %s872
        %v874 = vmul.f32 %v873, %v391
        %v875 = vadd.f32 %v871, %v874
        %s876 = sld [smem:[#allocation9 + $0x7f]]
        %v877 = vstv %s876
        %v878 = vmul.f32 %v877, %v416
        %v879 = vadd.f32 %v875, %v878
        %s880 = sld [smem:[#allocation9 + $0x88]]
        %v881 = vstv %s880
        %v882 = vmul.f32 %v881, %v438
        %v883 = vadd.f32 %v879, %v882
        %s884 = sld [smem:[#allocation9 + $0x91]]
        %v885 = vstv %s884
        %v886 = vmul.f32 %v885, %v458
        %v887 = vadd.f32 %v883, %v886
        %s888 = sld [smem:[#allocation9 + $0x9a]]
        %v889 = vstv %s888
        %v890 = vmul.f32 %v889, %v478
        %v891 = vadd.f32 %v887, %v890
        %s892 = sld [smem:[#allocation9 + $0xa3]]
        %v893 = vstv %s892
        %v894 = vmul.f32 %v893, %v500
        %v895 = vadd.f32 %v891, %v894
        %s896 = sld [smem:[#allocation9 + $0xac]]
        %v897 = vstv %s896
        %v898 = vmul.f32 %v897, %v520
        %v899 = vadd.f32 %v895, %v898
        %s900 = sld [smem:[#allocation9 + $0xb5]]
        %v901 = vstv %s900
        %v902 = vmul.f32 %v901, %v540
        %v903 = vadd.f32 %v899, %v902
        %s904 = sld [smem:[#allocation9 + $0xbe]]
        %v905 = vstv %s904
        %v906 = vmul.f32 %v905, %v562
        %v907 = vadd.f32 %v903, %v906
        %s908 = sld [smem:[#allocation9 + $0xc7]]
        %v909 = vstv %s908
        %v910 = vmul.f32 %v909, %v582
        %v911 = vadd.f32 %v907, %v910
        %s912 = sld [smem:[#allocation9 + $0xd0]]
        %v913 = vstv %s912
        %v914 = vmul.f32 %v913, %v602
        %v915 = vadd.f32 %v911, %v914
        %v917 = vsel %vm781, %v915, 0
        %919 = vmatpush.msra.mxu0 0.0
        %920 = vmatpush.msra.mxu0 0.0
        %921 = vmatpush.msra.mxu0 0.0
        %922 = vmatpush.msra.mxu0 0.0
        %923 = vmatpush.msra.mxu0 0.0
        %924 = vmatpush.msra.mxu0 0.0
        %925 = vmatpush.msra.mxu0 0.0
        %926 = vmatpush.msra.mxu0 0.0
        %927 = vmatpush.msra.mxu0 %v731
        %928 = vmatpush.msra.mxu0 %v729
        %929 = vmatpush.msra.mxu0 %v727
        %930 = vmatpush.msra.mxu0 %v725
        %931 = vmatpush.msra.mxu0 %v723
        %932 = vmatpush.msra.mxu0 %v721
        %933 = vmatpush.msra.mxu0 %v719
        %934 = vmatpush.msra.mxu0 %v717
        %935 = vmatmul.f32.gmra.mxu0 %v917
        %v936 = vpop.f32.mrf.mxu0
        %v937 = vadd.f32 0.0, %v936
        %938 = vdwg.mxu0
        %939 = vmatpush.msra.mxu0 0.0
        %940 = vmatpush.msra.mxu0 0.0
        %941 = vmatpush.msra.mxu0 0.0
        %942 = vmatpush.msra.mxu0 0.0
        %943 = vmatpush.msra.mxu0 0.0
        %944 = vmatpush.msra.mxu0 0.0
        %945 = vmatpush.msra.mxu0 0.0
        %946 = vmatpush.msra.mxu0 0.0
        %947 = vmatpush.msra.mxu0 %v732
        %948 = vmatpush.msra.mxu0 %v730
        %949 = vmatpush.msra.mxu0 %v728
        %950 = vmatpush.msra.mxu0 %v726
        %951 = vmatpush.msra.mxu0 %v724
        %952 = vmatpush.msra.mxu0 %v722
        %953 = vmatpush.msra.mxu0 %v720
        %954 = vmatpush.msra.mxu0 %v718
        %955 = vmatmul.f32.gmra.mxu0 %v917
        %v956 = vpop.f32.mrf.mxu0
        %v957 = vadd.f32 0.0, %v956
        %958 = vdwg.mxu0
        %v960 = vsel %vm781, %v715, 0
        %962 = vmatpush.msra.mxu0 0.0
        %963 = vmatpush.msra.mxu0 0.0
        %964 = vmatpush.msra.mxu0 0.0
        %965 = vmatpush.msra.mxu0 0.0
        %966 = vmatpush.msra.mxu0 0.0
        %967 = vmatpush.msra.mxu0 0.0
        %968 = vmatpush.msra.mxu0 0.0
        %969 = vmatpush.msra.mxu0 0.0
        %970 = vmatpush.msra.mxu0 %v618
        %971 = vmatpush.msra.mxu0 %v616
        %972 = vmatpush.msra.mxu0 %v614
        %973 = vmatpush.msra.mxu0 %v612
        %974 = vmatpush.msra.mxu0 %v610
        %975 = vmatpush.msra.mxu0 %v608
        %976 = vmatpush.msra.mxu0 %v606
        %977 = vmatpush.msra.mxu0 %v604
        %978 = vmatmul.f32.gmra.mxu0 %v960
        %v979 = vpop.f32.mrf.mxu0
        %v980 = vadd.f32 %v937, %v979
        %981 = vdwg.mxu0
        %982 = vmatpush.msra.mxu0 0.0
        %983 = vmatpush.msra.mxu0 0.0
        %984 = vmatpush.msra.mxu0 0.0
        %985 = vmatpush.msra.mxu0 0.0
        %986 = vmatpush.msra.mxu0 0.0
        %987 = vmatpush.msra.mxu0 0.0
        %988 = vmatpush.msra.mxu0 0.0
        %989 = vmatpush.msra.mxu0 0.0
        %990 = vmatpush.msra.mxu0 %v619
        %991 = vmatpush.msra.mxu0 %v617
        %992 = vmatpush.msra.mxu0 %v615
        %993 = vmatpush.msra.mxu0 %v613
        %994 = vmatpush.msra.mxu0 %v611
        %995 = vmatpush.msra.mxu0 %v609
        %996 = vmatpush.msra.mxu0 %v607
        %997 = vmatpush.msra.mxu0 %v605
        %998 = vmatmul.f32.gmra.mxu0 %v960
        %v999 = vpop.f32.mrf.mxu0
        %v1000 = vadd.f32 %v957, %v999
        %1001 = vdwg.mxu0
        %s1002 = scalar_lea.vmem [#allocation6], 256
        %v1003 = vld [vmem:[%s1002] sm:$0xff]
        %v1004 = vld [vmem:[%s1002 + $0x8] sm:$0xff]
        %v1005 = vld [vmem:[%s1002 + $0x10] sm:$0xff]
        %v1006 = vld [vmem:[%s1002 + $0x18] sm:$0xff]
        %v1007 = vld [vmem:[%s1002 + $0x20] sm:$0xff]
        %v1008 = vld [vmem:[%s1002 + $0x28] sm:$0xff]
        %v1009 = vld [vmem:[%s1002 + $0x30] sm:$0xff]
        %v1010 = vld [vmem:[%s1002 + $0x38] sm:$0xff]
        %v1011 = vld [vmem:[%s1002 + $0x40] sm:$0xff]
        %v1012 = vld [vmem:[%s1002 + $0x48] sm:$0xff]
        %v1013 = vld [vmem:[%s1002 + $0x50] sm:$0xff]
        %v1014 = vld [vmem:[%s1002 + $0x58] sm:$0xff]
        %v1015 = vld [vmem:[%s1002 + $0x60] sm:$0xff]
        %v1016 = vld [vmem:[%s1002 + $0x68] sm:$0xff]
        %v1017 = vld [vmem:[%s1002 + $0x70] sm:$0xff]
        %v1018 = vld [vmem:[%s1002 + $0x78] sm:$0xff]
        %s1019 = sld [smem:[#allocation9 + $0x2]]
        %v1020 = vstv %s1019
        %v1021 = vmul.f32 %v1020, %v366
        %v1022 = vadd.f32 %v1021, 0.0
        %s1023 = sld [smem:[#allocation9 + $0xb]]
        %v1024 = vstv %s1023
        %v1025 = vmul.f32 %v1024, %v391
        %v1026 = vadd.f32 %v1022, %v1025
        %s1027 = sld [smem:[#allocation9 + $0x14]]
        %v1028 = vstv %s1027
        %v1029 = vmul.f32 %v1028, %v416
        %v1030 = vadd.f32 %v1026, %v1029
        %s1031 = sld [smem:[#allocation9 + $0x1d]]
        %v1032 = vstv %s1031
        %v1033 = vmul.f32 %v1032, %v438
        %v1034 = vadd.f32 %v1030, %v1033
        %s1035 = sld [smem:[#allocation9 + $0x26]]
        %v1036 = vstv %s1035
        %v1037 = vmul.f32 %v1036, %v458
        %v1038 = vadd.f32 %v1034, %v1037
        %s1039 = sld [smem:[#allocation9 + $0x2f]]
        %v1040 = vstv %s1039
        %v1041 = vmul.f32 %v1040, %v478
        %v1042 = vadd.f32 %v1038, %v1041
        %s1043 = sld [smem:[#allocation9 + $0x38]]
        %v1044 = vstv %s1043
        %v1045 = vmul.f32 %v1044, %v500
        %v1046 = vadd.f32 %v1042, %v1045
        %s1047 = sld [smem:[#allocation9 + $0x41]]
        %v1048 = vstv %s1047
        %v1049 = vmul.f32 %v1048, %v520
        %v1050 = vadd.f32 %v1046, %v1049
        %s1051 = sld [smem:[#allocation9 + $0x4a]]
        %v1052 = vstv %s1051
        %v1053 = vmul.f32 %v1052, %v540
        %v1054 = vadd.f32 %v1050, %v1053
        %s1055 = sld [smem:[#allocation9 + $0x53]]
        %v1056 = vstv %s1055
        %v1057 = vmul.f32 %v1056, %v562
        %v1058 = vadd.f32 %v1054, %v1057
        %s1059 = sld [smem:[#allocation9 + $0x5c]]
        %v1060 = vstv %s1059
        %v1061 = vmul.f32 %v1060, %v582
        %v1062 = vadd.f32 %v1058, %v1061
        %s1063 = sld [smem:[#allocation9 + $0x65]]
        %v1064 = vstv %s1063
        %v1065 = vmul.f32 %v1064, %v602
        %v1066 = vadd.f32 %v1062, %v1065
        %v1068 = vsel %vm781, %v1066, 0
        %1070 = vmatpush.msra.mxu0 0.0
        %1071 = vmatpush.msra.mxu0 0.0
        %1072 = vmatpush.msra.mxu0 0.0
        %1073 = vmatpush.msra.mxu0 0.0
        %1074 = vmatpush.msra.mxu0 0.0
        %1075 = vmatpush.msra.mxu0 0.0
        %1076 = vmatpush.msra.mxu0 0.0
        %1077 = vmatpush.msra.mxu0 0.0
        %1078 = vmatpush.msra.mxu0 %v1017
        %1079 = vmatpush.msra.mxu0 %v1015
        %1080 = vmatpush.msra.mxu0 %v1013
        %1081 = vmatpush.msra.mxu0 %v1011
        %1082 = vmatpush.msra.mxu0 %v1009
        %1083 = vmatpush.msra.mxu0 %v1007
        %1084 = vmatpush.msra.mxu0 %v1005
        %1085 = vmatpush.msra.mxu0 %v1003
        %1086 = vmatmul.f32.gmra.mxu0 %v1068
        %v1087 = vpop.f32.mrf.mxu0
        %v1088 = vadd.f32 0.0, %v1087
        %1089 = vdwg.mxu0
        %1090 = vmatpush.msra.mxu0 0.0
        %1091 = vmatpush.msra.mxu0 0.0
        %1092 = vmatpush.msra.mxu0 0.0
        %1093 = vmatpush.msra.mxu0 0.0
        %1094 = vmatpush.msra.mxu0 0.0
        %1095 = vmatpush.msra.mxu0 0.0
        %1096 = vmatpush.msra.mxu0 0.0
        %1097 = vmatpush.msra.mxu0 0.0
        %1098 = vmatpush.msra.mxu0 %v1018
        %1099 = vmatpush.msra.mxu0 %v1016
        %1100 = vmatpush.msra.mxu0 %v1014
        %1101 = vmatpush.msra.mxu0 %v1012
        %1102 = vmatpush.msra.mxu0 %v1010
        %1103 = vmatpush.msra.mxu0 %v1008
        %1104 = vmatpush.msra.mxu0 %v1006
        %1105 = vmatpush.msra.mxu0 %v1004
        %1106 = vmatmul.f32.gmra.mxu0 %v1068
        %v1107 = vpop.f32.mrf.mxu0
        %v1108 = vadd.f32 0.0, %v1107
        %1109 = vdwg.mxu0
        %v1110 = vadd.f32 %v846, %v1088
        %v1111 = vadd.f32 %v866, %v1108
        %s1112 = sld [smem:[#allocation9 + $0x6e]]
        %v1113 = vstv %s1112
        %v1114 = vmul.f32 %v1113, %v366
        %v1115 = vadd.f32 %v1114, 0.0
        %s1116 = sld [smem:[#allocation9 + $0x77]]
        %v1117 = vstv %s1116
        %v1118 = vmul.f32 %v1117, %v391
        %v1119 = vadd.f32 %v1115, %v1118
        %s1120 = sld [smem:[#allocation9 + $0x80]]
        %v1121 = vstv %s1120
        %v1122 = vmul.f32 %v1121, %v416
        %v1123 = vadd.f32 %v1119, %v1122
        %s1124 = sld [smem:[#allocation9 + $0x89]]
        %v1125 = vstv %s1124
        %v1126 = vmul.f32 %v1125, %v438
        %v1127 = vadd.f32 %v1123, %v1126
        %s1128 = sld [smem:[#allocation9 + $0x92]]
        %v1129 = vstv %s1128
        %v1130 = vmul.f32 %v1129, %v458
        %v1131 = vadd.f32 %v1127, %v1130
        %s1132 = sld [smem:[#allocation9 + $0x9b]]
        %v1133 = vstv %s1132
        %v1134 = vmul.f32 %v1133, %v478
        %v1135 = vadd.f32 %v1131, %v1134
        %s1136 = sld [smem:[#allocation9 + $0xa4]]
        %v1137 = vstv %s1136
        %v1138 = vmul.f32 %v1137, %v500
        %v1139 = vadd.f32 %v1135, %v1138
        %s1140 = sld [smem:[#allocation9 + $0xad]]
        %v1141 = vstv %s1140
        %v1142 = vmul.f32 %v1141, %v520
        %v1143 = vadd.f32 %v1139, %v1142
        %s1144 = sld [smem:[#allocation9 + $0xb6]]
        %v1145 = vstv %s1144
        %v1146 = vmul.f32 %v1145, %v540
        %v1147 = vadd.f32 %v1143, %v1146
        %s1148 = sld [smem:[#allocation9 + $0xbf]]
        %v1149 = vstv %s1148
        %v1150 = vmul.f32 %v1149, %v562
        %v1151 = vadd.f32 %v1147, %v1150
        %s1152 = sld [smem:[#allocation9 + $0xc8]]
        %v1153 = vstv %s1152
        %v1154 = vmul.f32 %v1153, %v582
        %v1155 = vadd.f32 %v1151, %v1154
        %s1156 = sld [smem:[#allocation9 + $0xd1]]
        %v1157 = vstv %s1156
        %v1158 = vmul.f32 %v1157, %v602
        %v1159 = vadd.f32 %v1155, %v1158
        %v1161 = vsel %vm781, %v1159, 0
        %1163 = vmatpush.msra.mxu0 0.0
        %1164 = vmatpush.msra.mxu0 0.0
        %1165 = vmatpush.msra.mxu0 0.0
        %1166 = vmatpush.msra.mxu0 0.0
        %1167 = vmatpush.msra.mxu0 0.0
        %1168 = vmatpush.msra.mxu0 0.0
        %1169 = vmatpush.msra.mxu0 0.0
        %1170 = vmatpush.msra.mxu0 0.0
        %1171 = vmatpush.msra.mxu0 %v1017
        %1172 = vmatpush.msra.mxu0 %v1015
        %1173 = vmatpush.msra.mxu0 %v1013
        %1174 = vmatpush.msra.mxu0 %v1011
        %1175 = vmatpush.msra.mxu0 %v1009
        %1176 = vmatpush.msra.mxu0 %v1007
        %1177 = vmatpush.msra.mxu0 %v1005
        %1178 = vmatpush.msra.mxu0 %v1003
        %1179 = vmatmul.f32.gmra.mxu0 %v1161
        %v1180 = vpop.f32.mrf.mxu0
        %v1181 = vadd.f32 0.0, %v1180
        %1182 = vdwg.mxu0
        %1183 = vmatpush.msra.mxu0 0.0
        %1184 = vmatpush.msra.mxu0 0.0
        %1185 = vmatpush.msra.mxu0 0.0
        %1186 = vmatpush.msra.mxu0 0.0
        %1187 = vmatpush.msra.mxu0 0.0
        %1188 = vmatpush.msra.mxu0 0.0
        %1189 = vmatpush.msra.mxu0 0.0
        %1190 = vmatpush.msra.mxu0 0.0
        %1191 = vmatpush.msra.mxu0 %v1018
        %1192 = vmatpush.msra.mxu0 %v1016
        %1193 = vmatpush.msra.mxu0 %v1014
        %1194 = vmatpush.msra.mxu0 %v1012
        %1195 = vmatpush.msra.mxu0 %v1010
        %1196 = vmatpush.msra.mxu0 %v1008
        %1197 = vmatpush.msra.mxu0 %v1006
        %1198 = vmatpush.msra.mxu0 %v1004
        %1199 = vmatmul.f32.gmra.mxu0 %v1161
        %v1200 = vpop.f32.mrf.mxu0
        %v1201 = vadd.f32 0.0, %v1200
        %1202 = vdwg.mxu0
        %v1203 = vadd.f32 %v980, %v1181
        %v1204 = vadd.f32 %v1000, %v1201
        %s1205 = scalar_lea.vmem [#allocation6], 384
        %v1206 = vld [vmem:[%s1205] sm:$0xff]
        %v1207 = vld [vmem:[%s1205 + $0x8] sm:$0xff]
        %v1208 = vld [vmem:[%s1205 + $0x10] sm:$0xff]
        %v1209 = vld [vmem:[%s1205 + $0x18] sm:$0xff]
        %v1210 = vld [vmem:[%s1205 + $0x20] sm:$0xff]
        %v1211 = vld [vmem:[%s1205 + $0x28] sm:$0xff]
        %v1212 = vld [vmem:[%s1205 + $0x30] sm:$0xff]
        %v1213 = vld [vmem:[%s1205 + $0x38] sm:$0xff]
        %v1214 = vld [vmem:[%s1205 + $0x40] sm:$0xff]
        %v1215 = vld [vmem:[%s1205 + $0x48] sm:$0xff]
        %v1216 = vld [vmem:[%s1205 + $0x50] sm:$0xff]
        %v1217 = vld [vmem:[%s1205 + $0x58] sm:$0xff]
        %v1218 = vld [vmem:[%s1205 + $0x60] sm:$0xff]
        %v1219 = vld [vmem:[%s1205 + $0x68] sm:$0xff]
        %v1220 = vld [vmem:[%s1205 + $0x70] sm:$0xff]
        %v1221 = vld [vmem:[%s1205 + $0x78] sm:$0xff]
        %s1222 = sld [smem:[#allocation9 + $0x3]]
        %v1223 = vstv %s1222
        %v1224 = vmul.f32 %v1223, %v366
        %v1225 = vadd.f32 %v1224, 0.0
        %s1226 = sld [smem:[#allocation9 + $0xc]]
        %v1227 = vstv %s1226
        %v1228 = vmul.f32 %v1227, %v391
        %v1229 = vadd.f32 %v1225, %v1228
        %s1230 = sld [smem:[#allocation9 + $0x15]]
        %v1231 = vstv %s1230
        %v1232 = vmul.f32 %v1231, %v416
        %v1233 = vadd.f32 %v1229, %v1232
        %s1234 = sld [smem:[#allocation9 + $0x1e]]
        %v1235 = vstv %s1234
        %v1236 = vmul.f32 %v1235, %v438
        %v1237 = vadd.f32 %v1233, %v1236
        %s1238 = sld [smem:[#allocation9 + $0x27]]
        %v1239 = vstv %s1238
        %v1240 = vmul.f32 %v1239, %v458
        %v1241 = vadd.f32 %v1237, %v1240
        %s1242 = sld [smem:[#allocation9 + $0x30]]
        %v1243 = vstv %s1242
        %v1244 = vmul.f32 %v1243, %v478
        %v1245 = vadd.f32 %v1241, %v1244
        %s1246 = sld [smem:[#allocation9 + $0x39]]
        %v1247 = vstv %s1246
        %v1248 = vmul.f32 %v1247, %v500
        %v1249 = vadd.f32 %v1245, %v1248
        %s1250 = sld [smem:[#allocation9 + $0x42]]
        %v1251 = vstv %s1250
        %v1252 = vmul.f32 %v1251, %v520
        %v1253 = vadd.f32 %v1249, %v1252
        %s1254 = sld [smem:[#allocation9 + $0x4b]]
        %v1255 = vstv %s1254
        %v1256 = vmul.f32 %v1255, %v540
        %v1257 = vadd.f32 %v1253, %v1256
        %s1258 = sld [smem:[#allocation9 + $0x54]]
        %v1259 = vstv %s1258
        %v1260 = vmul.f32 %v1259, %v562
        %v1261 = vadd.f32 %v1257, %v1260
        %s1262 = sld [smem:[#allocation9 + $0x5d]]
        %v1263 = vstv %s1262
        %v1264 = vmul.f32 %v1263, %v582
        %v1265 = vadd.f32 %v1261, %v1264
        %s1266 = sld [smem:[#allocation9 + $0x66]]
        %v1267 = vstv %s1266
        %v1268 = vmul.f32 %v1267, %v602
        %v1269 = vadd.f32 %v1265, %v1268
        %v1271 = vsel %vm781, %v1269, 0
        %1273 = vmatpush.msra.mxu0 0.0
        %1274 = vmatpush.msra.mxu0 0.0
        %1275 = vmatpush.msra.mxu0 0.0
        %1276 = vmatpush.msra.mxu0 0.0
        %1277 = vmatpush.msra.mxu0 0.0
        %1278 = vmatpush.msra.mxu0 0.0
        %1279 = vmatpush.msra.mxu0 0.0
        %1280 = vmatpush.msra.mxu0 0.0
        %1281 = vmatpush.msra.mxu0 %v1220
        %1282 = vmatpush.msra.mxu0 %v1218
        %1283 = vmatpush.msra.mxu0 %v1216
        %1284 = vmatpush.msra.mxu0 %v1214
        %1285 = vmatpush.msra.mxu0 %v1212
        %1286 = vmatpush.msra.mxu0 %v1210
        %1287 = vmatpush.msra.mxu0 %v1208
        %1288 = vmatpush.msra.mxu0 %v1206
        %1289 = vmatmul.f32.gmra.mxu0 %v1271
        %v1290 = vpop.f32.mrf.mxu0
        %v1291 = vadd.f32 0.0, %v1290
        %1292 = vdwg.mxu0
        %1293 = vmatpush.msra.mxu0 0.0
        %1294 = vmatpush.msra.mxu0 0.0
        %1295 = vmatpush.msra.mxu0 0.0
        %1296 = vmatpush.msra.mxu0 0.0
        %1297 = vmatpush.msra.mxu0 0.0
        %1298 = vmatpush.msra.mxu0 0.0
        %1299 = vmatpush.msra.mxu0 0.0
        %1300 = vmatpush.msra.mxu0 0.0
        %1301 = vmatpush.msra.mxu0 %v1221
        %1302 = vmatpush.msra.mxu0 %v1219
        %1303 = vmatpush.msra.mxu0 %v1217
        %1304 = vmatpush.msra.mxu0 %v1215
        %1305 = vmatpush.msra.mxu0 %v1213
        %1306 = vmatpush.msra.mxu0 %v1211
        %1307 = vmatpush.msra.mxu0 %v1209
        %1308 = vmatpush.msra.mxu0 %v1207
        %1309 = vmatmul.f32.gmra.mxu0 %v1271
        %v1310 = vpop.f32.mrf.mxu0
        %v1311 = vadd.f32 0.0, %v1310
        %1312 = vdwg.mxu0
        %v1313 = vadd.f32 %v1110, %v1291
        %v1314 = vadd.f32 %v1111, %v1311
        %s1315 = sld [smem:[#allocation9 + $0x6f]]
        %v1316 = vstv %s1315
        %v1317 = vmul.f32 %v1316, %v366
        %v1318 = vadd.f32 %v1317, 0.0
        %s1319 = sld [smem:[#allocation9 + $0x78]]
        %v1320 = vstv %s1319
        %v1321 = vmul.f32 %v1320, %v391
        %v1322 = vadd.f32 %v1318, %v1321
        %s1323 = sld [smem:[#allocation9 + $0x81]]
        %v1324 = vstv %s1323
        %v1325 = vmul.f32 %v1324, %v416
        %v1326 = vadd.f32 %v1322, %v1325
        %s1327 = sld [smem:[#allocation9 + $0x8a]]
        %v1328 = vstv %s1327
        %v1329 = vmul.f32 %v1328, %v438
        %v1330 = vadd.f32 %v1326, %v1329
        %s1331 = sld [smem:[#allocation9 + $0x93]]
        %v1332 = vstv %s1331
        %v1333 = vmul.f32 %v1332, %v458
        %v1334 = vadd.f32 %v1330, %v1333
        %s1335 = sld [smem:[#allocation9 + $0x9c]]
        %v1336 = vstv %s1335
        %v1337 = vmul.f32 %v1336, %v478
        %v1338 = vadd.f32 %v1334, %v1337
        %s1339 = sld [smem:[#allocation9 + $0xa5]]
        %v1340 = vstv %s1339
        %v1341 = vmul.f32 %v1340, %v500
        %v1342 = vadd.f32 %v1338, %v1341
        %s1343 = sld [smem:[#allocation9 + $0xae]]
        %v1344 = vstv %s1343
        %v1345 = vmul.f32 %v1344, %v520
        %v1346 = vadd.f32 %v1342, %v1345
        %s1347 = sld [smem:[#allocation9 + $0xb7]]
        %v1348 = vstv %s1347
        %v1349 = vmul.f32 %v1348, %v540
        %v1350 = vadd.f32 %v1346, %v1349
        %s1351 = sld [smem:[#allocation9 + $0xc0]]
        %v1352 = vstv %s1351
        %v1353 = vmul.f32 %v1352, %v562
        %v1354 = vadd.f32 %v1350, %v1353
        %s1355 = sld [smem:[#allocation9 + $0xc9]]
        %v1356 = vstv %s1355
        %v1357 = vmul.f32 %v1356, %v582
        %v1358 = vadd.f32 %v1354, %v1357
        %s1359 = sld [smem:[#allocation9 + $0xd2]]
        %v1360 = vstv %s1359
        %v1361 = vmul.f32 %v1360, %v602
        %v1362 = vadd.f32 %v1358, %v1361
        %v1364 = vsel %vm781, %v1362, 0
        %1366 = vmatpush.msra.mxu0 0.0
        %1367 = vmatpush.msra.mxu0 0.0
        %1368 = vmatpush.msra.mxu0 0.0
        %1369 = vmatpush.msra.mxu0 0.0
        %1370 = vmatpush.msra.mxu0 0.0
        %1371 = vmatpush.msra.mxu0 0.0
        %1372 = vmatpush.msra.mxu0 0.0
        %1373 = vmatpush.msra.mxu0 0.0
        %1374 = vmatpush.msra.mxu0 %v1220
        %1375 = vmatpush.msra.mxu0 %v1218
        %1376 = vmatpush.msra.mxu0 %v1216
        %1377 = vmatpush.msra.mxu0 %v1214
        %1378 = vmatpush.msra.mxu0 %v1212
        %1379 = vmatpush.msra.mxu0 %v1210
        %1380 = vmatpush.msra.mxu0 %v1208
        %1381 = vmatpush.msra.mxu0 %v1206
        %1382 = vmatmul.f32.gmra.mxu0 %v1364
        %v1383 = vpop.f32.mrf.mxu0
        %v1384 = vadd.f32 0.0, %v1383
        %1385 = vdwg.mxu0
        %1386 = vmatpush.msra.mxu0 0.0
        %1387 = vmatpush.msra.mxu0 0.0
        %1388 = vmatpush.msra.mxu0 0.0
        %1389 = vmatpush.msra.mxu0 0.0
        %1390 = vmatpush.msra.mxu0 0.0
        %1391 = vmatpush.msra.mxu0 0.0
        %1392 = vmatpush.msra.mxu0 0.0
        %1393 = vmatpush.msra.mxu0 0.0
        %1394 = vmatpush.msra.mxu0 %v1221
        %1395 = vmatpush.msra.mxu0 %v1219
        %1396 = vmatpush.msra.mxu0 %v1217
        %1397 = vmatpush.msra.mxu0 %v1215
        %1398 = vmatpush.msra.mxu0 %v1213
        %1399 = vmatpush.msra.mxu0 %v1211
        %1400 = vmatpush.msra.mxu0 %v1209
        %1401 = vmatpush.msra.mxu0 %v1207
        %1402 = vmatmul.f32.gmra.mxu0 %v1364
        %v1403 = vpop.f32.mrf.mxu0
        %v1404 = vadd.f32 0.0, %v1403
        %1405 = vdwg.mxu0
        %v1406 = vadd.f32 %v1203, %v1384
        %v1407 = vadd.f32 %v1204, %v1404
        %s1408 = scalar_lea.vmem [#allocation6], 512
        %v1409 = vld [vmem:[%s1408] sm:$0xff]
        %v1410 = vld [vmem:[%s1408 + $0x8] sm:$0xff]
        %v1411 = vld [vmem:[%s1408 + $0x10] sm:$0xff]
        %v1412 = vld [vmem:[%s1408 + $0x18] sm:$0xff]
        %v1413 = vld [vmem:[%s1408 + $0x20] sm:$0xff]
        %v1414 = vld [vmem:[%s1408 + $0x28] sm:$0xff]
        %v1415 = vld [vmem:[%s1408 + $0x30] sm:$0xff]
        %v1416 = vld [vmem:[%s1408 + $0x38] sm:$0xff]
        %v1417 = vld [vmem:[%s1408 + $0x40] sm:$0xff]
        %v1418 = vld [vmem:[%s1408 + $0x48] sm:$0xff]
        %v1419 = vld [vmem:[%s1408 + $0x50] sm:$0xff]
        %v1420 = vld [vmem:[%s1408 + $0x58] sm:$0xff]
        %v1421 = vld [vmem:[%s1408 + $0x60] sm:$0xff]
        %v1422 = vld [vmem:[%s1408 + $0x68] sm:$0xff]
        %v1423 = vld [vmem:[%s1408 + $0x70] sm:$0xff]
        %v1424 = vld [vmem:[%s1408 + $0x78] sm:$0xff]
        %s1425 = sld [smem:[#allocation9 + $0x4]]
        %v1426 = vstv %s1425
        %v1427 = vmul.f32 %v1426, %v366
        %v1428 = vadd.f32 %v1427, 0.0
        %s1429 = sld [smem:[#allocation9 + $0xd]]
        %v1430 = vstv %s1429
        %v1431 = vmul.f32 %v1430, %v391
        %v1432 = vadd.f32 %v1428, %v1431
        %s1433 = sld [smem:[#allocation9 + $0x16]]
        %v1434 = vstv %s1433
        %v1435 = vmul.f32 %v1434, %v416
        %v1436 = vadd.f32 %v1432, %v1435
        %s1437 = sld [smem:[#allocation9 + $0x1f]]
        %v1438 = vstv %s1437
        %v1439 = vmul.f32 %v1438, %v438
        %v1440 = vadd.f32 %v1436, %v1439
        %s1441 = sld [smem:[#allocation9 + $0x28]]
        %v1442 = vstv %s1441
        %v1443 = vmul.f32 %v1442, %v458
        %v1444 = vadd.f32 %v1440, %v1443
        %s1445 = sld [smem:[#allocation9 + $0x31]]
        %v1446 = vstv %s1445
        %v1447 = vmul.f32 %v1446, %v478
        %v1448 = vadd.f32 %v1444, %v1447
        %s1449 = sld [smem:[#allocation9 + $0x3a]]
        %v1450 = vstv %s1449
        %v1451 = vmul.f32 %v1450, %v500
        %v1452 = vadd.f32 %v1448, %v1451
        %s1453 = sld [smem:[#allocation9 + $0x43]]
        %v1454 = vstv %s1453
        %v1455 = vmul.f32 %v1454, %v520
        %v1456 = vadd.f32 %v1452, %v1455
        %s1457 = sld [smem:[#allocation9 + $0x4c]]
        %v1458 = vstv %s1457
        %v1459 = vmul.f32 %v1458, %v540
        %v1460 = vadd.f32 %v1456, %v1459
        %s1461 = sld [smem:[#allocation9 + $0x55]]
        %v1462 = vstv %s1461
        %v1463 = vmul.f32 %v1462, %v562
        %v1464 = vadd.f32 %v1460, %v1463
        %s1465 = sld [smem:[#allocation9 + $0x5e]]
        %v1466 = vstv %s1465
        %v1467 = vmul.f32 %v1466, %v582
        %v1468 = vadd.f32 %v1464, %v1467
        %s1469 = sld [smem:[#allocation9 + $0x67]]
        %v1470 = vstv %s1469
        %v1471 = vmul.f32 %v1470, %v602
        %v1472 = vadd.f32 %v1468, %v1471
        %v1474 = vsel %vm781, %v1472, 0
        %1476 = vmatpush.msra.mxu0 0.0
        %1477 = vmatpush.msra.mxu0 0.0
        %1478 = vmatpush.msra.mxu0 0.0
        %1479 = vmatpush.msra.mxu0 0.0
        %1480 = vmatpush.msra.mxu0 0.0
        %1481 = vmatpush.msra.mxu0 0.0
        %1482 = vmatpush.msra.mxu0 0.0
        %1483 = vmatpush.msra.mxu0 0.0
        %1484 = vmatpush.msra.mxu0 %v1423
        %1485 = vmatpush.msra.mxu0 %v1421
        %1486 = vmatpush.msra.mxu0 %v1419
        %1487 = vmatpush.msra.mxu0 %v1417
        %1488 = vmatpush.msra.mxu0 %v1415
        %1489 = vmatpush.msra.mxu0 %v1413
        %1490 = vmatpush.msra.mxu0 %v1411
        %1491 = vmatpush.msra.mxu0 %v1409
        %1492 = vmatmul.f32.gmra.mxu0 %v1474
        %v1493 = vpop.f32.mrf.mxu0
        %v1494 = vadd.f32 0.0, %v1493
        %1495 = vdwg.mxu0
        %1496 = vmatpush.msra.mxu0 0.0
        %1497 = vmatpush.msra.mxu0 0.0
        %1498 = vmatpush.msra.mxu0 0.0
        %1499 = vmatpush.msra.mxu0 0.0
        %1500 = vmatpush.msra.mxu0 0.0
        %1501 = vmatpush.msra.mxu0 0.0
        %1502 = vmatpush.msra.mxu0 0.0
        %1503 = vmatpush.msra.mxu0 0.0
        %1504 = vmatpush.msra.mxu0 %v1424
        %1505 = vmatpush.msra.mxu0 %v1422
        %1506 = vmatpush.msra.mxu0 %v1420
        %1507 = vmatpush.msra.mxu0 %v1418
        %1508 = vmatpush.msra.mxu0 %v1416
        %1509 = vmatpush.msra.mxu0 %v1414
        %1510 = vmatpush.msra.mxu0 %v1412
        %1511 = vmatpush.msra.mxu0 %v1410
        %1512 = vmatmul.f32.gmra.mxu0 %v1474
        %v1513 = vpop.f32.mrf.mxu0
        %v1514 = vadd.f32 0.0, %v1513
        %1515 = vdwg.mxu0
        %v1516 = vadd.f32 %v1313, %v1494
        %v1517 = vadd.f32 %v1314, %v1514
        %s1518 = sld [smem:[#allocation9 + $0x70]]
        %v1519 = vstv %s1518
        %v1520 = vmul.f32 %v1519, %v366
        %v1521 = vadd.f32 %v1520, 0.0
        %s1522 = sld [smem:[#allocation9 + $0x79]]
        %v1523 = vstv %s1522
        %v1524 = vmul.f32 %v1523, %v391
        %v1525 = vadd.f32 %v1521, %v1524
        %s1526 = sld [smem:[#allocation9 + $0x82]]
        %v1527 = vstv %s1526
        %v1528 = vmul.f32 %v1527, %v416
        %v1529 = vadd.f32 %v1525, %v1528
        %s1530 = sld [smem:[#allocation9 + $0x8b]]
        %v1531 = vstv %s1530
        %v1532 = vmul.f32 %v1531, %v438
        %v1533 = vadd.f32 %v1529, %v1532
        %s1534 = sld [smem:[#allocation9 + $0x94]]
        %v1535 = vstv %s1534
        %v1536 = vmul.f32 %v1535, %v458
        %v1537 = vadd.f32 %v1533, %v1536
        %s1538 = sld [smem:[#allocation9 + $0x9d]]
        %v1539 = vstv %s1538
        %v1540 = vmul.f32 %v1539, %v478
        %v1541 = vadd.f32 %v1537, %v1540
        %s1542 = sld [smem:[#allocation9 + $0xa6]]
        %v1543 = vstv %s1542
        %v1544 = vmul.f32 %v1543, %v500
        %v1545 = vadd.f32 %v1541, %v1544
        %s1546 = sld [smem:[#allocation9 + $0xaf]]
        %v1547 = vstv %s1546
        %v1548 = vmul.f32 %v1547, %v520
        %v1549 = vadd.f32 %v1545, %v1548
        %s1550 = sld [smem:[#allocation9 + $0xb8]]
        %v1551 = vstv %s1550
        %v1552 = vmul.f32 %v1551, %v540
        %v1553 = vadd.f32 %v1549, %v1552
        %s1554 = sld [smem:[#allocation9 + $0xc1]]
        %v1555 = vstv %s1554
        %v1556 = vmul.f32 %v1555, %v562
        %v1557 = vadd.f32 %v1553, %v1556
        %s1558 = sld [smem:[#allocation9 + $0xca]]
        %v1559 = vstv %s1558
        %v1560 = vmul.f32 %v1559, %v582
        %v1561 = vadd.f32 %v1557, %v1560
        %s1562 = sld [smem:[#allocation9 + $0xd3]]
        %v1563 = vstv %s1562
        %v1564 = vmul.f32 %v1563, %v602
        %v1565 = vadd.f32 %v1561, %v1564
        %v1567 = vsel %vm781, %v1565, 0
        %1569 = vmatpush.msra.mxu0 0.0
        %1570 = vmatpush.msra.mxu0 0.0
        %1571 = vmatpush.msra.mxu0 0.0
        %1572 = vmatpush.msra.mxu0 0.0
        %1573 = vmatpush.msra.mxu0 0.0
        %1574 = vmatpush.msra.mxu0 0.0
        %1575 = vmatpush.msra.mxu0 0.0
        %1576 = vmatpush.msra.mxu0 0.0
        %1577 = vmatpush.msra.mxu0 %v1423
        %1578 = vmatpush.msra.mxu0 %v1421
        %1579 = vmatpush.msra.mxu0 %v1419
        %1580 = vmatpush.msra.mxu0 %v1417
        %1581 = vmatpush.msra.mxu0 %v1415
        %1582 = vmatpush.msra.mxu0 %v1413
        %1583 = vmatpush.msra.mxu0 %v1411
        %1584 = vmatpush.msra.mxu0 %v1409
        %1585 = vmatmul.f32.gmra.mxu0 %v1567
        %v1586 = vpop.f32.mrf.mxu0
        %v1587 = vadd.f32 0.0, %v1586
        %1588 = vdwg.mxu0
        %1589 = vmatpush.msra.mxu0 0.0
        %1590 = vmatpush.msra.mxu0 0.0
        %1591 = vmatpush.msra.mxu0 0.0
        %1592 = vmatpush.msra.mxu0 0.0
        %1593 = vmatpush.msra.mxu0 0.0
        %1594 = vmatpush.msra.mxu0 0.0
        %1595 = vmatpush.msra.mxu0 0.0
        %1596 = vmatpush.msra.mxu0 0.0
        %1597 = vmatpush.msra.mxu0 %v1424
        %1598 = vmatpush.msra.mxu0 %v1422
        %1599 = vmatpush.msra.mxu0 %v1420
        %1600 = vmatpush.msra.mxu0 %v1418
        %1601 = vmatpush.msra.mxu0 %v1416
        %1602 = vmatpush.msra.mxu0 %v1414
        %1603 = vmatpush.msra.mxu0 %v1412
        %1604 = vmatpush.msra.mxu0 %v1410
        %1605 = vmatmul.f32.gmra.mxu0 %v1567
        %v1606 = vpop.f32.mrf.mxu0
        %v1607 = vadd.f32 0.0, %v1606
        %1608 = vdwg.mxu0
        %v1609 = vadd.f32 %v1406, %v1587
        %v1610 = vadd.f32 %v1407, %v1607
        %s1611 = scalar_lea.vmem [#allocation6], 640
        %v1612 = vld [vmem:[%s1611] sm:$0xff]
        %v1613 = vld [vmem:[%s1611 + $0x8] sm:$0xff]
        %v1614 = vld [vmem:[%s1611 + $0x10] sm:$0xff]
        %v1615 = vld [vmem:[%s1611 + $0x18] sm:$0xff]
        %v1616 = vld [vmem:[%s1611 + $0x20] sm:$0xff]
        %v1617 = vld [vmem:[%s1611 + $0x28] sm:$0xff]
        %v1618 = vld [vmem:[%s1611 + $0x30] sm:$0xff]
        %v1619 = vld [vmem:[%s1611 + $0x38] sm:$0xff]
        %v1620 = vld [vmem:[%s1611 + $0x40] sm:$0xff]
        %v1621 = vld [vmem:[%s1611 + $0x48] sm:$0xff]
        %v1622 = vld [vmem:[%s1611 + $0x50] sm:$0xff]
        %v1623 = vld [vmem:[%s1611 + $0x58] sm:$0xff]
        %v1624 = vld [vmem:[%s1611 + $0x60] sm:$0xff]
        %v1625 = vld [vmem:[%s1611 + $0x68] sm:$0xff]
        %v1626 = vld [vmem:[%s1611 + $0x70] sm:$0xff]
        %v1627 = vld [vmem:[%s1611 + $0x78] sm:$0xff]
        %s1628 = sld [smem:[#allocation9 + $0x5]]
        %v1629 = vstv %s1628
        %v1630 = vmul.f32 %v1629, %v366
        %v1631 = vadd.f32 %v1630, 0.0
        %s1632 = sld [smem:[#allocation9 + $0xe]]
        %v1633 = vstv %s1632
        %v1634 = vmul.f32 %v1633, %v391
        %v1635 = vadd.f32 %v1631, %v1634
        %s1636 = sld [smem:[#allocation9 + $0x17]]
        %v1637 = vstv %s1636
        %v1638 = vmul.f32 %v1637, %v416
        %v1639 = vadd.f32 %v1635, %v1638
        %s1640 = sld [smem:[#allocation9 + $0x20]]
        %v1641 = vstv %s1640
        %v1642 = vmul.f32 %v1641, %v438
        %v1643 = vadd.f32 %v1639, %v1642
        %s1644 = sld [smem:[#allocation9 + $0x29]]
        %v1645 = vstv %s1644
        %v1646 = vmul.f32 %v1645, %v458
        %v1647 = vadd.f32 %v1643, %v1646
        %s1648 = sld [smem:[#allocation9 + $0x32]]
        %v1649 = vstv %s1648
        %v1650 = vmul.f32 %v1649, %v478
        %v1651 = vadd.f32 %v1647, %v1650
        %s1652 = sld [smem:[#allocation9 + $0x3b]]
        %v1653 = vstv %s1652
        %v1654 = vmul.f32 %v1653, %v500
        %v1655 = vadd.f32 %v1651, %v1654
        %s1656 = sld [smem:[#allocation9 + $0x44]]
        %v1657 = vstv %s1656
        %v1658 = vmul.f32 %v1657, %v520
        %v1659 = vadd.f32 %v1655, %v1658
        %s1660 = sld [smem:[#allocation9 + $0x4d]]
        %v1661 = vstv %s1660
        %v1662 = vmul.f32 %v1661, %v540
        %v1663 = vadd.f32 %v1659, %v1662
        %s1664 = sld [smem:[#allocation9 + $0x56]]
        %v1665 = vstv %s1664
        %v1666 = vmul.f32 %v1665, %v562
        %v1667 = vadd.f32 %v1663, %v1666
        %s1668 = sld [smem:[#allocation9 + $0x5f]]
        %v1669 = vstv %s1668
        %v1670 = vmul.f32 %v1669, %v582
        %v1671 = vadd.f32 %v1667, %v1670
        %s1672 = sld [smem:[#allocation9 + $0x68]]
        %v1673 = vstv %s1672
        %v1674 = vmul.f32 %v1673, %v602
        %v1675 = vadd.f32 %v1671, %v1674
        %v1677 = vsel %vm781, %v1675, 0
        %1679 = vmatpush.msra.mxu0 0.0
        %1680 = vmatpush.msra.mxu0 0.0
        %1681 = vmatpush.msra.mxu0 0.0
        %1682 = vmatpush.msra.mxu0 0.0
        %1683 = vmatpush.msra.mxu0 0.0
        %1684 = vmatpush.msra.mxu0 0.0
        %1685 = vmatpush.msra.mxu0 0.0
        %1686 = vmatpush.msra.mxu0 0.0
        %1687 = vmatpush.msra.mxu0 %v1626
        %1688 = vmatpush.msra.mxu0 %v1624
        %1689 = vmatpush.msra.mxu0 %v1622
        %1690 = vmatpush.msra.mxu0 %v1620
        %1691 = vmatpush.msra.mxu0 %v1618
        %1692 = vmatpush.msra.mxu0 %v1616
        %1693 = vmatpush.msra.mxu0 %v1614
        %1694 = vmatpush.msra.mxu0 %v1612
        %1695 = vmatmul.f32.gmra.mxu0 %v1677
        %v1696 = vpop.f32.mrf.mxu0
        %v1697 = vadd.f32 0.0, %v1696
        %1698 = vdwg.mxu0
        %1699 = vmatpush.msra.mxu0 0.0
        %1700 = vmatpush.msra.mxu0 0.0
        %1701 = vmatpush.msra.mxu0 0.0
        %1702 = vmatpush.msra.mxu0 0.0
        %1703 = vmatpush.msra.mxu0 0.0
        %1704 = vmatpush.msra.mxu0 0.0
        %1705 = vmatpush.msra.mxu0 0.0
        %1706 = vmatpush.msra.mxu0 0.0
        %1707 = vmatpush.msra.mxu0 %v1627
        %1708 = vmatpush.msra.mxu0 %v1625
        %1709 = vmatpush.msra.mxu0 %v1623
        %1710 = vmatpush.msra.mxu0 %v1621
        %1711 = vmatpush.msra.mxu0 %v1619
        %1712 = vmatpush.msra.mxu0 %v1617
        %1713 = vmatpush.msra.mxu0 %v1615
        %1714 = vmatpush.msra.mxu0 %v1613
        %1715 = vmatmul.f32.gmra.mxu0 %v1677
        %v1716 = vpop.f32.mrf.mxu0
        %v1717 = vadd.f32 0.0, %v1716
        %1718 = vdwg.mxu0
        %v1719 = vadd.f32 %v1516, %v1697
        %v1720 = vadd.f32 %v1517, %v1717
        %s1721 = sld [smem:[#allocation9 + $0x71]]
        %v1722 = vstv %s1721
        %v1723 = vmul.f32 %v1722, %v366
        %v1724 = vadd.f32 %v1723, 0.0
        %s1725 = sld [smem:[#allocation9 + $0x7a]]
        %v1726 = vstv %s1725
        %v1727 = vmul.f32 %v1726, %v391
        %v1728 = vadd.f32 %v1724, %v1727
        %s1729 = sld [smem:[#allocation9 + $0x83]]
        %v1730 = vstv %s1729
        %v1731 = vmul.f32 %v1730, %v416
        %v1732 = vadd.f32 %v1728, %v1731
        %s1733 = sld [smem:[#allocation9 + $0x8c]]
        %v1734 = vstv %s1733
        %v1735 = vmul.f32 %v1734, %v438
        %v1736 = vadd.f32 %v1732, %v1735
        %s1737 = sld [smem:[#allocation9 + $0x95]]
        %v1738 = vstv %s1737
        %v1739 = vmul.f32 %v1738, %v458
        %v1740 = vadd.f32 %v1736, %v1739
        %s1741 = sld [smem:[#allocation9 + $0x9e]]
        %v1742 = vstv %s1741
        %v1743 = vmul.f32 %v1742, %v478
        %v1744 = vadd.f32 %v1740, %v1743
        %s1745 = sld [smem:[#allocation9 + $0xa7]]
        %v1746 = vstv %s1745
        %v1747 = vmul.f32 %v1746, %v500
        %v1748 = vadd.f32 %v1744, %v1747
        %s1749 = sld [smem:[#allocation9 + $0xb0]]
        %v1750 = vstv %s1749
        %v1751 = vmul.f32 %v1750, %v520
        %v1752 = vadd.f32 %v1748, %v1751
        %s1753 = sld [smem:[#allocation9 + $0xb9]]
        %v1754 = vstv %s1753
        %v1755 = vmul.f32 %v1754, %v540
        %v1756 = vadd.f32 %v1752, %v1755
        %s1757 = sld [smem:[#allocation9 + $0xc2]]
        %v1758 = vstv %s1757
        %v1759 = vmul.f32 %v1758, %v562
        %v1760 = vadd.f32 %v1756, %v1759
        %s1761 = sld [smem:[#allocation9 + $0xcb]]
        %v1762 = vstv %s1761
        %v1763 = vmul.f32 %v1762, %v582
        %v1764 = vadd.f32 %v1760, %v1763
        %s1765 = sld [smem:[#allocation9 + $0xd4]]
        %v1766 = vstv %s1765
        %v1767 = vmul.f32 %v1766, %v602
        %v1768 = vadd.f32 %v1764, %v1767
        %v1770 = vsel %vm781, %v1768, 0
        %1772 = vmatpush.msra.mxu0 0.0
        %1773 = vmatpush.msra.mxu0 0.0
        %1774 = vmatpush.msra.mxu0 0.0
        %1775 = vmatpush.msra.mxu0 0.0
        %1776 = vmatpush.msra.mxu0 0.0
        %1777 = vmatpush.msra.mxu0 0.0
        %1778 = vmatpush.msra.mxu0 0.0
        %1779 = vmatpush.msra.mxu0 0.0
        %1780 = vmatpush.msra.mxu0 %v1626
        %1781 = vmatpush.msra.mxu0 %v1624
        %1782 = vmatpush.msra.mxu0 %v1622
        %1783 = vmatpush.msra.mxu0 %v1620
        %1784 = vmatpush.msra.mxu0 %v1618
        %1785 = vmatpush.msra.mxu0 %v1616
        %1786 = vmatpush.msra.mxu0 %v1614
        %1787 = vmatpush.msra.mxu0 %v1612
        %1788 = vmatmul.f32.gmra.mxu0 %v1770
        %v1789 = vpop.f32.mrf.mxu0
        %v1790 = vadd.f32 0.0, %v1789
        %1791 = vdwg.mxu0
        %1792 = vmatpush.msra.mxu0 0.0
        %1793 = vmatpush.msra.mxu0 0.0
        %1794 = vmatpush.msra.mxu0 0.0
        %1795 = vmatpush.msra.mxu0 0.0
        %1796 = vmatpush.msra.mxu0 0.0
        %1797 = vmatpush.msra.mxu0 0.0
        %1798 = vmatpush.msra.mxu0 0.0
        %1799 = vmatpush.msra.mxu0 0.0
        %1800 = vmatpush.msra.mxu0 %v1627
        %1801 = vmatpush.msra.mxu0 %v1625
        %1802 = vmatpush.msra.mxu0 %v1623
        %1803 = vmatpush.msra.mxu0 %v1621
        %1804 = vmatpush.msra.mxu0 %v1619
        %1805 = vmatpush.msra.mxu0 %v1617
        %1806 = vmatpush.msra.mxu0 %v1615
        %1807 = vmatpush.msra.mxu0 %v1613
        %1808 = vmatmul.f32.gmra.mxu0 %v1770
        %v1809 = vpop.f32.mrf.mxu0
        %v1810 = vadd.f32 0.0, %v1809
        %1811 = vdwg.mxu0
        %v1812 = vadd.f32 %v1609, %v1790
        %v1813 = vadd.f32 %v1610, %v1810
        %s1814 = scalar_lea.vmem [#allocation6], 768
        %v1815 = vld [vmem:[%s1814] sm:$0xff]
        %v1816 = vld [vmem:[%s1814 + $0x8] sm:$0xff]
        %v1817 = vld [vmem:[%s1814 + $0x10] sm:$0xff]
        %v1818 = vld [vmem:[%s1814 + $0x18] sm:$0xff]
        %v1819 = vld [vmem:[%s1814 + $0x20] sm:$0xff]
        %v1820 = vld [vmem:[%s1814 + $0x28] sm:$0xff]
        %v1821 = vld [vmem:[%s1814 + $0x30] sm:$0xff]
        %v1822 = vld [vmem:[%s1814 + $0x38] sm:$0xff]
        %v1823 = vld [vmem:[%s1814 + $0x40] sm:$0xff]
        %v1824 = vld [vmem:[%s1814 + $0x48] sm:$0xff]
        %v1825 = vld [vmem:[%s1814 + $0x50] sm:$0xff]
        %v1826 = vld [vmem:[%s1814 + $0x58] sm:$0xff]
        %v1827 = vld [vmem:[%s1814 + $0x60] sm:$0xff]
        %v1828 = vld [vmem:[%s1814 + $0x68] sm:$0xff]
        %v1829 = vld [vmem:[%s1814 + $0x70] sm:$0xff]
        %v1830 = vld [vmem:[%s1814 + $0x78] sm:$0xff]
        %s1831 = sld [smem:[#allocation9 + $0x6]]
        %v1832 = vstv %s1831
        %v1833 = vmul.f32 %v1832, %v366
        %v1834 = vadd.f32 %v1833, 0.0
        %s1835 = sld [smem:[#allocation9 + $0xf]]
        %v1836 = vstv %s1835
        %v1837 = vmul.f32 %v1836, %v391
        %v1838 = vadd.f32 %v1834, %v1837
        %s1839 = sld [smem:[#allocation9 + $0x18]]
        %v1840 = vstv %s1839
        %v1841 = vmul.f32 %v1840, %v416
        %v1842 = vadd.f32 %v1838, %v1841
        %s1843 = sld [smem:[#allocation9 + $0x21]]
        %v1844 = vstv %s1843
        %v1845 = vmul.f32 %v1844, %v438
        %v1846 = vadd.f32 %v1842, %v1845
        %s1847 = sld [smem:[#allocation9 + $0x2a]]
        %v1848 = vstv %s1847
        %v1849 = vmul.f32 %v1848, %v458
        %v1850 = vadd.f32 %v1846, %v1849
        %s1851 = sld [smem:[#allocation9 + $0x33]]
        %v1852 = vstv %s1851
        %v1853 = vmul.f32 %v1852, %v478
        %v1854 = vadd.f32 %v1850, %v1853
        %s1855 = sld [smem:[#allocation9 + $0x3c]]
        %v1856 = vstv %s1855
        %v1857 = vmul.f32 %v1856, %v500
        %v1858 = vadd.f32 %v1854, %v1857
        %s1859 = sld [smem:[#allocation9 + $0x45]]
        %v1860 = vstv %s1859
        %v1861 = vmul.f32 %v1860, %v520
        %v1862 = vadd.f32 %v1858, %v1861
        %s1863 = sld [smem:[#allocation9 + $0x4e]]
        %v1864 = vstv %s1863
        %v1865 = vmul.f32 %v1864, %v540
        %v1866 = vadd.f32 %v1862, %v1865
        %s1867 = sld [smem:[#allocation9 + $0x57]]
        %v1868 = vstv %s1867
        %v1869 = vmul.f32 %v1868, %v562
        %v1870 = vadd.f32 %v1866, %v1869
        %s1871 = sld [smem:[#allocation9 + $0x60]]
        %v1872 = vstv %s1871
        %v1873 = vmul.f32 %v1872, %v582
        %v1874 = vadd.f32 %v1870, %v1873
        %s1875 = sld [smem:[#allocation9 + $0x69]]
        %v1876 = vstv %s1875
        %v1877 = vmul.f32 %v1876, %v602
        %v1878 = vadd.f32 %v1874, %v1877
        %v1880 = vsel %vm781, %v1878, 0
        %1882 = vmatpush.msra.mxu0 0.0
        %1883 = vmatpush.msra.mxu0 0.0
        %1884 = vmatpush.msra.mxu0 0.0
        %1885 = vmatpush.msra.mxu0 0.0
        %1886 = vmatpush.msra.mxu0 0.0
        %1887 = vmatpush.msra.mxu0 0.0
        %1888 = vmatpush.msra.mxu0 0.0
        %1889 = vmatpush.msra.mxu0 0.0
        %1890 = vmatpush.msra.mxu0 %v1829
        %1891 = vmatpush.msra.mxu0 %v1827
        %1892 = vmatpush.msra.mxu0 %v1825
        %1893 = vmatpush.msra.mxu0 %v1823
        %1894 = vmatpush.msra.mxu0 %v1821
        %1895 = vmatpush.msra.mxu0 %v1819
        %1896 = vmatpush.msra.mxu0 %v1817
        %1897 = vmatpush.msra.mxu0 %v1815
        %1898 = vmatmul.f32.gmra.mxu0 %v1880
        %v1899 = vpop.f32.mrf.mxu0
        %v1900 = vadd.f32 0.0, %v1899
        %1901 = vdwg.mxu0
        %1902 = vmatpush.msra.mxu0 0.0
        %1903 = vmatpush.msra.mxu0 0.0
        %1904 = vmatpush.msra.mxu0 0.0
        %1905 = vmatpush.msra.mxu0 0.0
        %1906 = vmatpush.msra.mxu0 0.0
        %1907 = vmatpush.msra.mxu0 0.0
        %1908 = vmatpush.msra.mxu0 0.0
        %1909 = vmatpush.msra.mxu0 0.0
        %1910 = vmatpush.msra.mxu0 %v1830
        %1911 = vmatpush.msra.mxu0 %v1828
        %1912 = vmatpush.msra.mxu0 %v1826
        %1913 = vmatpush.msra.mxu0 %v1824
        %1914 = vmatpush.msra.mxu0 %v1822
        %1915 = vmatpush.msra.mxu0 %v1820
        %1916 = vmatpush.msra.mxu0 %v1818
        %1917 = vmatpush.msra.mxu0 %v1816
        %1918 = vmatmul.f32.gmra.mxu0 %v1880
        %v1919 = vpop.f32.mrf.mxu0
        %v1920 = vadd.f32 0.0, %v1919
        %1921 = vdwg.mxu0
        %v1922 = vadd.f32 %v1719, %v1900
        %v1923 = vadd.f32 %v1720, %v1920
        %s1924 = sld [smem:[#allocation9 + $0x72]]
        %v1925 = vstv %s1924
        %v1926 = vmul.f32 %v1925, %v366
        %v1927 = vadd.f32 %v1926, 0.0
        %s1928 = sld [smem:[#allocation9 + $0x7b]]
        %v1929 = vstv %s1928
        %v1930 = vmul.f32 %v1929, %v391
        %v1931 = vadd.f32 %v1927, %v1930
        %s1932 = sld [smem:[#allocation9 + $0x84]]
        %v1933 = vstv %s1932
        %v1934 = vmul.f32 %v1933, %v416
        %v1935 = vadd.f32 %v1931, %v1934
        %s1936 = sld [smem:[#allocation9 + $0x8d]]
        %v1937 = vstv %s1936
        %v1938 = vmul.f32 %v1937, %v438
        %v1939 = vadd.f32 %v1935, %v1938
        %s1940 = sld [smem:[#allocation9 + $0x96]]
        %v1941 = vstv %s1940
        %v1942 = vmul.f32 %v1941, %v458
        %v1943 = vadd.f32 %v1939, %v1942
        %s1944 = sld [smem:[#allocation9 + $0x9f]]
        %v1945 = vstv %s1944
        %v1946 = vmul.f32 %v1945, %v478
        %v1947 = vadd.f32 %v1943, %v1946
        %s1948 = sld [smem:[#allocation9 + $0xa8]]
        %v1949 = vstv %s1948
        %v1950 = vmul.f32 %v1949, %v500
        %v1951 = vadd.f32 %v1947, %v1950
        %s1952 = sld [smem:[#allocation9 + $0xb1]]
        %v1953 = vstv %s1952
        %v1954 = vmul.f32 %v1953, %v520
        %v1955 = vadd.f32 %v1951, %v1954
        %s1956 = sld [smem:[#allocation9 + $0xba]]
        %v1957 = vstv %s1956
        %v1958 = vmul.f32 %v1957, %v540
        %v1959 = vadd.f32 %v1955, %v1958
        %s1960 = sld [smem:[#allocation9 + $0xc3]]
        %v1961 = vstv %s1960
        %v1962 = vmul.f32 %v1961, %v562
        %v1963 = vadd.f32 %v1959, %v1962
        %s1964 = sld [smem:[#allocation9 + $0xcc]]
        %v1965 = vstv %s1964
        %v1966 = vmul.f32 %v1965, %v582
        %v1967 = vadd.f32 %v1963, %v1966
        %s1968 = sld [smem:[#allocation9 + $0xd5]]
        %v1969 = vstv %s1968
        %v1970 = vmul.f32 %v1969, %v602
        %v1971 = vadd.f32 %v1967, %v1970
        %v1973 = vsel %vm781, %v1971, 0
        %1975 = vmatpush.msra.mxu0 0.0
        %1976 = vmatpush.msra.mxu0 0.0
        %1977 = vmatpush.msra.mxu0 0.0
        %1978 = vmatpush.msra.mxu0 0.0
        %1979 = vmatpush.msra.mxu0 0.0
        %1980 = vmatpush.msra.mxu0 0.0
        %1981 = vmatpush.msra.mxu0 0.0
        %1982 = vmatpush.msra.mxu0 0.0
        %1983 = vmatpush.msra.mxu0 %v1829
        %1984 = vmatpush.msra.mxu0 %v1827
        %1985 = vmatpush.msra.mxu0 %v1825
        %1986 = vmatpush.msra.mxu0 %v1823
        %1987 = vmatpush.msra.mxu0 %v1821
        %1988 = vmatpush.msra.mxu0 %v1819
        %1989 = vmatpush.msra.mxu0 %v1817
        %1990 = vmatpush.msra.mxu0 %v1815
        %1991 = vmatmul.f32.gmra.mxu0 %v1973
        %v1992 = vpop.f32.mrf.mxu0
        %v1993 = vadd.f32 0.0, %v1992
        %1994 = vdwg.mxu0
        %1995 = vmatpush.msra.mxu0 0.0
        %1996 = vmatpush.msra.mxu0 0.0
        %1997 = vmatpush.msra.mxu0 0.0
        %1998 = vmatpush.msra.mxu0 0.0
        %1999 = vmatpush.msra.mxu0 0.0
        %2000 = vmatpush.msra.mxu0 0.0
        %2001 = vmatpush.msra.mxu0 0.0
        %2002 = vmatpush.msra.mxu0 0.0
        %2003 = vmatpush.msra.mxu0 %v1830
        %2004 = vmatpush.msra.mxu0 %v1828
        %2005 = vmatpush.msra.mxu0 %v1826
        %2006 = vmatpush.msra.mxu0 %v1824
        %2007 = vmatpush.msra.mxu0 %v1822
        %2008 = vmatpush.msra.mxu0 %v1820
        %2009 = vmatpush.msra.mxu0 %v1818
        %2010 = vmatpush.msra.mxu0 %v1816
        %2011 = vmatmul.f32.gmra.mxu0 %v1973
        %v2012 = vpop.f32.mrf.mxu0
        %v2013 = vadd.f32 0.0, %v2012
        %2014 = vdwg.mxu0
        %v2015 = vadd.f32 %v1812, %v1993
        %v2016 = vadd.f32 %v1813, %v2013
        %s2017 = scalar_lea.vmem [#allocation6], 896
        %v2018 = vld [vmem:[%s2017] sm:$0xff]
        %v2019 = vld [vmem:[%s2017 + $0x8] sm:$0xff]
        %v2020 = vld [vmem:[%s2017 + $0x10] sm:$0xff]
        %v2021 = vld [vmem:[%s2017 + $0x18] sm:$0xff]
        %v2022 = vld [vmem:[%s2017 + $0x20] sm:$0xff]
        %v2023 = vld [vmem:[%s2017 + $0x28] sm:$0xff]
        %v2024 = vld [vmem:[%s2017 + $0x30] sm:$0xff]
        %v2025 = vld [vmem:[%s2017 + $0x38] sm:$0xff]
        %v2026 = vld [vmem:[%s2017 + $0x40] sm:$0xff]
        %v2027 = vld [vmem:[%s2017 + $0x48] sm:$0xff]
        %v2028 = vld [vmem:[%s2017 + $0x50] sm:$0xff]
        %v2029 = vld [vmem:[%s2017 + $0x58] sm:$0xff]
        %v2030 = vld [vmem:[%s2017 + $0x60] sm:$0xff]
        %v2031 = vld [vmem:[%s2017 + $0x68] sm:$0xff]
        %v2032 = vld [vmem:[%s2017 + $0x70] sm:$0xff]
        %v2033 = vld [vmem:[%s2017 + $0x78] sm:$0xff]
        %s2034 = sld [smem:[#allocation9 + $0x7]]
        %v2035 = vstv %s2034
        %v2036 = vmul.f32 %v2035, %v366
        %v2037 = vadd.f32 %v2036, 0.0
        %s2038 = sld [smem:[#allocation9 + $0x10]]
        %v2039 = vstv %s2038
        %v2040 = vmul.f32 %v2039, %v391
        %v2041 = vadd.f32 %v2037, %v2040
        %s2042 = sld [smem:[#allocation9 + $0x19]]
        %v2043 = vstv %s2042
        %v2044 = vmul.f32 %v2043, %v416
        %v2045 = vadd.f32 %v2041, %v2044
        %s2046 = sld [smem:[#allocation9 + $0x22]]
        %v2047 = vstv %s2046
        %v2048 = vmul.f32 %v2047, %v438
        %v2049 = vadd.f32 %v2045, %v2048
        %s2050 = sld [smem:[#allocation9 + $0x2b]]
        %v2051 = vstv %s2050
        %v2052 = vmul.f32 %v2051, %v458
        %v2053 = vadd.f32 %v2049, %v2052
        %s2054 = sld [smem:[#allocation9 + $0x34]]
        %v2055 = vstv %s2054
        %v2056 = vmul.f32 %v2055, %v478
        %v2057 = vadd.f32 %v2053, %v2056
        %s2058 = sld [smem:[#allocation9 + $0x3d]]
        %v2059 = vstv %s2058
        %v2060 = vmul.f32 %v2059, %v500
        %v2061 = vadd.f32 %v2057, %v2060
        %s2062 = sld [smem:[#allocation9 + $0x46]]
        %v2063 = vstv %s2062
        %v2064 = vmul.f32 %v2063, %v520
        %v2065 = vadd.f32 %v2061, %v2064
        %s2066 = sld [smem:[#allocation9 + $0x4f]]
        %v2067 = vstv %s2066
        %v2068 = vmul.f32 %v2067, %v540
        %v2069 = vadd.f32 %v2065, %v2068
        %s2070 = sld [smem:[#allocation9 + $0x58]]
        %v2071 = vstv %s2070
        %v2072 = vmul.f32 %v2071, %v562
        %v2073 = vadd.f32 %v2069, %v2072
        %s2074 = sld [smem:[#allocation9 + $0x61]]
        %v2075 = vstv %s2074
        %v2076 = vmul.f32 %v2075, %v582
        %v2077 = vadd.f32 %v2073, %v2076
        %s2078 = sld [smem:[#allocation9 + $0x6a]]
        %v2079 = vstv %s2078
        %v2080 = vmul.f32 %v2079, %v602
        %v2081 = vadd.f32 %v2077, %v2080
        %v2083 = vsel %vm781, %v2081, 0
        %2085 = vmatpush.msra.mxu0 0.0
        %2086 = vmatpush.msra.mxu0 0.0
        %2087 = vmatpush.msra.mxu0 0.0
        %2088 = vmatpush.msra.mxu0 0.0
        %2089 = vmatpush.msra.mxu0 0.0
        %2090 = vmatpush.msra.mxu0 0.0
        %2091 = vmatpush.msra.mxu0 0.0
        %2092 = vmatpush.msra.mxu0 0.0
        %2093 = vmatpush.msra.mxu0 %v2032
        %2094 = vmatpush.msra.mxu0 %v2030
        %2095 = vmatpush.msra.mxu0 %v2028
        %2096 = vmatpush.msra.mxu0 %v2026
        %2097 = vmatpush.msra.mxu0 %v2024
        %2098 = vmatpush.msra.mxu0 %v2022
        %2099 = vmatpush.msra.mxu0 %v2020
        %2100 = vmatpush.msra.mxu0 %v2018
        %2101 = vmatmul.f32.gmra.mxu0 %v2083
        %v2102 = vpop.f32.mrf.mxu0
        %v2103 = vadd.f32 0.0, %v2102
        %2104 = vdwg.mxu0
        %2105 = vmatpush.msra.mxu0 0.0
        %2106 = vmatpush.msra.mxu0 0.0
        %2107 = vmatpush.msra.mxu0 0.0
        %2108 = vmatpush.msra.mxu0 0.0
        %2109 = vmatpush.msra.mxu0 0.0
        %2110 = vmatpush.msra.mxu0 0.0
        %2111 = vmatpush.msra.mxu0 0.0
        %2112 = vmatpush.msra.mxu0 0.0
        %2113 = vmatpush.msra.mxu0 %v2033
        %2114 = vmatpush.msra.mxu0 %v2031
        %2115 = vmatpush.msra.mxu0 %v2029
        %2116 = vmatpush.msra.mxu0 %v2027
        %2117 = vmatpush.msra.mxu0 %v2025
        %2118 = vmatpush.msra.mxu0 %v2023
        %2119 = vmatpush.msra.mxu0 %v2021
        %2120 = vmatpush.msra.mxu0 %v2019
        %2121 = vmatmul.f32.gmra.mxu0 %v2083
        %v2122 = vpop.f32.mrf.mxu0
        %v2123 = vadd.f32 0.0, %v2122
        %2124 = vdwg.mxu0
        %v2125 = vadd.f32 %v1922, %v2103
        %v2126 = vadd.f32 %v1923, %v2123
        %s2127 = sld [smem:[#allocation9 + $0x73]]
        %v2128 = vstv %s2127
        %v2129 = vmul.f32 %v2128, %v366
        %v2130 = vadd.f32 %v2129, 0.0
        %s2131 = sld [smem:[#allocation9 + $0x7c]]
        %v2132 = vstv %s2131
        %v2133 = vmul.f32 %v2132, %v391
        %v2134 = vadd.f32 %v2130, %v2133
        %s2135 = sld [smem:[#allocation9 + $0x85]]
        %v2136 = vstv %s2135
        %v2137 = vmul.f32 %v2136, %v416
        %v2138 = vadd.f32 %v2134, %v2137
        %s2139 = sld [smem:[#allocation9 + $0x8e]]
        %v2140 = vstv %s2139
        %v2141 = vmul.f32 %v2140, %v438
        %v2142 = vadd.f32 %v2138, %v2141
        %s2143 = sld [smem:[#allocation9 + $0x97]]
        %v2144 = vstv %s2143
        %v2145 = vmul.f32 %v2144, %v458
        %v2146 = vadd.f32 %v2142, %v2145
        %s2147 = sld [smem:[#allocation9 + $0xa0]]
        %v2148 = vstv %s2147
        %v2149 = vmul.f32 %v2148, %v478
        %v2150 = vadd.f32 %v2146, %v2149
        %s2151 = sld [smem:[#allocation9 + $0xa9]]
        %v2152 = vstv %s2151
        %v2153 = vmul.f32 %v2152, %v500
        %v2154 = vadd.f32 %v2150, %v2153
        %s2155 = sld [smem:[#allocation9 + $0xb2]]
        %v2156 = vstv %s2155
        %v2157 = vmul.f32 %v2156, %v520
        %v2158 = vadd.f32 %v2154, %v2157
        %s2159 = sld [smem:[#allocation9 + $0xbb]]
        %v2160 = vstv %s2159
        %v2161 = vmul.f32 %v2160, %v540
        %v2162 = vadd.f32 %v2158, %v2161
        %s2163 = sld [smem:[#allocation9 + $0xc4]]
        %v2164 = vstv %s2163
        %v2165 = vmul.f32 %v2164, %v562
        %v2166 = vadd.f32 %v2162, %v2165
        %s2167 = sld [smem:[#allocation9 + $0xcd]]
        %v2168 = vstv %s2167
        %v2169 = vmul.f32 %v2168, %v582
        %v2170 = vadd.f32 %v2166, %v2169
        %s2171 = sld [smem:[#allocation9 + $0xd6]]
        %v2172 = vstv %s2171
        %v2173 = vmul.f32 %v2172, %v602
        %v2174 = vadd.f32 %v2170, %v2173
        %v2176 = vsel %vm781, %v2174, 0
        %2178 = vmatpush.msra.mxu0 0.0
        %2179 = vmatpush.msra.mxu0 0.0
        %2180 = vmatpush.msra.mxu0 0.0
        %2181 = vmatpush.msra.mxu0 0.0
        %2182 = vmatpush.msra.mxu0 0.0
        %2183 = vmatpush.msra.mxu0 0.0
        %2184 = vmatpush.msra.mxu0 0.0
        %2185 = vmatpush.msra.mxu0 0.0
        %2186 = vmatpush.msra.mxu0 %v2032
        %2187 = vmatpush.msra.mxu0 %v2030
        %2188 = vmatpush.msra.mxu0 %v2028
        %2189 = vmatpush.msra.mxu0 %v2026
        %2190 = vmatpush.msra.mxu0 %v2024
        %2191 = vmatpush.msra.mxu0 %v2022
        %2192 = vmatpush.msra.mxu0 %v2020
        %2193 = vmatpush.msra.mxu0 %v2018
        %2194 = vmatmul.f32.gmra.mxu0 %v2176
        %v2195 = vpop.f32.mrf.mxu0
        %v2196 = vadd.f32 0.0, %v2195
        %2197 = vdwg.mxu0
        %2198 = vmatpush.msra.mxu0 0.0
        %2199 = vmatpush.msra.mxu0 0.0
        %2200 = vmatpush.msra.mxu0 0.0
        %2201 = vmatpush.msra.mxu0 0.0
        %2202 = vmatpush.msra.mxu0 0.0
        %2203 = vmatpush.msra.mxu0 0.0
        %2204 = vmatpush.msra.mxu0 0.0
        %2205 = vmatpush.msra.mxu0 0.0
        %2206 = vmatpush.msra.mxu0 %v2033
        %2207 = vmatpush.msra.mxu0 %v2031
        %2208 = vmatpush.msra.mxu0 %v2029
        %2209 = vmatpush.msra.mxu0 %v2027
        %2210 = vmatpush.msra.mxu0 %v2025
        %2211 = vmatpush.msra.mxu0 %v2023
        %2212 = vmatpush.msra.mxu0 %v2021
        %2213 = vmatpush.msra.mxu0 %v2019
        %2214 = vmatmul.f32.gmra.mxu0 %v2176
        %v2215 = vpop.f32.mrf.mxu0
        %v2216 = vadd.f32 0.0, %v2215
        %2217 = vdwg.mxu0
        %v2218 = vadd.f32 %v2015, %v2196
        %v2219 = vadd.f32 %v2016, %v2216
        %s2220 = scalar_lea.vmem [#allocation6], 1024
        %v2221 = vld [vmem:[%s2220] sm:$0xff]
        %v2222 = vld [vmem:[%s2220 + $0x8] sm:$0xff]
        %v2223 = vld [vmem:[%s2220 + $0x10] sm:$0xff]
        %v2224 = vld [vmem:[%s2220 + $0x18] sm:$0xff]
        %v2225 = vld [vmem:[%s2220 + $0x20] sm:$0xff]
        %v2226 = vld [vmem:[%s2220 + $0x28] sm:$0xff]
        %v2227 = vld [vmem:[%s2220 + $0x30] sm:$0xff]
        %v2228 = vld [vmem:[%s2220 + $0x38] sm:$0xff]
        %v2229 = vld [vmem:[%s2220 + $0x40] sm:$0xff]
        %v2230 = vld [vmem:[%s2220 + $0x48] sm:$0xff]
        %v2231 = vld [vmem:[%s2220 + $0x50] sm:$0xff]
        %v2232 = vld [vmem:[%s2220 + $0x58] sm:$0xff]
        %v2233 = vld [vmem:[%s2220 + $0x60] sm:$0xff]
        %v2234 = vld [vmem:[%s2220 + $0x68] sm:$0xff]
        %v2235 = vld [vmem:[%s2220 + $0x70] sm:$0xff]
        %v2236 = vld [vmem:[%s2220 + $0x78] sm:$0xff]
        %s2237 = sld [smem:[#allocation9 + $0x8]]
        %v2238 = vstv %s2237
        %v2239 = vmul.f32 %v2238, %v366
        %v2240 = vadd.f32 %v2239, 0.0
        %s2241 = sld [smem:[#allocation9 + $0x11]]
        %v2242 = vstv %s2241
        %v2243 = vmul.f32 %v2242, %v391
        %v2244 = vadd.f32 %v2240, %v2243
        %s2245 = sld [smem:[#allocation9 + $0x1a]]
        %v2246 = vstv %s2245
        %v2247 = vmul.f32 %v2246, %v416
        %v2248 = vadd.f32 %v2244, %v2247
        %s2249 = sld [smem:[#allocation9 + $0x23]]
        %v2250 = vstv %s2249
        %v2251 = vmul.f32 %v2250, %v438
        %v2252 = vadd.f32 %v2248, %v2251
        %s2253 = sld [smem:[#allocation9 + $0x2c]]
        %v2254 = vstv %s2253
        %v2255 = vmul.f32 %v2254, %v458
        %v2256 = vadd.f32 %v2252, %v2255
        %s2257 = sld [smem:[#allocation9 + $0x35]]
        %v2258 = vstv %s2257
        %v2259 = vmul.f32 %v2258, %v478
        %v2260 = vadd.f32 %v2256, %v2259
        %s2261 = sld [smem:[#allocation9 + $0x3e]]
        %v2262 = vstv %s2261
        %v2263 = vmul.f32 %v2262, %v500
        %v2264 = vadd.f32 %v2260, %v2263
        %s2265 = sld [smem:[#allocation9 + $0x47]]
        %v2266 = vstv %s2265
        %v2267 = vmul.f32 %v2266, %v520
        %v2268 = vadd.f32 %v2264, %v2267
        %s2269 = sld [smem:[#allocation9 + $0x50]]
        %v2270 = vstv %s2269
        %v2271 = vmul.f32 %v2270, %v540
        %v2272 = vadd.f32 %v2268, %v2271
        %s2273 = sld [smem:[#allocation9 + $0x59]]
        %v2274 = vstv %s2273
        %v2275 = vmul.f32 %v2274, %v562
        %v2276 = vadd.f32 %v2272, %v2275
        %s2277 = sld [smem:[#allocation9 + $0x62]]
        %v2278 = vstv %s2277
        %v2279 = vmul.f32 %v2278, %v582
        %v2280 = vadd.f32 %v2276, %v2279
        %s2281 = sld [smem:[#allocation9 + $0x6b]]
        %v2282 = vstv %s2281
        %v2283 = vmul.f32 %v2282, %v602
        %v2284 = vadd.f32 %v2280, %v2283
        %v2286 = vsel %vm781, %v2284, 0
        %2288 = vmatpush.msra.mxu0 0.0
        %2289 = vmatpush.msra.mxu0 0.0
        %2290 = vmatpush.msra.mxu0 0.0
        %2291 = vmatpush.msra.mxu0 0.0
        %2292 = vmatpush.msra.mxu0 0.0
        %2293 = vmatpush.msra.mxu0 0.0
        %2294 = vmatpush.msra.mxu0 0.0
        %2295 = vmatpush.msra.mxu0 0.0
        %2296 = vmatpush.msra.mxu0 %v2235
        %2297 = vmatpush.msra.mxu0 %v2233
        %2298 = vmatpush.msra.mxu0 %v2231
        %2299 = vmatpush.msra.mxu0 %v2229
        %2300 = vmatpush.msra.mxu0 %v2227
        %2301 = vmatpush.msra.mxu0 %v2225
        %2302 = vmatpush.msra.mxu0 %v2223
        %2303 = vmatpush.msra.mxu0 %v2221
        %2304 = vmatmul.f32.gmra.mxu0 %v2286
        %v2305 = vpop.f32.mrf.mxu0
        %v2306 = vadd.f32 0.0, %v2305
        %2307 = vdwg.mxu0
        %2308 = vmatpush.msra.mxu0 0.0
        %2309 = vmatpush.msra.mxu0 0.0
        %2310 = vmatpush.msra.mxu0 0.0
        %2311 = vmatpush.msra.mxu0 0.0
        %2312 = vmatpush.msra.mxu0 0.0
        %2313 = vmatpush.msra.mxu0 0.0
        %2314 = vmatpush.msra.mxu0 0.0
        %2315 = vmatpush.msra.mxu0 0.0
        %2316 = vmatpush.msra.mxu0 %v2236
        %2317 = vmatpush.msra.mxu0 %v2234
        %2318 = vmatpush.msra.mxu0 %v2232
        %2319 = vmatpush.msra.mxu0 %v2230
        %2320 = vmatpush.msra.mxu0 %v2228
        %2321 = vmatpush.msra.mxu0 %v2226
        %2322 = vmatpush.msra.mxu0 %v2224
        %2323 = vmatpush.msra.mxu0 %v2222
        %2324 = vmatmul.f32.gmra.mxu0 %v2286
        %v2325 = vpop.f32.mrf.mxu0
        %v2326 = vadd.f32 0.0, %v2325
        %2327 = vdwg.mxu0
        %v2328 = vadd.f32 %v2125, %v2306
        %v2329 = vadd.f32 %v2126, %v2326
        %s2330 = sld [smem:[#allocation9 + $0x74]]
        %v2331 = vstv %s2330
        %v2332 = vmul.f32 %v2331, %v366
        %v2333 = vadd.f32 %v2332, 0.0
        %s2334 = sld [smem:[#allocation9 + $0x7d]]
        %v2335 = vstv %s2334
        %v2336 = vmul.f32 %v2335, %v391
        %v2337 = vadd.f32 %v2333, %v2336
        %s2338 = sld [smem:[#allocation9 + $0x86]]
        %v2339 = vstv %s2338
        %v2340 = vmul.f32 %v2339, %v416
        %v2341 = vadd.f32 %v2337, %v2340
        %s2342 = sld [smem:[#allocation9 + $0x8f]]
        %v2343 = vstv %s2342
        %v2344 = vmul.f32 %v2343, %v438
        %v2345 = vadd.f32 %v2341, %v2344
        %s2346 = sld [smem:[#allocation9 + $0x98]]
        %v2347 = vstv %s2346
        %v2348 = vmul.f32 %v2347, %v458
        %v2349 = vadd.f32 %v2345, %v2348
        %s2350 = sld [smem:[#allocation9 + $0xa1]]
        %v2351 = vstv %s2350
        %v2352 = vmul.f32 %v2351, %v478
        %v2353 = vadd.f32 %v2349, %v2352
        %s2354 = sld [smem:[#allocation9 + $0xaa]]
        %v2355 = vstv %s2354
        %v2356 = vmul.f32 %v2355, %v500
        %v2357 = vadd.f32 %v2353, %v2356
        %s2358 = sld [smem:[#allocation9 + $0xb3]]
        %v2359 = vstv %s2358
        %v2360 = vmul.f32 %v2359, %v520
        %v2361 = vadd.f32 %v2357, %v2360
        %s2362 = sld [smem:[#allocation9 + $0xbc]]
        %v2363 = vstv %s2362
        %v2364 = vmul.f32 %v2363, %v540
        %v2365 = vadd.f32 %v2361, %v2364
        %s2366 = sld [smem:[#allocation9 + $0xc5]]
        %v2367 = vstv %s2366
        %v2368 = vmul.f32 %v2367, %v562
        %v2369 = vadd.f32 %v2365, %v2368
        %s2370 = sld [smem:[#allocation9 + $0xce]]
        %v2371 = vstv %s2370
        %v2372 = vmul.f32 %v2371, %v582
        %v2373 = vadd.f32 %v2369, %v2372
        %s2374 = sld [smem:[#allocation9 + $0xd7]]
        %v2375 = vstv %s2374
        %v2376 = vmul.f32 %v2375, %v602
        %v2377 = vadd.f32 %v2373, %v2376
        %v2379 = vsel %vm781, %v2377, 0
        %2381 = vmatpush.msra.mxu0 0.0
        %2382 = vmatpush.msra.mxu0 0.0
        %2383 = vmatpush.msra.mxu0 0.0
        %2384 = vmatpush.msra.mxu0 0.0
        %2385 = vmatpush.msra.mxu0 0.0
        %2386 = vmatpush.msra.mxu0 0.0
        %2387 = vmatpush.msra.mxu0 0.0
        %2388 = vmatpush.msra.mxu0 0.0
        %2389 = vmatpush.msra.mxu0 %v2235
        %2390 = vmatpush.msra.mxu0 %v2233
        %2391 = vmatpush.msra.mxu0 %v2231
        %2392 = vmatpush.msra.mxu0 %v2229
        %2393 = vmatpush.msra.mxu0 %v2227
        %2394 = vmatpush.msra.mxu0 %v2225
        %2395 = vmatpush.msra.mxu0 %v2223
        %2396 = vmatpush.msra.mxu0 %v2221
        %2397 = vmatmul.f32.gmra.mxu0 %v2379
        %v2398 = vpop.f32.mrf.mxu0
        %v2399 = vadd.f32 0.0, %v2398
        %2400 = vdwg.mxu0
        %2401 = vmatpush.msra.mxu0 0.0
        %2402 = vmatpush.msra.mxu0 0.0
        %2403 = vmatpush.msra.mxu0 0.0
        %2404 = vmatpush.msra.mxu0 0.0
        %2405 = vmatpush.msra.mxu0 0.0
        %2406 = vmatpush.msra.mxu0 0.0
        %2407 = vmatpush.msra.mxu0 0.0
        %2408 = vmatpush.msra.mxu0 0.0
        %2409 = vmatpush.msra.mxu0 %v2236
        %2410 = vmatpush.msra.mxu0 %v2234
        %2411 = vmatpush.msra.mxu0 %v2232
        %2412 = vmatpush.msra.mxu0 %v2230
        %2413 = vmatpush.msra.mxu0 %v2228
        %2414 = vmatpush.msra.mxu0 %v2226
        %2415 = vmatpush.msra.mxu0 %v2224
        %2416 = vmatpush.msra.mxu0 %v2222
        %2417 = vmatmul.f32.gmra.mxu0 %v2379
        %v2418 = vpop.f32.mrf.mxu0
        %v2419 = vadd.f32 0.0, %v2418
        %2420 = vdwg.mxu0
        %v2421 = vadd.f32 %v2218, %v2399
        %v2422 = vadd.f32 %v2219, %v2419
        %s2423 = sld [smem:[#allocation10]]
        %v2424 = vstv %s2423
        %v2425 = vadd.f32 %v2328, %v2424
        %v2426 = vadd.f32 %v2329, %v2424
        %2427 = vst [vmem:[%s341] sm:$0xff] %v2425
        %2428 = vst [vmem:[%s341 + $0x8] sm:$0xff] %v2426
        %s2429 = sld [smem:[#allocation10 + $0x1]]
        %v2430 = vstv %s2429
        %v2431 = vadd.f32 %v2421, %v2430
        %v2432 = vadd.f32 %v2422, %v2430
        %s2433 = scalar_lea.vmem %s341, 16 [#allocation12]
        %2434 = vst [vmem:[%s2433] sm:$0xff] %v2431
        %2435 = vst [vmem:[%s2433 + $0x8] sm:$0xff] %v2432
        %s2436 = sand.u32 %s162, 1
        %s2437 = scalar_lea.sflag [#allocation4], %s2436
        %s2438 = sand.u32 %s162, 1
        %s2439 = smul.addr %s2438, 32
        %s2440 = scalar_lea.vmem [#allocation12], %s2439
        // Predicated region
        $region61: #{tpu_custom_call.1} parent=39 // pred_check
          %p2441 = pneg %p172
        $region62: #{tpu_custom_call.1} parent=39 // pred_check_branch
          %2443 = sbr.rel (%p2441) target = $region64
        $region63: #{tpu_custom_call.1} parent=39 // pred_region
          %2445 = vsyncadd %s2437, 0
          %s2446 = smul.addr %s30, 2
          %s2447 = smul.addr %s29, 8
          %s2448 = sadd.s32 %s2446, %s2447
          %s2449 = smul.addr %s2448, 8
          %s2450 = scalar_lea.hbm %s5, %s2449
          %s2451 = sshll.u32 %s2440, 4
          %s2452 = int_to_ptr.vmem [resolvable:$true] %s2451
          %s2453 = sshll.u32 %s2450, 4
          %s2454 = int_to_ptr.hbm [resolvable:$true] %s2453
          %2459 = dma.vmem_to_hbm [thread:$0]  %s2452, 512, %s2454, %s2437, 256, 512, 16
        $region64: #{tpu_custom_call.1} parent=39 // pred_fallthru
          _
      $region40: #{tpu_custom_call.1} parent=5 // pred_fallthru
        _
      %p2460 = scmp.le.s32.totalorder 2, %s20
      // Predicated region
      $region65: #{tpu_custom_call.1} parent=5 // pred_check
        %p2461 = pneg %p2460
      $region66: #{tpu_custom_call.1} parent=5 // pred_check_branch
        %2463 = sbr.rel (%p2461) target = $region68
      $region67: #{tpu_custom_call.1} parent=5 // pred_region
        %s2464 = ssub.s32 %s20, 2
        // Predicated region
        $region69: #{tpu_custom_call.1} parent=67 // pred_check
          %p2465 = pneg %p178
        $region70: #{tpu_custom_call.1} parent=67 // pred_check_branch
          %2467 = sbr.rel (%p2465) target = $region72
        $region71: #{tpu_custom_call.1} parent=67 // pred_region
          %s2468 = sand.u32 %s163, 1
          %s2469 = scalar_lea.sflag [#allocation4], %s2468
          %s2470 = sand.u32 %s163, 1
          %s2471 = smul.addr %s2470, 32
          %s2472 = scalar_lea.vmem [#allocation12], %s2471
          %2474 = dma.done %s2469, 512
        $region72: #{tpu_custom_call.1} parent=67 // pred_fallthru
          _
      $region68: #{tpu_custom_call.1} parent=5 // pred_fallthru
        _
    $region6: #{tpu_custom_call.1} parent=1 // loop_footer
      %s24 = sadd.s32 1, %s20
    $region7: #{tpu_custom_call.1} parent=1 // loop_footer_branch
      %19 = sbr.rel target = $region3
    $region8: #{tpu_custom_call.1} parent=1 // loop_exit
      _
    %2475 = vsyncpa [#allocation3], 1
    %s2476 = scalar_lea.sflag [#allocation3], 1
    %2477 = vsyncpa %s2476, 1
    %2478 = vsyncpa [#allocation7], 1
    %2479 = vsyncpa [#allocation4], 1
    %s2480 = scalar_lea.sflag [#allocation4], 1
    %2481 = vsyncpa %s2480, 1
    %2482 = vsyncpa [#allocation5], 1
    %s2483 = scalar_lea.sflag [#allocation5], 1
    %2484 = vsyncpa %s2483, 1
    %2485 = vsyncpa [#allocation11], 1

</llo_original>
